<compile_context>
chip_gen: v6e
topology: v6e:2x2x1
jax: 0.10.0
libtpu: 0.0.40
codegen_flags: <defaults>
</compile_context>

<pallas_src>
import numpy as np
import jax
import jax.numpy as jnp
from jax.experimental import pallas as pl
from jax.experimental.pallas import tpu as pltpu

# ----------------------------- hparams (small, synthetic) -----------------------------
NUM_FINGERS = 5            # thumb, index, middle, ring, pinky
NR_INPUT_CHANNELS = 1      # fused formulation assumes a single input channel
NR_OUTPUTS = 1             # per-finger output, concatenated along dim=1 -> (B, 5)
CNN_CHANNELS = (4, 8, 16)  # cnn_encoder_channels
MLP_CHANNELS = (32, 16)    # mlp_encoder_channels
EVENT_KERNEL_LEN = 9       # event_search_kernel_length
EVENT_KERNEL_STRIDE = 5    # event_search_kernel_stride
CHUNK = 64                 # hard-coded 64-sample split in _reshape_and_normalize

BATCH = 2
N_CHUNKS = 2               # G (time = 64 * G)
N_ELECTRODES = 8           # E

F = NUM_FINGERS
C1, C2, C3 = CNN_CHANNELS
M1, M2 = MLP_CHANNELS
L = EVENT_KERNEL_LEN
S = EVENT_KERNEL_STRIDE
E = N_ELECTRODES
G = N_CHUNKS
B = BATCH
BG = B * NR_INPUT_CHANNELS * G          # 4 (batch, chunk) blocks
T1 = (CHUNK - L) // S + 1               # 12   conv1 output length
T2 = T1 - 3 + 1                         # 10   conv2 output length
T3 = T2 - 3 + 1                         # 8    conv3 output length

K1 = F * C1 * E                         # 160  per-block conv1 lanes (f, c1, e)
K2 = F * C2                             # 40   per-block conv2 lanes (f, c2)
K3 = F * C3                             # 80   per-batch conv3 lanes (f, c3)
K4 = F * M1                             # 160  mlp1 lanes (f, m1)
K5 = F * M2                             # 80   mlp2 lanes (f, m2)

WIDE = BG * K1                          # 640  conv1 lane width, lane = (b, g, f, c1, e)
W2_COLS = BG * K2                       # 160  conv2 lane width, lane = (b, g, f, c2)
W3_COLS = B * K3                        # 160  conv3 lane width, lane = (b, f, c3)
WSLAB_W = 160                           # common bf16 weight-slab width

# bf16 weight-slab row offsets
W2_OFF = 0
W3_OFF = W2_OFF + 3 * WIDE              # 1920
W4_OFF = W3_OFF + 3 * W2_COLS           # 2400
W5_OFF = W4_OFF + T3 * K3               # 3040
W6_OFF = W5_OFF + K4                    # 3200
WSLAB_ROWS = W6_OFF + WSLAB_W           # 3360

# f32 width-64 constant slab (window-selection + chunk-group matrices)
A_OFF = 0
GM_OFF = L * T1                         # 108
C64_ROWS = GM_OFF + BG * E              # 140

# f32 width-640 constant slab (electrode replication, conv1 weights, all biases)
R2_OFF = 0
W1_OFF = R2_OFF + BG * E                # 32
B1_ROW = W1_OFF + L                     # 41
B2_ROW = B1_ROW + 1
B3_ROW = B2_ROW + 1
B4_ROW = B3_ROW + 1
B5_ROW = B4_ROW + 1
B6_ROW = B5_ROW + 1
C640_ROWS = B6_ROW + 1                  # 47

SQRT_2_OVER_PI = 0.7978845608028654
assert NR_INPUT_CHANNELS == 1


# ----------------------------- in-kernel math helpers -----------------------------
def _gelu(x):
    # tanh-approximate GELU: 1 EUP tanh + a few VPU ops (error vs. exact erf GELU < ~1e-3).
    return 0.5 * x * (1.0 + jnp.tanh(SQRT_2_OVER_PI * (x + 0.044715 * (x * x * x))))


# ----------------------------- the fused Pallas kernel -----------------------------
def fused_raulnet_kernel(x_ref, c64_ref, c640_ref, w_ref, o_ref, h0_scr):
    f32 = jnp.float32
    bf16 = jnp.bfloat16

    xw = x_ref[...]                                         # (64, 32) f32, lane = (b, g, e)
    a_sel = c64_ref[A_OFF:A_OFF + L * T1, :]                # (108, 64) 0/1 window selection
    gmat = c64_ref[GM_OFF:GM_OFF + BG * E, 0:BG * E]        # (32, 32)  0/1 chunk-group matrix
    r2 = c640_ref[R2_OFF:R2_OFF + BG * E, :]                # (32, 640) 0/1 electrode replication
    w1 = c640_ref[W1_OFF:W1_OFF + L, :]                     # (9, 640)  conv1 weight (broadcast)
    b1 = c640_ref[B1_ROW:B1_ROW + 1, :]                     # (1, 640)
    b2 = c640_ref[B2_ROW:B2_ROW + 1, 0:W2_COLS]             # (1, 160)
    b3 = c640_ref[B3_ROW:B3_ROW + 1, 0:W3_COLS]             # (1, 160)
    b4 = c640_ref[B4_ROW:B4_ROW + 1, 0:K4]                  # (1, 160)
    b5 = c640_ref[B5_ROW:B5_ROW + 1, 0:WSLAB_W]             # (1, 160) zero past K5
    b6 = c640_ref[B6_ROW:B6_ROW + 1, 0:F]                   # (1, 5)

    # ---- per-(batch, chunk) normalization, all 4 chunks batched on lanes ----------------
    inv_n = 1.0 / (CHUNK * E)
    inv_nm1 = 1.0 / (CHUNK * E - 1)
    col_sum = jnp.sum(xw, axis=0, keepdims=True)                                  # (1, 32)
    mean = jnp.dot(col_sum, gmat, preferred_element_type=f32) * inv_n             # (1, 32)
    d = xw - mean
    sq_sum = jnp.sum(d * d, axis=0, keepdims=True)                                # (1, 32)
    var = jnp.dot(sq_sum, gmat, preferred_element_type=f32) * inv_nm1             # (1, 32)
    rstd = pl.reciprocal(jnp.sqrt(var) + 1e-15, approx=True)                      # torch.std + eps
    xn = d * rstd                                                                  # (64, 32)

    # ---- in-VMEM im2col (lane-dense): replicate electrodes first, window-select once ----
    m0 = jnp.dot(xn, r2, preferred_element_type=f32)                              # (64, 640)
    m5 = jnp.dot(a_sel, m0, preferred_element_type=f32)                           # (108, 640)

    # ---- conv1: 9 time taps, broadcast multiply-accumulate ------------------------------
    acc1 = m5[0:T1, :] * w1[0:1, :] + b1
    for l in range(1, L):
        acc1 = acc1 + m5[l * T1:(l + 1) * T1, :] * w1[l:l + 1, :]
    y1 = _gelu(acc1).astype(bf16)                                                  # (12, 640)

    # ---- conv2: 3 matmuls over time taps, weights block-diag over (b, g, finger) --------
    acc2 = jnp.dot(y1[0:T2, :], w_ref[W2_OFF:W2_OFF + WIDE, :],
                   preferred_element_type=f32) + b2
    for dt in (1, 2):
        acc2 = acc2 + jnp.dot(y1[dt:dt + T2, :],
                              w_ref[W2_OFF + dt * WIDE:W2_OFF + (dt + 1) * WIDE, :],
                              preferred_element_type=f32)
    y2 = _gelu(acc2).astype(bf16)                                                  # (10, 160)

    # ---- conv3: 3 matmuls (chunk dim g folded into the contraction) ---------------------
    acc3 = jnp.dot(y2[0:T3, :], w_ref[W3_OFF:W3_OFF + W2_COLS, :],
                   preferred_element_type=f32) + b3
    for dt in (1, 2):
        acc3 = acc3 + jnp.dot(y2[dt:dt + T3, :],
                              w_ref[W3_OFF + dt * W2_COLS:W3_OFF + (dt + 1) * W2_COLS, :],
                              preferred_element_type=f32)
    y3 = _gelu(acc3)                                                               # (8, 160) f32

    # ---- flatten: (T3, B*K3) -> (B, T3*K3) via a tiny VMEM scratch (no reshape risk) ----
    for t in range(T3):
        for bb in range(B):
            h0_scr[bb:bb + 1, t * K3:(t + 1) * K3] = y3[t:t + 1, bb * K3:(bb + 1) * K3]
    h0 = h0_scr[...].astype(bf16)                                                  # (2, 640)

    # ---- 3-layer MLP head: both batch rows per dot, per-finger block-diag weights -------
    h1 = _gelu(jnp.dot(h0, w_ref[W4_OFF:W4_OFF + T3 * K3, :],
                       preferred_element_type=f32) + b4)                           # (2, 160)
    h2 = _gelu(jnp.dot(h1.astype(bf16), w_ref[W5_OFF:W5_OFF + K4, :],
                       preferred_element_type=f32) + b5)                           # (2, 160)
    out = jnp.dot(h2.astype(bf16), w_ref[W6_OFF:W6_OFF + WSLAB_W, :],
                  preferred_element_type=f32)                                      # (2, 160)

    # torch.cat([...], dim=1) over the 5 finger heads
    o_ref[...] = (out[:, 0:F] + b6).astype(o_ref.dtype)                            # (2, 5)


# ----------------------------- pallas_call wrapper -----------------------------
def _full_block(shape):
    nd = len(shape)
    return pl.BlockSpec(shape, lambda i, _nd=nd: (0,) * _nd)


def raulnet_v13_forward(inputs, params):
    bsz, cin, t_len, e = inputs.shape
    assert bsz == B and cin == NR_INPUT_CHANNELS and t_len == CHUNK * G and e == E
    # torch.stack(inputs.split(64, dim=2), dim=2) == contiguous reshape; then put time on
    # sublanes and (b, g, e) on lanes so all 4 chunks are processed together.
    x5 = inputs.astype(jnp.float32).reshape(B, NR_INPUT_CHANNELS, G, CHUNK, E)
    x_t = jnp.transpose(x5, (3, 0, 1, 2, 4)).reshape(CHUNK, BG * E)               # (64, 32)

    args = (x_t, params["C64"], params["C640"], params["WSLAB"])
    return pl.pallas_call(
        fused_raulnet_kernel,
        out_shape=jax.ShapeDtypeStruct((B, F * NR_OUTPUTS), jnp.float32),
        grid=(1,),
        in_specs=[_full_block(a.shape) for a in args],
        out_specs=_full_block((B, F * NR_OUTPUTS)),
        scratch_shapes=[pltpu.VMEM((B, T3 * K3), jnp.float32)],
        compiler_params=pltpu.CompilerParams(dimension_semantics=("arbitrary",)),
    )(*args)


# ----------------------------- deterministic parameters + packing -----------------------------
def init_params(key):
    """Generates per-finger torch-layout weights, then packs them into 3 kernel slabs."""
    def uniform(k, shape, fan_in):
        lim = 1.0 / np.sqrt(fan_in)
        return np.asarray(jax.random.uniform(k, shape, jnp.float32, -lim, lim))

    raw = {n: [] for n in ("w1", "b1", "w2", "b2", "w3", "b3", "w4", "b4", "w5", "b5", "w6", "b6")}
    for f in range(F):
        ks = jax.random.split(jax.random.fold_in(key, f), 12)
        fan1, fan2, fan3 = L, C1 * 3 * E, C2 * G * 3
        fan4, fan5, fan6 = C3 * T3, M1, M2
        raw["w1"].append(uniform(ks[0], (C1, L), fan1));         raw["b1"].append(uniform(ks[1], (C1,), fan1))
        raw["w2"].append(uniform(ks[2], (C2, C1, 3, E), fan2));  raw["b2"].append(uniform(ks[3], (C2,), fan2))
        raw["w3"].append(uniform(ks[4], (C3, C2, G, 3), fan3));  raw["b3"].append(uniform(ks[5], (C3,), fan3))
        raw["w4"].append(uniform(ks[6], (M1, C3 * T3), fan4));   raw["b4"].append(uniform(ks[7], (M1,), fan4))
        raw["w5"].append(uniform(ks[8], (M2, M1), fan5));        raw["b5"].append(uniform(ks[9], (M2,), fan5))
        raw["w6"].append(uniform(ks[10], (1, M2), fan6));        raw["b6"].append(uniform(ks[11], (1,), fan6))
    raw = {k: np.stack(v, axis=0) for k, v in raw.items()}

    # ------------- f32 constant slab, width 64: window-selection A + chunk-group Gm -------------
    c64 = np.zeros((C64_ROWS, CHUNK), np.float32)
    for l in range(L):
        for t in range(T1):
            c64[A_OFF + l * T1 + t, t * S + l] = 1.0
    for j in range(BG * E):
        for k in range(BG * E):
            if j // E == k // E:
                c64[GM_OFF + j, k] = 1.0

    # ------------- f32 constant slab, width 640: R2, conv1 weight/bias, all biases --------------
    c640 = np.zeros((C640_ROWS, WIDE), np.float32)
    for k in range(WIDE):                                   # electrode -> (bg, f, c1, e) lanes
        bg, r = divmod(k, K1)
        c640[R2_OFF + bg * E + (r % E), k] = 1.0
    for bg in range(BG):                                    # conv1 weight/bias broadcast
        for f in range(F):
            for c in range(C1):
                col = bg * K1 + f * C1 * E + c * E
                c640[W1_OFF:W1_OFF + L, col:col + E] = raw["w1"][f, c, :][:, None]
                c640[B1_ROW, col:col + E] = raw["b1"][f, c]
    for bg in range(BG):
        c640[B2_ROW, bg * K2:(bg + 1) * K2] = raw["b2"].reshape(-1)   # (f, c2)
    for b in range(B):
        c640[B3_ROW, b * K3:(b + 1) * K3] = raw["b3"].reshape(-1)     # (f, c3)
    c640[B4_ROW, 0:K4] = raw["b4"].reshape(-1)                        # (f, m1)
    c640[B5_ROW, 0:K5] = raw["b5"].reshape(-1)                        # (f, m2)
    c640[B6_ROW, 0:F] = raw["b6"].reshape(-1)                         # (f,)

    # ------------- bf16 weight slab, width 160 ---------------------------------------------------
    wslab = np.zeros((WSLAB_ROWS, WSLAB_W), np.float32)

    # conv2: rows (dt, b, g, f, c1, e) -> cols (b, g, f, c2)
    for dt in range(3):
        for bg in range(BG):
            for f in range(F):
                blk = np.transpose(raw["w2"][f, :, :, dt, :], (1, 2, 0)).reshape(C1 * E, C2)
                r0 = W2_OFF + dt * WIDE + bg * K1 + f * C1 * E
                c0 = bg * K2 + f * C2
                wslab[r0:r0 + C1 * E, c0:c0 + C2] = blk

    # conv3: rows (dt, b, g, f, c2) -> cols (b, f, c3); chunk dim g lives in the contraction
    for dt in range(3):
        for b in range(B):
            for g in range(G):
                for f in range(F):
                    bg = b * G + g
                    r0 = W3_OFF + dt * W2_COLS + bg * K2 + f * C2
                    c0 = b * K3 + f * C3
                    wslab[r0:r0 + C2, c0:c0 + C3] = raw["w3"][f, :, :, g, dt].T

    # mlp linear1: rows (t3, f, c3) -- PyTorch flatten index is c3*T3 + t3 -- cols (f, m1)
    for f in range(F):
        for t in range(T3):
            r0 = W4_OFF + t * K3 + f * C3
            wslab[r0:r0 + C3, f * M1:(f + 1) * M1] = raw["w4"][f][:, t::T3].T

    # mlp linear2 / linear3 (lane/row padded with zeros past K5)
    for f in range(F):
        wslab[W5_OFF + f * M1:W5_OFF + (f + 1) * M1, f * M2:(f + 1) * M2] = raw["w5"][f].T
        wslab[W6_OFF + f * M2:W6_OFF + (f + 1) * M2, f] = raw["w6"][f, 0, :]

    packed = dict(
        C64=jnp.asarray(c64),
        C640=jnp.asarray(c640),
        WSLAB=jnp.asarray(wslab, dtype=jnp.bfloat16),
    )
    return packed, raw


# ----------------------------- pure-JAX reference (for validation) -----------------------------
def _bf(v):
    return jnp.asarray(v).astype(jnp.bfloat16).astype(jnp.float32)


def _gelu_ref(x):
    return jax.nn.gelu(x, approximate=False)


def reference_forward(inputs, raw):
    bsz = inputs.shape[0]
    xr = inputs.astype(jnp.float32).reshape(bsz, NR_INPUT_CHANNELS, G, CHUNK, E)
    mean = xr.mean(axis=(3, 4), keepdims=True)
    d = xr - mean
    var = (d * d).sum(axis=(3, 4), keepdims=True) / (CHUNK * E - 1)
    xs = (d / (jnp.sqrt(var) + 1e-15))[:, 0]                                  # (B, G, 64, E)

    outs = []
    for f in range(F):
        w1, b1 = raw["w1"][f], raw["b1"][f]
        w2, b2 = raw["w2"][f], raw["b2"][f]
        w3, b3 = raw["w3"][f], raw["b3"][f]
        w4, b4 = raw["w4"][f], raw["b4"][f]
        w5, b5 = raw["w5"][f], raw["b5"][f]
        w6, b6 = raw["w6"][f], raw["b6"][f]

        acc1 = jnp.zeros((bsz, G, T1, E, C1), jnp.float32) + b1.reshape(1, 1, 1, 1, C1)
        for l in range(L):
            sl = xs[:, :, l:l + S * T1:S, :]                                  # (B,G,T1,E)
            acc1 = acc1 + sl[..., None] * w1[:, l].reshape(1, 1, 1, 1, C1)
        y1 = _gelu_ref(acc1)

        acc2 = jnp.zeros((bsz, G, T2, C2), jnp.float32) + b2.reshape(1, 1, 1, C2)
        for dt in range(3):
            acc2 = acc2 + jnp.einsum('bgtec,oce->bgto',
                                     _bf(y1[:, :, dt:dt + T2, :, :]), _bf(w2[:, :, dt, :]))
        y2 = _gelu_ref(acc2)

        acc3 = jnp.zeros((bsz, T3, C3), jnp.float32) + b3.reshape(1, 1, C3)
        for gg in range(G):
            for dt in range(3):
                acc3 = acc3 + jnp.einsum('btc,oc->bto',
                                         _bf(y2[:, gg, dt:dt + T3, :]), _bf(w3[:, :, gg, dt]))
        y3 = _gelu_ref(acc3)                                                  # (B, T3, C3)

        flat = jnp.transpose(y3, (0, 2, 1)).reshape(bsz, C3 * T3)             # channel-major flatten
        h = _gelu_ref(_bf(flat) @ _bf(w4).T + b4.reshape(1, M1))
        h = _gelu_ref(_bf(h) @ _bf(w5).T + b5.reshape(1, M2))
        outs.append(_bf(h) @ _bf(w6).T + b6.reshape(1, 1))
    return jnp.concatenate(outs, axis=1)                                      # (B, 5)


# ----------------------------- main -----------------------------
if __name__ == "__main__":
    x = jax.random.normal(jax.random.PRNGKey(0),
                          (BATCH, NR_INPUT_CHANNELS, CHUNK * N_CHUNKS, N_ELECTRODES),
                          dtype=jnp.float32)
    packed, raw = init_params(jax.random.PRNGKey(1))

    fwd = jax.jit(raulnet_v13_forward)
    out = jax.block_until_ready(fwd(x, packed))

    assert out.shape == (BATCH, NUM_FINGERS * NR_OUTPUTS), out.shape
    assert bool(jnp.all(jnp.isfinite(out)))

    ref = np.asarray(reference_forward(x, raw))
    np.testing.assert_allclose(np.asarray(out), ref, rtol=3e-2, atol=3e-2)
    print("KERNEL_OK")
</pallas_src>

<mosaic_0001>
module attributes {stable_mosaic.version = 11 : i64} {
  func.func @fused_raulnet_kernel(%arg0: i32, %arg1: memref<64x32xf32, #tpu.memory_space<vmem>>, %arg2: memref<140x64xf32, #tpu.memory_space<vmem>>, %arg3: memref<47x640xf32, #tpu.memory_space<vmem>>, %arg4: memref<3360x160xbf16, #tpu.memory_space<vmem>>, %arg5: memref<2x5xf32, #tpu.memory_space<vmem>>, %arg6: memref<2x640xf32, #tpu.memory_space<vmem>>) attributes {dimension_semantics = [#tpu.dimension_semantics<arbitrary>], iteration_bounds = array<i64: 1>, scalar_prefetch = 0 : i64, scratch_operands = 1 : i64, tpu.core_type = #tpu.core_type<tc>, window_params = [{pipeline_mode = #tpu.pipeline_mode<synchronous>, transform_indices = @transform_0, window_bounds = array<i64: 64, 32>}, {pipeline_mode = #tpu.pipeline_mode<synchronous>, transform_indices = @transform_1, window_bounds = array<i64: 140, 64>}, {pipeline_mode = #tpu.pipeline_mode<synchronous>, transform_indices = @transform_2, window_bounds = array<i64: 47, 640>}, {pipeline_mode = #tpu.pipeline_mode<synchronous>, transform_indices = @transform_3, window_bounds = array<i64: 3360, 160>}, {pipeline_mode = #tpu.pipeline_mode<synchronous>, transform_indices = @transform_4, window_bounds = array<i64: 2, 5>}]} {
    %c0 = arith.constant 0 : index
    %c0_0 = arith.constant 0 : index
    %0 = vector.load %arg1[%c0, %c0_0] : memref<64x32xf32, #tpu.memory_space<vmem>>, vector<64x32xf32>
    %c0_1 = arith.constant 0 : index
    %c0_2 = arith.constant 0 : index
    %1 = vector.load %arg2[%c0_1, %c0_2] : memref<140x64xf32, #tpu.memory_space<vmem>>, vector<108x64xf32>
    %c108 = arith.constant 108 : index
    %c0_3 = arith.constant 0 : index
    %2 = vector.load %arg2[%c108, %c0_3] : memref<140x64xf32, #tpu.memory_space<vmem>>, vector<32x32xf32>
    %c0_4 = arith.constant 0 : index
    %c0_5 = arith.constant 0 : index
    %3 = vector.load %arg3[%c0_4, %c0_5] : memref<47x640xf32, #tpu.memory_space<vmem>>, vector<32x640xf32>
    %c32 = arith.constant 32 : index
    %c0_6 = arith.constant 0 : index
    %4 = vector.load %arg3[%c32, %c0_6] : memref<47x640xf32, #tpu.memory_space<vmem>>, vector<9x640xf32>
    %c41 = arith.constant 41 : index
    %c0_7 = arith.constant 0 : index
    %5 = vector.load %arg3[%c41, %c0_7] : memref<47x640xf32, #tpu.memory_space<vmem>>, vector<1x640xf32>
    %c42 = arith.constant 42 : index
    %c0_8 = arith.constant 0 : index
    %6 = vector.load %arg3[%c42, %c0_8] : memref<47x640xf32, #tpu.memory_space<vmem>>, vector<1x160xf32>
    %c43 = arith.constant 43 : index
    %c0_9 = arith.constant 0 : index
    %7 = vector.load %arg3[%c43, %c0_9] : memref<47x640xf32, #tpu.memory_space<vmem>>, vector<1x160xf32>
    %c44 = arith.constant 44 : index
    %c0_10 = arith.constant 0 : index
    %8 = vector.load %arg3[%c44, %c0_10] : memref<47x640xf32, #tpu.memory_space<vmem>>, vector<1x160xf32>
    %c45 = arith.constant 45 : index
    %c0_11 = arith.constant 0 : index
    %9 = vector.load %arg3[%c45, %c0_11] : memref<47x640xf32, #tpu.memory_space<vmem>>, vector<1x160xf32>
    %c46 = arith.constant 46 : index
    %c0_12 = arith.constant 0 : index
    %10 = vector.load %arg3[%c46, %c0_12] : memref<47x640xf32, #tpu.memory_space<vmem>>, vector<1x5xf32>
    %cst = arith.constant dense<0.000000e+00> : vector<32xf32>
    %11 = vector.multi_reduction <add>, %0, %cst [0] : vector<64x32xf32> to vector<32xf32>
    %12 = vector.shape_cast %11 : vector<32xf32> to vector<1x32xf32>
    %cst_13 = arith.constant dense<0.000000e+00> : vector<1x32xf32>
    %13 = tpu.matmul %12, %2, %cst_13 {dimension_numbers = #tpu.dot_dimension_numbers<[1], [0], [0], [1], [0, 0, 1, 1], [], []>} : vector<1x32xf32>, vector<32x32xf32>, vector<1x32xf32> -> vector<1x32xf32>
    %cst_14 = arith.constant 0.001953125 : f32
    %14 = vector.broadcast %cst_14 : f32 to vector<1x32xf32>
    %15 = arith.mulf %13, %14 : vector<1x32xf32>
    %16 = vector.broadcast %15 : vector<1x32xf32> to vector<64x32xf32>
    %17 = arith.subf %0, %16 : vector<64x32xf32>
    %18 = arith.mulf %17, %17 : vector<64x32xf32>
    %cst_15 = arith.constant dense<0.000000e+00> : vector<32xf32>
    %19 = vector.multi_reduction <add>, %18, %cst_15 [0] : vector<64x32xf32> to vector<32xf32>
    %20 = vector.shape_cast %19 : vector<32xf32> to vector<1x32xf32>
    %cst_16 = arith.constant dense<0.000000e+00> : vector<1x32xf32>
    %21 = tpu.matmul %20, %2, %cst_16 {dimension_numbers = #tpu.dot_dimension_numbers<[1], [0], [0], [1], [0, 0, 1, 1], [], []>} : vector<1x32xf32>, vector<32x32xf32>, vector<1x32xf32> -> vector<1x32xf32>
    %cst_17 = arith.constant 0.00195694715 : f32
    %22 = vector.broadcast %cst_17 : f32 to vector<1x32xf32>
    %23 = arith.mulf %21, %22 : vector<1x32xf32>
    %24 = math.sqrt %23 : vector<1x32xf32>
    %cst_18 = arith.constant 1.000000e-15 : f32
    %25 = vector.broadcast %cst_18 : f32 to vector<1x32xf32>
    %26 = arith.addf %24, %25 : vector<1x32xf32>
    %27 = tpu.reciprocal %26 {approx = true} : vector<1x32xf32> -> vector<1x32xf32>
    %28 = vector.broadcast %27 : vector<1x32xf32> to vector<64x32xf32>
    %29 = arith.mulf %17, %28 : vector<64x32xf32>
    %cst_19 = arith.constant dense<0.000000e+00> : vector<64x640xf32>
    %30 = tpu.matmul %29, %3, %cst_19 {dimension_numbers = #tpu.dot_dimension_numbers<[1], [0], [0], [1], [0, 0, 1, 1], [], []>} : vector<64x32xf32>, vector<32x640xf32>, vector<64x640xf32> -> vector<64x640xf32>
    %cst_20 = arith.constant dense<0.000000e+00> : vector<108x640xf32>
    %31 = tpu.matmul %1, %30, %cst_20 {dimension_numbers = #tpu.dot_dimension_numbers<[1], [0], [0], [1], [0, 0, 1, 1], [], []>} : vector<108x64xf32>, vector<64x640xf32>, vector<108x640xf32> -> vector<108x640xf32>
    %32 = vector.extract_strided_slice %31 {offsets = [0, 0], sizes = [12, 640], strides = [1, 1]} : vector<108x640xf32> to vector<12x640xf32>
    %33 = vector.extract_strided_slice %4 {offsets = [0, 0], sizes = [1, 640], strides = [1, 1]} : vector<9x640xf32> to vector<1x640xf32>
    %34 = vector.broadcast %33 : vector<1x640xf32> to vector<12x640xf32>
    %35 = arith.mulf %32, %34 : vector<12x640xf32>
    %36 = vector.broadcast %5 : vector<1x640xf32> to vector<12x640xf32>
    %37 = arith.addf %35, %36 : vector<12x640xf32>
    %38 = vector.extract_strided_slice %31 {offsets = [12, 0], sizes = [12, 640], strides = [1, 1]} : vector<108x640xf32> to vector<12x640xf32>
    %39 = vector.extract_strided_slice %4 {offsets = [1, 0], sizes = [1, 640], strides = [1, 1]} : vector<9x640xf32> to vector<1x640xf32>
    %40 = vector.broadcast %39 : vector<1x640xf32> to vector<12x640xf32>
    %41 = arith.mulf %38, %40 : vector<12x640xf32>
    %42 = arith.addf %37, %41 : vector<12x640xf32>
    %43 = vector.extract_strided_slice %31 {offsets = [24, 0], sizes = [12, 640], strides = [1, 1]} : vector<108x640xf32> to vector<12x640xf32>
    %44 = vector.extract_strided_slice %4 {offsets = [2, 0], sizes = [1, 640], strides = [1, 1]} : vector<9x640xf32> to vector<1x640xf32>
    %45 = vector.broadcast %44 : vector<1x640xf32> to vector<12x640xf32>
    %46 = arith.mulf %43, %45 : vector<12x640xf32>
    %47 = arith.addf %42, %46 : vector<12x640xf32>
    %48 = vector.extract_strided_slice %31 {offsets = [36, 0], sizes = [12, 640], strides = [1, 1]} : vector<108x640xf32> to vector<12x640xf32>
    %49 = vector.extract_strided_slice %4 {offsets = [3, 0], sizes = [1, 640], strides = [1, 1]} : vector<9x640xf32> to vector<1x640xf32>
    %50 = vector.broadcast %49 : vector<1x640xf32> to vector<12x640xf32>
    %51 = arith.mulf %48, %50 : vector<12x640xf32>
    %52 = arith.addf %47, %51 : vector<12x640xf32>
    %53 = vector.extract_strided_slice %31 {offsets = [48, 0], sizes = [12, 640], strides = [1, 1]} : vector<108x640xf32> to vector<12x640xf32>
    %54 = vector.extract_strided_slice %4 {offsets = [4, 0], sizes = [1, 640], strides = [1, 1]} : vector<9x640xf32> to vector<1x640xf32>
    %55 = vector.broadcast %54 : vector<1x640xf32> to vector<12x640xf32>
    %56 = arith.mulf %53, %55 : vector<12x640xf32>
    %57 = arith.addf %52, %56 : vector<12x640xf32>
    %58 = vector.extract_strided_slice %31 {offsets = [60, 0], sizes = [12, 640], strides = [1, 1]} : vector<108x640xf32> to vector<12x640xf32>
    %59 = vector.extract_strided_slice %4 {offsets = [5, 0], sizes = [1, 640], strides = [1, 1]} : vector<9x640xf32> to vector<1x640xf32>
    %60 = vector.broadcast %59 : vector<1x640xf32> to vector<12x640xf32>
    %61 = arith.mulf %58, %60 : vector<12x640xf32>
    %62 = arith.addf %57, %61 : vector<12x640xf32>
    %63 = vector.extract_strided_slice %31 {offsets = [72, 0], sizes = [12, 640], strides = [1, 1]} : vector<108x640xf32> to vector<12x640xf32>
    %64 = vector.extract_strided_slice %4 {offsets = [6, 0], sizes = [1, 640], strides = [1, 1]} : vector<9x640xf32> to vector<1x640xf32>
    %65 = vector.broadcast %64 : vector<1x640xf32> to vector<12x640xf32>
    %66 = arith.mulf %63, %65 : vector<12x640xf32>
    %67 = arith.addf %62, %66 : vector<12x640xf32>
    %68 = vector.extract_strided_slice %31 {offsets = [84, 0], sizes = [12, 640], strides = [1, 1]} : vector<108x640xf32> to vector<12x640xf32>
    %69 = vector.extract_strided_slice %4 {offsets = [7, 0], sizes = [1, 640], strides = [1, 1]} : vector<9x640xf32> to vector<1x640xf32>
    %70 = vector.broadcast %69 : vector<1x640xf32> to vector<12x640xf32>
    %71 = arith.mulf %68, %70 : vector<12x640xf32>
    %72 = arith.addf %67, %71 : vector<12x640xf32>
    %73 = vector.extract_strided_slice %31 {offsets = [96, 0], sizes = [12, 640], strides = [1, 1]} : vector<108x640xf32> to vector<12x640xf32>
    %74 = vector.extract_strided_slice %4 {offsets = [8, 0], sizes = [1, 640], strides = [1, 1]} : vector<9x640xf32> to vector<1x640xf32>
    %75 = vector.broadcast %74 : vector<1x640xf32> to vector<12x640xf32>
    %76 = arith.mulf %73, %75 : vector<12x640xf32>
    %77 = arith.addf %72, %76 : vector<12x640xf32>
    %cst_21 = arith.constant 5.000000e-01 : f32
    %78 = vector.broadcast %cst_21 : f32 to vector<12x640xf32>
    %79 = arith.mulf %78, %77 : vector<12x640xf32>
    %80 = arith.mulf %77, %77 : vector<12x640xf32>
    %81 = arith.mulf %80, %77 : vector<12x640xf32>
    %cst_22 = arith.constant 4.471500e-02 : f32
    %82 = vector.broadcast %cst_22 : f32 to vector<12x640xf32>
    %83 = arith.mulf %82, %81 : vector<12x640xf32>
    %84 = arith.addf %77, %83 : vector<12x640xf32>
    %cst_23 = arith.constant 0.797884583 : f32
    %85 = vector.broadcast %cst_23 : f32 to vector<12x640xf32>
    %86 = arith.mulf %85, %84 : vector<12x640xf32>
    %87 = math.tanh %86 : vector<12x640xf32>
    %cst_24 = arith.constant 1.000000e+00 : f32
    %88 = vector.broadcast %cst_24 : f32 to vector<12x640xf32>
    %89 = arith.addf %88, %87 : vector<12x640xf32>
    %90 = arith.mulf %79, %89 : vector<12x640xf32>
    %91 = arith.truncf %90 : vector<12x640xf32> to vector<12x640xbf16>
    %92 = vector.extract_strided_slice %91 {offsets = [0, 0], sizes = [10, 640], strides = [1, 1]} : vector<12x640xbf16> to vector<10x640xbf16>
    %c0_25 = arith.constant 0 : index
    %c0_26 = arith.constant 0 : index
    %93 = vector.load %arg4[%c0_25, %c0_26] : memref<3360x160xbf16, #tpu.memory_space<vmem>>, vector<640x160xbf16>
    %cst_27 = arith.constant dense<0.000000e+00> : vector<10x160xf32>
    %94 = tpu.matmul %92, %93, %cst_27 {dimension_numbers = #tpu.dot_dimension_numbers<[1], [0], [0], [1], [0, 0, 1, 1], [], []>} : vector<10x640xbf16>, vector<640x160xbf16>, vector<10x160xf32> -> vector<10x160xf32>
    %95 = vector.broadcast %6 : vector<1x160xf32> to vector<10x160xf32>
    %96 = arith.addf %94, %95 : vector<10x160xf32>
    %97 = vector.extract_strided_slice %91 {offsets = [1, 0], sizes = [10, 640], strides = [1, 1]} : vector<12x640xbf16> to vector<10x640xbf16>
    %c640 = arith.constant 640 : index
    %c0_28 = arith.constant 0 : index
    %98 = vector.load %arg4[%c640, %c0_28] : memref<3360x160xbf16, #tpu.memory_space<vmem>>, vector<640x160xbf16>
    %cst_29 = arith.constant dense<0.000000e+00> : vector<10x160xf32>
    %99 = tpu.matmul %97, %98, %cst_29 {dimension_numbers = #tpu.dot_dimension_numbers<[1], [0], [0], [1], [0, 0, 1, 1], [], []>} : vector<10x640xbf16>, vector<640x160xbf16>, vector<10x160xf32> -> vector<10x160xf32>
    %100 = arith.addf %96, %99 : vector<10x160xf32>
    %101 = vector.extract_strided_slice %91 {offsets = [2, 0], sizes = [10, 640], strides = [1, 1]} : vector<12x640xbf16> to vector<10x640xbf16>
    %c1280 = arith.constant 1280 : index
    %c0_30 = arith.constant 0 : index
    %102 = vector.load %arg4[%c1280, %c0_30] : memref<3360x160xbf16, #tpu.memory_space<vmem>>, vector<640x160xbf16>
    %cst_31 = arith.constant dense<0.000000e+00> : vector<10x160xf32>
    %103 = tpu.matmul %101, %102, %cst_31 {dimension_numbers = #tpu.dot_dimension_numbers<[1], [0], [0], [1], [0, 0, 1, 1], [], []>} : vector<10x640xbf16>, vector<640x160xbf16>, vector<10x160xf32> -> vector<10x160xf32>
    %104 = arith.addf %100, %103 : vector<10x160xf32>
    %cst_32 = arith.constant 5.000000e-01 : f32
    %105 = vector.broadcast %cst_32 : f32 to vector<10x160xf32>
    %106 = arith.mulf %105, %104 : vector<10x160xf32>
    %107 = arith.mulf %104, %104 : vector<10x160xf32>
    %108 = arith.mulf %107, %104 : vector<10x160xf32>
    %cst_33 = arith.constant 4.471500e-02 : f32
    %109 = vector.broadcast %cst_33 : f32 to vector<10x160xf32>
    %110 = arith.mulf %109, %108 : vector<10x160xf32>
    %111 = arith.addf %104, %110 : vector<10x160xf32>
    %cst_34 = arith.constant 0.797884583 : f32
    %112 = vector.broadcast %cst_34 : f32 to vector<10x160xf32>
    %113 = arith.mulf %112, %111 : vector<10x160xf32>
    %114 = math.tanh %113 : vector<10x160xf32>
    %cst_35 = arith.constant 1.000000e+00 : f32
    %115 = vector.broadcast %cst_35 : f32 to vector<10x160xf32>
    %116 = arith.addf %115, %114 : vector<10x160xf32>
    %117 = arith.mulf %106, %116 : vector<10x160xf32>
    %118 = arith.truncf %117 : vector<10x160xf32> to vector<10x160xbf16>
    %119 = vector.extract_strided_slice %118 {offsets = [0, 0], sizes = [8, 160], strides = [1, 1]} : vector<10x160xbf16> to vector<8x160xbf16>
    %c1920 = arith.constant 1920 : index
    %c0_36 = arith.constant 0 : index
    %120 = vector.load %arg4[%c1920, %c0_36] : memref<3360x160xbf16, #tpu.memory_space<vmem>>, vector<160x160xbf16>
    %cst_37 = arith.constant dense<0.000000e+00> : vector<8x160xf32>
    %121 = tpu.matmul %119, %120, %cst_37 {dimension_numbers = #tpu.dot_dimension_numbers<[1], [0], [0], [1], [0, 0, 1, 1], [], []>} : vector<8x160xbf16>, vector<160x160xbf16>, vector<8x160xf32> -> vector<8x160xf32>
    %122 = vector.broadcast %7 : vector<1x160xf32> to vector<8x160xf32>
    %123 = arith.addf %121, %122 : vector<8x160xf32>
    %124 = vector.extract_strided_slice %118 {offsets = [1, 0], sizes = [8, 160], strides = [1, 1]} : vector<10x160xbf16> to vector<8x160xbf16>
    %c2080 = arith.constant 2080 : index
    %c0_38 = arith.constant 0 : index
    %125 = vector.load %arg4[%c2080, %c0_38] : memref<3360x160xbf16, #tpu.memory_space<vmem>>, vector<160x160xbf16>
    %cst_39 = arith.constant dense<0.000000e+00> : vector<8x160xf32>
    %126 = tpu.matmul %124, %125, %cst_39 {dimension_numbers = #tpu.dot_dimension_numbers<[1], [0], [0], [1], [0, 0, 1, 1], [], []>} : vector<8x160xbf16>, vector<160x160xbf16>, vector<8x160xf32> -> vector<8x160xf32>
    %127 = arith.addf %123, %126 : vector<8x160xf32>
    %128 = vector.extract_strided_slice %118 {offsets = [2, 0], sizes = [8, 160], strides = [1, 1]} : vector<10x160xbf16> to vector<8x160xbf16>
    %c2240 = arith.constant 2240 : index
    %c0_40 = arith.constant 0 : index
    %129 = vector.load %arg4[%c2240, %c0_40] : memref<3360x160xbf16, #tpu.memory_space<vmem>>, vector<160x160xbf16>
    %cst_41 = arith.constant dense<0.000000e+00> : vector<8x160xf32>
    %130 = tpu.matmul %128, %129, %cst_41 {dimension_numbers = #tpu.dot_dimension_numbers<[1], [0], [0], [1], [0, 0, 1, 1], [], []>} : vector<8x160xbf16>, vector<160x160xbf16>, vector<8x160xf32> -> vector<8x160xf32>
    %131 = arith.addf %127, %130 : vector<8x160xf32>
    %cst_42 = arith.constant 5.000000e-01 : f32
    %132 = vector.broadcast %cst_42 : f32 to vector<8x160xf32>
    %133 = arith.mulf %132, %131 : vector<8x160xf32>
    %134 = arith.mulf %131, %131 : vector<8x160xf32>
    %135 = arith.mulf %134, %131 : vector<8x160xf32>
    %cst_43 = arith.constant 4.471500e-02 : f32
    %136 = vector.broadcast %cst_43 : f32 to vector<8x160xf32>
    %137 = arith.mulf %136, %135 : vector<8x160xf32>
    %138 = arith.addf %131, %137 : vector<8x160xf32>
    %cst_44 = arith.constant 0.797884583 : f32
    %139 = vector.broadcast %cst_44 : f32 to vector<8x160xf32>
    %140 = arith.mulf %139, %138 : vector<8x160xf32>
    %141 = math.tanh %140 : vector<8x160xf32>
    %cst_45 = arith.constant 1.000000e+00 : f32
    %142 = vector.broadcast %cst_45 : f32 to vector<8x160xf32>
    %143 = arith.addf %142, %141 : vector<8x160xf32>
    %144 = arith.mulf %133, %143 : vector<8x160xf32>
    %145 = vector.extract_strided_slice %144 {offsets = [0, 0], sizes = [1, 80], strides = [1, 1]} : vector<8x160xf32> to vector<1x80xf32>
    %c0_46 = arith.constant 0 : index
    %c0_47 = arith.constant 0 : index
    %146 = vector.load %arg6[%c0_46, %c0_47] : memref<2x640xf32, #tpu.memory_space<vmem>>, vector<1x80xf32>
    tpu.vector_store %arg6[%c0_46, %c0_47], %145 {strides = array<i32>} : memref<2x640xf32, #tpu.memory_space<vmem>>, vector<1x80xf32>,
    %147 = vector.extract_strided_slice %144 {offsets = [0, 80], sizes = [1, 80], strides = [1, 1]} : vector<8x160xf32> to vector<1x80xf32>
    %c1 = arith.constant 1 : index
    %c0_48 = arith.constant 0 : index
    %148 = vector.load %arg6[%c1, %c0_48] : memref<2x640xf32, #tpu.memory_space<vmem>>, vector<1x80xf32>
    tpu.vector_store %arg6[%c1, %c0_48], %147 {strides = array<i32>} : memref<2x640xf32, #tpu.memory_space<vmem>>, vector<1x80xf32>,
    %149 = vector.extract_strided_slice %144 {offsets = [1, 0], sizes = [1, 80], strides = [1, 1]} : vector<8x160xf32> to vector<1x80xf32>
    %c0_49 = arith.constant 0 : index
    %c80 = arith.constant 80 : index
    %150 = vector.load %arg6[%c0_49, %c80] : memref<2x640xf32, #tpu.memory_space<vmem>>, vector<1x80xf32>
    tpu.vector_store %arg6[%c0_49, %c80], %149 {strides = array<i32>} : memref<2x640xf32, #tpu.memory_space<vmem>>, vector<1x80xf32>,
    %151 = vector.extract_strided_slice %144 {offsets = [1, 80], sizes = [1, 80], strides = [1, 1]} : vector<8x160xf32> to vector<1x80xf32>
    %c1_50 = arith.constant 1 : index
    %c80_51 = arith.constant 80 : index
    %152 = vector.load %arg6[%c1_50, %c80_51] : memref<2x640xf32, #tpu.memory_space<vmem>>, vector<1x80xf32>
    tpu.vector_store %arg6[%c1_50, %c80_51], %151 {strides = array<i32>} : memref<2x640xf32, #tpu.memory_space<vmem>>, vector<1x80xf32>,
    %153 = vector.extract_strided_slice %144 {offsets = [2, 0], sizes = [1, 80], strides = [1, 1]} : vector<8x160xf32> to vector<1x80xf32>
    %c0_52 = arith.constant 0 : index
    %c160 = arith.constant 160 : index
    %154 = vector.load %arg6[%c0_52, %c160] : memref<2x640xf32, #tpu.memory_space<vmem>>, vector<1x80xf32>
    tpu.vector_store %arg6[%c0_52, %c160], %153 {strides = array<i32>} : memref<2x640xf32, #tpu.memory_space<vmem>>, vector<1x80xf32>,
    %155 = vector.extract_strided_slice %144 {offsets = [2, 80], sizes = [1, 80], strides = [1, 1]} : vector<8x160xf32> to vector<1x80xf32>
    %c1_53 = arith.constant 1 : index
    %c160_54 = arith.constant 160 : index
    %156 = vector.load %arg6[%c1_53, %c160_54] : memref<2x640xf32, #tpu.memory_space<vmem>>, vector<1x80xf32>
    tpu.vector_store %arg6[%c1_53, %c160_54], %155 {strides = array<i32>} : memref<2x640xf32, #tpu.memory_space<vmem>>, vector<1x80xf32>,
    %157 = vector.extract_strided_slice %144 {offsets = [3, 0], sizes = [1, 80], strides = [1, 1]} : vector<8x160xf32> to vector<1x80xf32>
    %c0_55 = arith.constant 0 : index
    %c240 = arith.constant 240 : index
    %158 = vector.load %arg6[%c0_55, %c240] : memref<2x640xf32, #tpu.memory_space<vmem>>, vector<1x80xf32>
    tpu.vector_store %arg6[%c0_55, %c240], %157 {strides = array<i32>} : memref<2x640xf32, #tpu.memory_space<vmem>>, vector<1x80xf32>,
    %159 = vector.extract_strided_slice %144 {offsets = [3, 80], sizes = [1, 80], strides = [1, 1]} : vector<8x160xf32> to vector<1x80xf32>
    %c1_56 = arith.constant 1 : index
    %c240_57 = arith.constant 240 : index
    %160 = vector.load %arg6[%c1_56, %c240_57] : memref<2x640xf32, #tpu.memory_space<vmem>>, vector<1x80xf32>
    tpu.vector_store %arg6[%c1_56, %c240_57], %159 {strides = array<i32>} : memref<2x640xf32, #tpu.memory_space<vmem>>, vector<1x80xf32>,
    %161 = vector.extract_strided_slice %144 {offsets = [4, 0], sizes = [1, 80], strides = [1, 1]} : vector<8x160xf32> to vector<1x80xf32>
    %c0_58 = arith.constant 0 : index
    %c320 = arith.constant 320 : index
    %162 = vector.load %arg6[%c0_58, %c320] : memref<2x640xf32, #tpu.memory_space<vmem>>, vector<1x80xf32>
    tpu.vector_store %arg6[%c0_58, %c320], %161 {strides = array<i32>} : memref<2x640xf32, #tpu.memory_space<vmem>>, vector<1x80xf32>,
    %163 = vector.extract_strided_slice %144 {offsets = [4, 80], sizes = [1, 80], strides = [1, 1]} : vector<8x160xf32> to vector<1x80xf32>
    %c1_59 = arith.constant 1 : index
    %c320_60 = arith.constant 320 : index
    %164 = vector.load %arg6[%c1_59, %c320_60] : memref<2x640xf32, #tpu.memory_space<vmem>>, vector<1x80xf32>
    tpu.vector_store %arg6[%c1_59, %c320_60], %163 {strides = array<i32>} : memref<2x640xf32, #tpu.memory_space<vmem>>, vector<1x80xf32>,
    %165 = vector.extract_strided_slice %144 {offsets = [5, 0], sizes = [1, 80], strides = [1, 1]} : vector<8x160xf32> to vector<1x80xf32>
    %c0_61 = arith.constant 0 : index
    %c400 = arith.constant 400 : index
    %166 = vector.load %arg6[%c0_61, %c400] : memref<2x640xf32, #tpu.memory_space<vmem>>, vector<1x80xf32>
    tpu.vector_store %arg6[%c0_61, %c400], %165 {strides = array<i32>} : memref<2x640xf32, #tpu.memory_space<vmem>>, vector<1x80xf32>,
    %167 = vector.extract_strided_slice %144 {offsets = [5, 80], sizes = [1, 80], strides = [1, 1]} : vector<8x160xf32> to vector<1x80xf32>
    %c1_62 = arith.constant 1 : index
    %c400_63 = arith.constant 400 : index
    %168 = vector.load %arg6[%c1_62, %c400_63] : memref<2x640xf32, #tpu.memory_space<vmem>>, vector<1x80xf32>
    tpu.vector_store %arg6[%c1_62, %c400_63], %167 {strides = array<i32>} : memref<2x640xf32, #tpu.memory_space<vmem>>, vector<1x80xf32>,
    %169 = vector.extract_strided_slice %144 {offsets = [6, 0], sizes = [1, 80], strides = [1, 1]} : vector<8x160xf32> to vector<1x80xf32>
    %c0_64 = arith.constant 0 : index
    %c480 = arith.constant 480 : index
    %170 = vector.load %arg6[%c0_64, %c480] : memref<2x640xf32, #tpu.memory_space<vmem>>, vector<1x80xf32>
    tpu.vector_store %arg6[%c0_64, %c480], %169 {strides = array<i32>} : memref<2x640xf32, #tpu.memory_space<vmem>>, vector<1x80xf32>,
    %171 = vector.extract_strided_slice %144 {offsets = [6, 80], sizes = [1, 80], strides = [1, 1]} : vector<8x160xf32> to vector<1x80xf32>
    %c1_65 = arith.constant 1 : index
    %c480_66 = arith.constant 480 : index
    %172 = vector.load %arg6[%c1_65, %c480_66] : memref<2x640xf32, #tpu.memory_space<vmem>>, vector<1x80xf32>
    tpu.vector_store %arg6[%c1_65, %c480_66], %171 {strides = array<i32>} : memref<2x640xf32, #tpu.memory_space<vmem>>, vector<1x80xf32>,
    %173 = vector.extract_strided_slice %144 {offsets = [7, 0], sizes = [1, 80], strides = [1, 1]} : vector<8x160xf32> to vector<1x80xf32>
    %c0_67 = arith.constant 0 : index
    %c560 = arith.constant 560 : index
    %174 = vector.load %arg6[%c0_67, %c560] : memref<2x640xf32, #tpu.memory_space<vmem>>, vector<1x80xf32>
    tpu.vector_store %arg6[%c0_67, %c560], %173 {strides = array<i32>} : memref<2x640xf32, #tpu.memory_space<vmem>>, vector<1x80xf32>,
    %175 = vector.extract_strided_slice %144 {offsets = [7, 80], sizes = [1, 80], strides = [1, 1]} : vector<8x160xf32> to vector<1x80xf32>
    %c1_68 = arith.constant 1 : index
    %c560_69 = arith.constant 560 : index
    %176 = vector.load %arg6[%c1_68, %c560_69] : memref<2x640xf32, #tpu.memory_space<vmem>>, vector<1x80xf32>
    tpu.vector_store %arg6[%c1_68, %c560_69], %175 {strides = array<i32>} : memref<2x640xf32, #tpu.memory_space<vmem>>, vector<1x80xf32>,
    %c0_70 = arith.constant 0 : index
    %c0_71 = arith.constant 0 : index
    %177 = vector.load %arg6[%c0_70, %c0_71] : memref<2x640xf32, #tpu.memory_space<vmem>>, vector<2x640xf32>
    %178 = arith.truncf %177 : vector<2x640xf32> to vector<2x640xbf16>
    %c2400 = arith.constant 2400 : index
    %c0_72 = arith.constant 0 : index
    %179 = vector.load %arg4[%c2400, %c0_72] : memref<3360x160xbf16, #tpu.memory_space<vmem>>, vector<640x160xbf16>
    %cst_73 = arith.constant dense<0.000000e+00> : vector<2x160xf32>
    %180 = tpu.matmul %178, %179, %cst_73 {dimension_numbers = #tpu.dot_dimension_numbers<[1], [0], [0], [1], [0, 0, 1, 1], [], []>} : vector<2x640xbf16>, vector<640x160xbf16>, vector<2x160xf32> -> vector<2x160xf32>
    %181 = vector.broadcast %8 : vector<1x160xf32> to vector<2x160xf32>
    %182 = arith.addf %180, %181 : vector<2x160xf32>
    %cst_74 = arith.constant 5.000000e-01 : f32
    %183 = vector.broadcast %cst_74 : f32 to vector<2x160xf32>
    %184 = arith.mulf %183, %182 : vector<2x160xf32>
    %185 = arith.mulf %182, %182 : vector<2x160xf32>
    %186 = arith.mulf %185, %182 : vector<2x160xf32>
    %cst_75 = arith.constant 4.471500e-02 : f32
    %187 = vector.broadcast %cst_75 : f32 to vector<2x160xf32>
    %188 = arith.mulf %187, %186 : vector<2x160xf32>
    %189 = arith.addf %182, %188 : vector<2x160xf32>
    %cst_76 = arith.constant 0.797884583 : f32
    %190 = vector.broadcast %cst_76 : f32 to vector<2x160xf32>
    %191 = arith.mulf %190, %189 : vector<2x160xf32>
    %192 = math.tanh %191 : vector<2x160xf32>
    %cst_77 = arith.constant 1.000000e+00 : f32
    %193 = vector.broadcast %cst_77 : f32 to vector<2x160xf32>
    %194 = arith.addf %193, %192 : vector<2x160xf32>
    %195 = arith.mulf %184, %194 : vector<2x160xf32>
    %196 = arith.truncf %195 : vector<2x160xf32> to vector<2x160xbf16>
    %c3040 = arith.constant 3040 : index
    %c0_78 = arith.constant 0 : index
    %197 = vector.load %arg4[%c3040, %c0_78] : memref<3360x160xbf16, #tpu.memory_space<vmem>>, vector<160x160xbf16>
    %cst_79 = arith.constant dense<0.000000e+00> : vector<2x160xf32>
    %198 = tpu.matmul %196, %197, %cst_79 {dimension_numbers = #tpu.dot_dimension_numbers<[1], [0], [0], [1], [0, 0, 1, 1], [], []>} : vector<2x160xbf16>, vector<160x160xbf16>, vector<2x160xf32> -> vector<2x160xf32>
    %199 = vector.broadcast %9 : vector<1x160xf32> to vector<2x160xf32>
    %200 = arith.addf %198, %199 : vector<2x160xf32>
    %cst_80 = arith.constant 5.000000e-01 : f32
    %201 = vector.broadcast %cst_80 : f32 to vector<2x160xf32>
    %202 = arith.mulf %201, %200 : vector<2x160xf32>
    %203 = arith.mulf %200, %200 : vector<2x160xf32>
    %204 = arith.mulf %203, %200 : vector<2x160xf32>
    %cst_81 = arith.constant 4.471500e-02 : f32
    %205 = vector.broadcast %cst_81 : f32 to vector<2x160xf32>
    %206 = arith.mulf %205, %204 : vector<2x160xf32>
    %207 = arith.addf %200, %206 : vector<2x160xf32>
    %cst_82 = arith.constant 0.797884583 : f32
    %208 = vector.broadcast %cst_82 : f32 to vector<2x160xf32>
    %209 = arith.mulf %208, %207 : vector<2x160xf32>
    %210 = math.tanh %209 : vector<2x160xf32>
    %cst_83 = arith.constant 1.000000e+00 : f32
    %211 = vector.broadcast %cst_83 : f32 to vector<2x160xf32>
    %212 = arith.addf %211, %210 : vector<2x160xf32>
    %213 = arith.mulf %202, %212 : vector<2x160xf32>
    %214 = arith.truncf %213 : vector<2x160xf32> to vector<2x160xbf16>
    %c3200 = arith.constant 3200 : index
    %c0_84 = arith.constant 0 : index
    %215 = vector.load %arg4[%c3200, %c0_84] : memref<3360x160xbf16, #tpu.memory_space<vmem>>, vector<160x160xbf16>
    %cst_85 = arith.constant dense<0.000000e+00> : vector<2x160xf32>
    %216 = tpu.matmul %214, %215, %cst_85 {dimension_numbers = #tpu.dot_dimension_numbers<[1], [0], [0], [1], [0, 0, 1, 1], [], []>} : vector<2x160xbf16>, vector<160x160xbf16>, vector<2x160xf32> -> vector<2x160xf32>
    %217 = vector.extract_strided_slice %216 {offsets = [0, 0], sizes = [2, 5], strides = [1, 1]} : vector<2x160xf32> to vector<2x5xf32>
    %218 = vector.broadcast %10 : vector<1x5xf32> to vector<2x5xf32>
    %219 = arith.addf %217, %218 : vector<2x5xf32>
    %c0_86 = arith.constant 0 : index
    %c0_87 = arith.constant 0 : index
    %220 = vector.load %arg5[%c0_86, %c0_87] : memref<2x5xf32, #tpu.memory_space<vmem>>, vector<2x5xf32>
    tpu.vector_store %arg5[%c0_86, %c0_87], %219 {strides = array<i32>} : memref<2x5xf32, #tpu.memory_space<vmem>>, vector<2x5xf32>,
    return
  }
  func.func @transform_0(%arg0: i32) -> (i32, i32) {
    %c0_i32 = arith.constant 0 : i32
    %c0_i32_0 = arith.constant 0 : i32
    %c0_i32_1 = arith.constant 0 : i32
    return %c0_i32, %c0_i32_0 : i32, i32
  }
  func.func @transform_1(%arg0: i32) -> (i32, i32) {
    %c0_i32 = arith.constant 0 : i32
    %c0_i32_0 = arith.constant 0 : i32
    %c0_i32_1 = arith.constant 0 : i32
    return %c0_i32, %c0_i32_0 : i32, i32
  }
  func.func @transform_2(%arg0: i32) -> (i32, i32) {
    %c0_i32 = arith.constant 0 : i32
    %c0_i32_0 = arith.constant 0 : i32
    %c0_i32_1 = arith.constant 0 : i32
    return %c0_i32, %c0_i32_0 : i32, i32
  }
  func.func @transform_3(%arg0: i32) -> (i32, i32) {
    %c0_i32 = arith.constant 0 : i32
    %c0_i32_0 = arith.constant 0 : i32
    %c0_i32_1 = arith.constant 0 : i32
    return %c0_i32, %c0_i32_0 : i32, i32
  }
  func.func @transform_4(%arg0: i32) -> (i32, i32) {
    %c0_i32 = arith.constant 0 : i32
    %c0_i32_0 = arith.constant 0 : i32
    %c0_i32_1 = arith.constant 0 : i32
    return %c0_i32, %c0_i32_0 : i32, i32
  }
}

</mosaic_0001>

<llo_original>
// kernel: raulnet_v13_forward.1
$region0: #{raulnet_v13_forward.1}
  #allocation0 [shape = 'u32[]', space=smem, size = 0x4, offset = 0x4, fixed_abs, tag = 'smem constant byte address 0x4 - core index']
  #allocation1 [shape = 'u32[144,128]{1,0:T(1,128)}', space=vmem, size = 0x12000, scoped, tag = 'internal scratch']
  #allocation2 [shape = 'f32[2,640]{1,0:T(2,128)}', space=vmem, size = 0x1400, scoped, tag = 'scratch operand']
  %s0 = inlined_call_operand.vmem [shape: f32[64,32], index: 0, kind: input, shape index: {}]
  %s1 = inlined_call_operand.vmem [shape: f32[140,64], index: 1, kind: input, shape index: {}]
  %s2 = inlined_call_operand.vmem [shape: f32[47,640], index: 2, kind: input, shape index: {}]
  %s3 = inlined_call_operand.vmem [shape: bf16[3360,160], index: 3, kind: input, shape index: {}]
  %s4 = inlined_call_operand.hbm [shape: f32[2,5], index: 4, kind: output, shape index: {}]
  %s5 = sld [smem:[#allocation0]]
  $region26: #{raulnet_v13_forward.1} parent=0
    _
  %s7 = ssub.s32 1, %s5
  %s8 = scalar_select 0, %s7, %s5
  $region1: #{raulnet_v13_forward.1} parent=0
    #allocation3 [shape = 'u8[1024]{0}', space=vmem, size = 0x400, scoped, tag = 'output window, operand 0, single buffered']
    #allocation4 [shape = 's32[1]{0}', space=sflag, size = 0x4, scoped, tag = 'scoped memory for raulnet_v13_forward.1']
    %9 = vsyncpa [#allocation4], 0
    // Predicated region
    $region2: #{raulnet_v13_forward.1} parent=1 // pred_check
      _
    $region3: #{raulnet_v13_forward.1} parent=1 // pred_check_branch
      %11 = sbr.rel (0) target = $region5
    $region4: #{raulnet_v13_forward.1} parent=1 // pred_region
      _
    $region5: #{raulnet_v13_forward.1} parent=1 // pred_fallthru
      _
    // Predicated region
    $region6: #{raulnet_v13_forward.1} parent=1 // pred_check
      _
    $region7: #{raulnet_v13_forward.1} parent=1 // pred_check_branch
      %13 = sbr.rel (0) target = $region9
    $region8: #{raulnet_v13_forward.1} parent=1 // pred_region
      _
    $region9: #{raulnet_v13_forward.1} parent=1 // pred_fallthru
      _
    // Predicated region
    $region10: #{raulnet_v13_forward.1} parent=1 // pred_check
      _
    $region11: #{raulnet_v13_forward.1} parent=1 // pred_check_branch
      %15 = sbr.rel (0) target = $region13
    $region12: #{raulnet_v13_forward.1} parent=1 // pred_region
      _
    $region13: #{raulnet_v13_forward.1} parent=1 // pred_fallthru
      _
    // Predicated region
    $region14: #{raulnet_v13_forward.1} parent=1 // pred_check
      _
    $region15: #{raulnet_v13_forward.1} parent=1 // pred_check_branch
      %17 = sbr.rel (0) target = $region17
    $region16: #{raulnet_v13_forward.1} parent=1 // pred_region
      _
    $region17: #{raulnet_v13_forward.1} parent=1 // pred_fallthru
      _
    %v19 = vld [vmem:[%s0] sm:$0xff]
    %v20 = vld [vmem:[%s0 + $0x8] sm:$0xff]
    %v21 = vld [vmem:[%s0 + $0x10] sm:$0xff]
    %v22 = vld [vmem:[%s0 + $0x18] sm:$0xff]
    %v23 = vld [vmem:[%s0 + $0x20] sm:$0xff]
    %v24 = vld [vmem:[%s0 + $0x28] sm:$0xff]
    %v25 = vld [vmem:[%s0 + $0x30] sm:$0xff]
    %v26 = vld [vmem:[%s0 + $0x38] sm:$0xff]
    %v27 = vld [vmem:[%s1] sm:$0xff]
    %v28 = vld [vmem:[%s1 + $0x8] sm:$0xff]
    %v29 = vld [vmem:[%s1 + $0x10] sm:$0xff]
    %v30 = vld [vmem:[%s1 + $0x18] sm:$0xff]
    %v31 = vld [vmem:[%s1 + $0x20] sm:$0xff]
    %v32 = vld [vmem:[%s1 + $0x28] sm:$0xff]
    %v33 = vld [vmem:[%s1 + $0x30] sm:$0xff]
    %v34 = vld [vmem:[%s1 + $0x38] sm:$0xff]
    %v35 = vld [vmem:[%s1 + $0x40] sm:$0xff]
    %v36 = vld [vmem:[%s1 + $0x48] sm:$0xff]
    %v37 = vld [vmem:[%s1 + $0x50] sm:$0xff]
    %v38 = vld [vmem:[%s1 + $0x58] sm:$0xff]
    %v39 = vld [vmem:[%s1 + $0x60] sm:$0xff]
    %v40 = vld [vmem:[%s1 + $0x68] sm:$0xf]
    %v41 = vld [vmem:[%s1 + $0x6c] sm:$0xff]
    %v42 = vld [vmem:[%s1 + $0x74] sm:$0xff]
    %v43 = vld [vmem:[%s1 + $0x7c] sm:$0xff]
    %v44 = vld [vmem:[%s1 + $0x84] sm:$0xff]
    %v45 = vld [vmem:[%s2] sm:$0xff]
    %v46 = vld [vmem:[%s2 + $0x8] sm:$0xff]
    %v47 = vld [vmem:[%s2 + $0x10] sm:$0xff]
    %v48 = vld [vmem:[%s2 + $0x18] sm:$0xff]
    %v49 = vld [vmem:[%s2 + $0x20] sm:$0xff]
    %v50 = vld [vmem:[%s2 + $0x28] sm:$0xff]
    %v51 = vld [vmem:[%s2 + $0x30] sm:$0xff]
    %v52 = vld [vmem:[%s2 + $0x38] sm:$0xff]
    %v53 = vld [vmem:[%s2 + $0x40] sm:$0xff]
    %v54 = vld [vmem:[%s2 + $0x48] sm:$0xff]
    %v55 = vld [vmem:[%s2 + $0x50] sm:$0xff]
    %v56 = vld [vmem:[%s2 + $0x58] sm:$0xff]
    %v57 = vld [vmem:[%s2 + $0x60] sm:$0xff]
    %v58 = vld [vmem:[%s2 + $0x68] sm:$0xff]
    %v59 = vld [vmem:[%s2 + $0x70] sm:$0xff]
    %v60 = vld [vmem:[%s2 + $0x78] sm:$0xff]
    %v61 = vld [vmem:[%s2 + $0x80] sm:$0xff]
    %v62 = vld [vmem:[%s2 + $0x88] sm:$0xff]
    %v63 = vld [vmem:[%s2 + $0x90] sm:$0xff]
    %v64 = vld [vmem:[%s2 + $0x98] sm:$0xff]
    %v65 = vld [vmem:[%s2 + $0xa0] sm:$0xff]
    %v66 = vld [vmem:[%s2 + $0xa8] sm:$0xff]
    %v67 = vld [vmem:[%s2 + $0xb0] sm:$0xff]
    %v68 = vld [vmem:[%s2 + $0xb8] sm:$0xff]
    %v69 = vld [vmem:[%s2 + $0xc0] sm:$0xff]
    %v70 = vld [vmem:[%s2 + $0xc8] sm:$0x1]
    %v71 = vld [vmem:[%s2 + $0xd0] sm:$0x1]
    %v72 = vld [vmem:[%s2 + $0xd8] sm:$0x1]
    %v73 = vld [vmem:[%s2 + $0xe0] sm:$0x1]
    %v74 = vld [vmem:[%s2 + $0xe8] sm:$0x1]
    %s75 = scalar_lea.vmem %s2, 201
    %v76 = vld [vmem:[%s75] ss:$8 sm:$0xf]
    %v77 = vld [vmem:[%s75] ss:$8 sm:$0x10]
    %v78 = vor.u32 %v76, %v77
    %s79 = scalar_lea.vmem %s2, 202
    %v80 = vld [vmem:[%s79] ss:$8 sm:$0x3]
    %s81 = scalar_lea.vmem %s2, 203
    %v82 = vld [vmem:[%s81] ss:$8 sm:$0x3]
    %s83 = scalar_lea.vmem %s2, 204
    %v84 = vld [vmem:[%s83] ss:$8 sm:$0x3]
    %s85 = scalar_lea.vmem %s2, 205
    %v86 = vld [vmem:[%s85] ss:$8 sm:$0x3]
    %v87 = vld [vmem:[%s2 + $0xce] ss:$0 sm:$0xff]
    %vm88 = vcmask 261120
    %v89 = vsel %vm88, %v19, 0.0
    %v90 = vsel %vm88, %v20, 0.0
    %v91 = vadd.f32 %v89, %v90
    %v92 = vsel %vm88, %v21, 0.0
    %v93 = vadd.f32 %v91, %v92
    %v94 = vsel %vm88, %v22, 0.0
    %v95 = vadd.f32 %v93, %v94
    %v96 = vsel %vm88, %v23, 0.0
    %v97 = vadd.f32 %v95, %v96
    %v98 = vsel %vm88, %v24, 0.0
    %v99 = vadd.f32 %v97, %v98
    %v100 = vsel %vm88, %v25, 0.0
    %v101 = vadd.f32 %v99, %v100
    %v102 = vsel %vm88, %v26, 0.0
    %v103 = vadd.f32 %v101, %v102
    %v104 = vrot.slane %v103, 4
    %v105 = vadd.f32 %v103, %v104
    %v106 = vrot.slane %v105, 2
    %v107 = vadd.f32 %v105, %v106
    %v108 = vrot.slane %v107, 1
    %v109 = vadd.f32 %v107, %v108
    %v111 = vsel %vm88, %v109, 0
    %113 = vmatprep.subr.mxu0 0.0
    %114 = vmatpush1.msra.mxu0 0.0
    %115 = vmatprep.subr.mxu0 0.0
    %116 = vmatpush1.msra.mxu0 0.0
    %117 = vmatprep.subr.mxu0 0.0
    %118 = vmatpush1.msra.mxu0 0.0
    %119 = vmatprep.subr.mxu0 0.0
    %120 = vmatpush1.msra.mxu0 0.0
    %121 = vmatprep.subr.mxu0 0.0
    %122 = vmatpush1.msra.mxu0 0.0
    %123 = vmatprep.subr.mxu0 0.0
    %124 = vmatpush1.msra.mxu0 0.0
    %125 = vmatprep.subr.mxu0 0.0
    %126 = vmatpush1.msra.mxu0 0.0
    %127 = vmatprep.subr.mxu0 0.0
    %128 = vmatpush1.msra.mxu0 0.0
    %129 = vmatprep.subr.mxu0 0.0
    %130 = vmatpush1.msra.mxu0 0.0
    %131 = vmatprep.subr.mxu0 0.0
    %132 = vmatpush1.msra.mxu0 0.0
    %133 = vmatprep.subr.mxu0 0.0
    %134 = vmatpush1.msra.mxu0 0.0
    %135 = vmatprep.subr.mxu0 0.0
    %136 = vmatpush1.msra.mxu0 0.0
    %137 = vmatprep.subr.mxu0 0.0
    %138 = vmatpush1.msra.mxu0 %v44
    %139 = vmatprep.subr.mxu0 0.0
    %140 = vmatpush1.msra.mxu0 %v43
    %141 = vmatprep.subr.mxu0 0.0
    %142 = vmatpush1.msra.mxu0 %v42
    %143 = vmatprep.subr.mxu0 0.0
    %144 = vmatpush1.msra.mxu0 %v41
    %145 = vmatprep.subr.mxu0 0.0
    %146 = vmatpush2.msra.mxu0 0.0
    %147 = vmatprep.subr.mxu0 0.0
    %148 = vmatpush2.msra.mxu0 0.0
    %149 = vmatprep.subr.mxu0 0.0
    %150 = vmatpush2.msra.mxu0 0.0
    %151 = vmatprep.subr.mxu0 0.0
    %152 = vmatpush2.msra.mxu0 0.0
    %153 = vmatprep.subr.mxu0 0.0
    %154 = vmatpush2.msra.mxu0 0.0
    %155 = vmatprep.subr.mxu0 0.0
    %156 = vmatpush2.msra.mxu0 0.0
    %157 = vmatprep.subr.mxu0 0.0
    %158 = vmatpush2.msra.mxu0 0.0
    %159 = vmatprep.subr.mxu0 0.0
    %160 = vmatpush2.msra.mxu0 0.0
    %161 = vmatprep.subr.mxu0 0.0
    %162 = vmatpush2.msra.mxu0 0.0
    %163 = vmatprep.subr.mxu0 0.0
    %164 = vmatpush2.msra.mxu0 0.0
    %165 = vmatprep.subr.mxu0 0.0
    %166 = vmatpush2.msra.mxu0 0.0
    %167 = vmatprep.subr.mxu0 0.0
    %168 = vmatpush2.msra.mxu0 0.0
    %169 = vmatprep.subr.mxu0 0.0
    %170 = vmatpush2.msra.mxu0 0.0
    %171 = vmatprep.subr.mxu0 0.0
    %172 = vmatpush2.msra.mxu0 0.0
    %173 = vmatprep.subr.mxu0 0.0
    %174 = vmatpush2.msra.mxu0 0.0
    %175 = vmatprep.subr.mxu0 0.0
    %176 = vmatpush2.msra.mxu0 0.0
    %177 = vmatprep.mubr.f32.mxu0 0.0
    %178 = vmatmul.mubr.f32.gmra.mxu0 %v111
    %v179 = vpop.f32.mrf.mxu0
    %v180 = vadd.f32 0.0, %v179
    %v181 = vpop.f32.mrf.mxu0
    %182 = vdwg.mxu0
    %v183 = vmul.f32 %v180, 0.001953125
    %v184 = vlaneseq
    %v185 = vshrl.u32 %v184, 7
    %v186 = vsub.s32 0, %v185
    %v187 = vrot.slane %v183, %v186
    %v188 = vsub.f32 %v19, %v187
    %v189 = vsub.f32 %v20, %v187
    %v190 = vsub.f32 %v21, %v187
    %v191 = vsub.f32 %v22, %v187
    %v192 = vsub.f32 %v23, %v187
    %v193 = vsub.f32 %v24, %v187
    %v194 = vsub.f32 %v25, %v187
    %v195 = vsub.f32 %v26, %v187
    %v196 = vmul.f32 %v188, %v188
    %v197 = vmul.f32 %v189, %v189
    %v198 = vmul.f32 %v190, %v190
    %v199 = vmul.f32 %v191, %v191
    %v200 = vmul.f32 %v192, %v192
    %v201 = vmul.f32 %v193, %v193
    %v202 = vmul.f32 %v194, %v194
    %v203 = vmul.f32 %v195, %v195
    %v204 = vsel %vm88, %v196, 0.0
    %v205 = vsel %vm88, %v197, 0.0
    %v206 = vadd.f32 %v204, %v205
    %v207 = vsel %vm88, %v198, 0.0
    %v208 = vadd.f32 %v206, %v207
    %v209 = vsel %vm88, %v199, 0.0
    %v210 = vadd.f32 %v208, %v209
    %v211 = vsel %vm88, %v200, 0.0
    %v212 = vadd.f32 %v210, %v211
    %v213 = vsel %vm88, %v201, 0.0
    %v214 = vadd.f32 %v212, %v213
    %v215 = vsel %vm88, %v202, 0.0
    %v216 = vadd.f32 %v214, %v215
    %v217 = vsel %vm88, %v203, 0.0
    %v218 = vadd.f32 %v216, %v217
    %v219 = vrot.slane %v218, 4
    %v220 = vadd.f32 %v218, %v219
    %v221 = vrot.slane %v220, 2
    %v222 = vadd.f32 %v220, %v221
    %v223 = vrot.slane %v222, 1
    %v224 = vadd.f32 %v222, %v223
    %v226 = vsel %vm88, %v224, 0
    %228 = vmatprep.subr.mxu0 0.0
    %229 = vmatpush1.msra.mxu0 0.0
    %230 = vmatprep.subr.mxu0 0.0
    %231 = vmatpush1.msra.mxu0 0.0
    %232 = vmatprep.subr.mxu0 0.0
    %233 = vmatpush1.msra.mxu0 0.0
    %234 = vmatprep.subr.mxu0 0.0
    %235 = vmatpush1.msra.mxu0 0.0
    %236 = vmatprep.subr.mxu0 0.0
    %237 = vmatpush1.msra.mxu0 0.0
    %238 = vmatprep.subr.mxu0 0.0
    %239 = vmatpush1.msra.mxu0 0.0
    %240 = vmatprep.subr.mxu0 0.0
    %241 = vmatpush1.msra.mxu0 0.0
    %242 = vmatprep.subr.mxu0 0.0
    %243 = vmatpush1.msra.mxu0 0.0
    %244 = vmatprep.subr.mxu0 0.0
    %245 = vmatpush1.msra.mxu0 0.0
    %246 = vmatprep.subr.mxu0 0.0
    %247 = vmatpush1.msra.mxu0 0.0
    %248 = vmatprep.subr.mxu0 0.0
    %249 = vmatpush1.msra.mxu0 0.0
    %250 = vmatprep.subr.mxu0 0.0
    %251 = vmatpush1.msra.mxu0 0.0
    %252 = vmatprep.subr.mxu0 0.0
    %253 = vmatpush1.msra.mxu0 %v44
    %254 = vmatprep.subr.mxu0 0.0
    %255 = vmatpush1.msra.mxu0 %v43
    %256 = vmatprep.subr.mxu0 0.0
    %257 = vmatpush1.msra.mxu0 %v42
    %258 = vmatprep.subr.mxu0 0.0
    %259 = vmatpush1.msra.mxu0 %v41
    %260 = vmatprep.subr.mxu0 0.0
    %261 = vmatpush2.msra.mxu0 0.0
    %262 = vmatprep.subr.mxu0 0.0
    %263 = vmatpush2.msra.mxu0 0.0
    %264 = vmatprep.subr.mxu0 0.0
    %265 = vmatpush2.msra.mxu0 0.0
    %266 = vmatprep.subr.mxu0 0.0
    %267 = vmatpush2.msra.mxu0 0.0
    %268 = vmatprep.subr.mxu0 0.0
    %269 = vmatpush2.msra.mxu0 0.0
    %270 = vmatprep.subr.mxu0 0.0
    %271 = vmatpush2.msra.mxu0 0.0
    %272 = vmatprep.subr.mxu0 0.0
    %273 = vmatpush2.msra.mxu0 0.0
    %274 = vmatprep.subr.mxu0 0.0
    %275 = vmatpush2.msra.mxu0 0.0
    %276 = vmatprep.subr.mxu0 0.0
    %277 = vmatpush2.msra.mxu0 0.0
    %278 = vmatprep.subr.mxu0 0.0
    %279 = vmatpush2.msra.mxu0 0.0
    %280 = vmatprep.subr.mxu0 0.0
    %281 = vmatpush2.msra.mxu0 0.0
    %282 = vmatprep.subr.mxu0 0.0
    %283 = vmatpush2.msra.mxu0 0.0
    %284 = vmatprep.subr.mxu0 0.0
    %285 = vmatpush2.msra.mxu0 0.0
    %286 = vmatprep.subr.mxu0 0.0
    %287 = vmatpush2.msra.mxu0 0.0
    %288 = vmatprep.subr.mxu0 0.0
    %289 = vmatpush2.msra.mxu0 0.0
    %290 = vmatprep.subr.mxu0 0.0
    %291 = vmatpush2.msra.mxu0 0.0
    %292 = vmatprep.mubr.f32.mxu0 0.0
    %293 = vmatmul.mubr.f32.gmra.mxu0 %v226
    %v294 = vpop.f32.mrf.mxu0
    %v295 = vadd.f32 0.0, %v294
    %v296 = vpop.f32.mrf.mxu0
    %297 = vdwg.mxu0
    %v298 = vmul.f32 %v295, 0.0019569471
    %v299 = vrsqrt.pop %v298
    %v300 = vmul.f32 %v298, %v299
    %vm301 = vcmp.eq.f32.partialorder %v298, inf
    %v302 = vsel %vm301, %v298, %v300
    %vm303 = vcmp.eq.f32.partialorder %v298, 0.0
    %v304 = vand.u32 %v298, 2147483648
    %v305 = vsel %vm303, %v304, %v302
    %v306 = vadd.f32 %v305, 1e-15
    %v307 = vrcp.pop %v306
    %v308 = vlaneseq
    %v309 = vshrl.u32 %v308, 7
    %v310 = vsub.s32 0, %v309
    %v311 = vrot.slane %v307, %v310
    %v312 = vmul.f32 %v188, %v311
    %v313 = vmul.f32 %v189, %v311
    %v314 = vmul.f32 %v190, %v311
    %v315 = vmul.f32 %v191, %v311
    %v316 = vmul.f32 %v192, %v311
    %v317 = vmul.f32 %v193, %v311
    %v318 = vmul.f32 %v194, %v311
    %v319 = vmul.f32 %v195, %v311
    %v321 = vsel %vm88, %v312, 0
    %v324 = vsel %vm88, %v313, 0
    %v327 = vsel %vm88, %v314, 0
    %v330 = vsel %vm88, %v315, 0
    %v333 = vsel %vm88, %v316, 0
    %v336 = vsel %vm88, %v317, 0
    %v339 = vsel %vm88, %v318, 0
    %v342 = vsel %vm88, %v319, 0
    %344 = vmatprep.subr.mxu0 0.0
    %345 = vmatpush1.msra.mxu0 0.0
    %346 = vmatprep.subr.mxu0 0.0
    %347 = vmatpush1.msra.mxu0 0.0
    %348 = vmatprep.subr.mxu0 0.0
    %349 = vmatpush1.msra.mxu0 0.0
    %350 = vmatprep.subr.mxu0 0.0
    %351 = vmatpush1.msra.mxu0 0.0
    %352 = vmatprep.subr.mxu0 0.0
    %353 = vmatpush1.msra.mxu0 0.0
    %354 = vmatprep.subr.mxu0 0.0
    %355 = vmatpush1.msra.mxu0 0.0
    %356 = vmatprep.subr.mxu0 0.0
    %357 = vmatpush1.msra.mxu0 0.0
    %358 = vmatprep.subr.mxu0 0.0
    %359 = vmatpush1.msra.mxu0 0.0
    %360 = vmatprep.subr.mxu0 0.0
    %361 = vmatpush1.msra.mxu0 0.0
    %362 = vmatprep.subr.mxu0 0.0
    %363 = vmatpush1.msra.mxu0 0.0
    %364 = vmatprep.subr.mxu0 0.0
    %365 = vmatpush1.msra.mxu0 0.0
    %366 = vmatprep.subr.mxu0 0.0
    %367 = vmatpush1.msra.mxu0 0.0
    %368 = vmatprep.subr.mxu0 %v61
    %369 = vmatpush1.msra.mxu0 %v60
    %370 = vmatprep.subr.mxu0 %v56
    %371 = vmatpush1.msra.mxu0 %v55
    %372 = vmatprep.subr.mxu0 %v51
    %373 = vmatpush1.msra.mxu0 %v50
    %374 = vmatprep.subr.mxu0 %v46
    %375 = vmatpush1.msra.mxu0 %v45
    %376 = vmatprep.subr.mxu0 0.0
    %377 = vmatpush2.msra.mxu0 0.0
    %378 = vmatprep.subr.mxu0 0.0
    %379 = vmatpush2.msra.mxu0 0.0
    %380 = vmatprep.subr.mxu0 0.0
    %381 = vmatpush2.msra.mxu0 0.0
    %382 = vmatprep.subr.mxu0 0.0
    %383 = vmatpush2.msra.mxu0 0.0
    %384 = vmatprep.subr.mxu0 0.0
    %385 = vmatpush2.msra.mxu0 0.0
    %386 = vmatprep.subr.mxu0 0.0
    %387 = vmatpush2.msra.mxu0 0.0
    %388 = vmatprep.subr.mxu0 0.0
    %389 = vmatpush2.msra.mxu0 0.0
    %390 = vmatprep.subr.mxu0 0.0
    %391 = vmatpush2.msra.mxu0 0.0
    %392 = vmatprep.subr.mxu0 0.0
    %393 = vmatpush2.msra.mxu0 0.0
    %394 = vmatprep.subr.mxu0 0.0
    %395 = vmatpush2.msra.mxu0 0.0
    %396 = vmatprep.subr.mxu0 0.0
    %397 = vmatpush2.msra.mxu0 0.0
    %398 = vmatprep.subr.mxu0 0.0
    %399 = vmatpush2.msra.mxu0 0.0
    %400 = vmatprep.subr.mxu0 0.0
    %401 = vmatpush2.msra.mxu0 0.0
    %402 = vmatprep.subr.mxu0 0.0
    %403 = vmatpush2.msra.mxu0 0.0
    %404 = vmatprep.subr.mxu0 0.0
    %405 = vmatpush2.msra.mxu0 0.0
    %406 = vmatprep.subr.mxu0 0.0
    %407 = vmatpush2.msra.mxu0 0.0
    %408 = vmatprep.mubr.f32.mxu0 0.0
    %409 = vmatmul.mubr.f32.gmra.mxu0 %v321
    %v410 = vpop.f32.mrf.mxu0
    %v411 = vadd.f32 0.0, %v410
    %v412 = vpop.f32.mrf.mxu0
    %v413 = vadd.f32 0.0, %v412
    %414 = vmatprep.mubr.f32.mxu0 0.0
    %415 = vmatmul.mubr.f32.gmra.mxu0 %v324
    %v416 = vpop.f32.mrf.mxu0
    %v417 = vadd.f32 0.0, %v416
    %v418 = vpop.f32.mrf.mxu0
    %v419 = vadd.f32 0.0, %v418
    %420 = vmatprep.mubr.f32.mxu0 0.0
    %421 = vmatmul.mubr.f32.gmra.mxu0 %v327
    %v422 = vpop.f32.mrf.mxu0
    %v423 = vadd.f32 0.0, %v422
    %v424 = vpop.f32.mrf.mxu0
    %v425 = vadd.f32 0.0, %v424
    %426 = vmatprep.mubr.f32.mxu0 0.0
    %427 = vmatmul.mubr.f32.gmra.mxu0 %v330
    %v428 = vpop.f32.mrf.mxu0
    %v429 = vadd.f32 0.0, %v428
    %v430 = vpop.f32.mrf.mxu0
    %v431 = vadd.f32 0.0, %v430
    %432 = vmatprep.mubr.f32.mxu0 0.0
    %433 = vmatmul.mubr.f32.gmra.mxu0 %v333
    %v434 = vpop.f32.mrf.mxu0
    %v435 = vadd.f32 0.0, %v434
    %v436 = vpop.f32.mrf.mxu0
    %v437 = vadd.f32 0.0, %v436
    %438 = vmatprep.mubr.f32.mxu0 0.0
    %439 = vmatmul.mubr.f32.gmra.mxu0 %v336
    %v440 = vpop.f32.mrf.mxu0
    %v441 = vadd.f32 0.0, %v440
    %v442 = vpop.f32.mrf.mxu0
    %v443 = vadd.f32 0.0, %v442
    %444 = vmatprep.mubr.f32.mxu0 0.0
    %445 = vmatmul.mubr.f32.gmra.mxu0 %v339
    %v446 = vpop.f32.mrf.mxu0
    %v447 = vadd.f32 0.0, %v446
    %v448 = vpop.f32.mrf.mxu0
    %v449 = vadd.f32 0.0, %v448
    %450 = vmatprep.mubr.f32.mxu0 0.0
    %451 = vmatmul.mubr.f32.gmra.mxu0 %v342
    %v452 = vpop.f32.mrf.mxu0
    %v453 = vadd.f32 0.0, %v452
    %v454 = vpop.f32.mrf.mxu0
    %v455 = vadd.f32 0.0, %v454
    %456 = vdwg.mxu0
    %457 = vmatprep.subr.mxu0 0.0
    %458 = vmatpush1.msra.mxu0 0.0
    %459 = vmatprep.subr.mxu0 0.0
    %460 = vmatpush1.msra.mxu0 0.0
    %461 = vmatprep.subr.mxu0 0.0
    %462 = vmatpush1.msra.mxu0 0.0
    %463 = vmatprep.subr.mxu0 0.0
    %464 = vmatpush1.msra.mxu0 0.0
    %465 = vmatprep.subr.mxu0 0.0
    %466 = vmatpush1.msra.mxu0 0.0
    %467 = vmatprep.subr.mxu0 0.0
    %468 = vmatpush1.msra.mxu0 0.0
    %469 = vmatprep.subr.mxu0 0.0
    %470 = vmatpush1.msra.mxu0 0.0
    %471 = vmatprep.subr.mxu0 0.0
    %472 = vmatpush1.msra.mxu0 0.0
    %473 = vmatprep.subr.mxu0 0.0
    %474 = vmatpush1.msra.mxu0 0.0
    %475 = vmatprep.subr.mxu0 0.0
    %476 = vmatpush1.msra.mxu0 0.0
    %477 = vmatprep.subr.mxu0 0.0
    %478 = vmatpush1.msra.mxu0 0.0
    %479 = vmatprep.subr.mxu0 0.0
    %480 = vmatpush1.msra.mxu0 0.0
    %481 = vmatprep.subr.mxu0 %v63
    %482 = vmatpush1.msra.mxu0 %v62
    %483 = vmatprep.subr.mxu0 %v58
    %484 = vmatpush1.msra.mxu0 %v57
    %485 = vmatprep.subr.mxu0 %v53
    %486 = vmatpush1.msra.mxu0 %v52
    %487 = vmatprep.subr.mxu0 %v48
    %488 = vmatpush1.msra.mxu0 %v47
    %489 = vmatprep.subr.mxu0 0.0
    %490 = vmatpush2.msra.mxu0 0.0
    %491 = vmatprep.subr.mxu0 0.0
    %492 = vmatpush2.msra.mxu0 0.0
    %493 = vmatprep.subr.mxu0 0.0
    %494 = vmatpush2.msra.mxu0 0.0
    %495 = vmatprep.subr.mxu0 0.0
    %496 = vmatpush2.msra.mxu0 0.0
    %497 = vmatprep.subr.mxu0 0.0
    %498 = vmatpush2.msra.mxu0 0.0
    %499 = vmatprep.subr.mxu0 0.0
    %500 = vmatpush2.msra.mxu0 0.0
    %501 = vmatprep.subr.mxu0 0.0
    %502 = vmatpush2.msra.mxu0 0.0
    %503 = vmatprep.subr.mxu0 0.0
    %504 = vmatpush2.msra.mxu0 0.0
    %505 = vmatprep.subr.mxu0 0.0
    %506 = vmatpush2.msra.mxu0 0.0
    %507 = vmatprep.subr.mxu0 0.0
    %508 = vmatpush2.msra.mxu0 0.0
    %509 = vmatprep.subr.mxu0 0.0
    %510 = vmatpush2.msra.mxu0 0.0
    %511 = vmatprep.subr.mxu0 0.0
    %512 = vmatpush2.msra.mxu0 0.0
    %513 = vmatprep.subr.mxu0 0.0
    %514 = vmatpush2.msra.mxu0 0.0
    %515 = vmatprep.subr.mxu0 0.0
    %516 = vmatpush2.msra.mxu0 0.0
    %517 = vmatprep.subr.mxu0 0.0
    %518 = vmatpush2.msra.mxu0 0.0
    %519 = vmatprep.subr.mxu0 0.0
    %520 = vmatpush2.msra.mxu0 0.0
    %521 = vmatprep.mubr.f32.mxu0 0.0
    %522 = vmatmul.mubr.f32.gmra.mxu0 %v321
    %v523 = vpop.f32.mrf.mxu0
    %v524 = vadd.f32 0.0, %v523
    %v525 = vpop.f32.mrf.mxu0
    %v526 = vadd.f32 0.0, %v525
    %527 = vmatprep.mubr.f32.mxu0 0.0
    %528 = vmatmul.mubr.f32.gmra.mxu0 %v324
    %v529 = vpop.f32.mrf.mxu0
    %v530 = vadd.f32 0.0, %v529
    %v531 = vpop.f32.mrf.mxu0
    %v532 = vadd.f32 0.0, %v531
    %533 = vmatprep.mubr.f32.mxu0 0.0
    %534 = vmatmul.mubr.f32.gmra.mxu0 %v327
    %v535 = vpop.f32.mrf.mxu0
    %v536 = vadd.f32 0.0, %v535
    %v537 = vpop.f32.mrf.mxu0
    %v538 = vadd.f32 0.0, %v537
    %539 = vmatprep.mubr.f32.mxu0 0.0
    %540 = vmatmul.mubr.f32.gmra.mxu0 %v330
    %v541 = vpop.f32.mrf.mxu0
    %v542 = vadd.f32 0.0, %v541
    %v543 = vpop.f32.mrf.mxu0
    %v544 = vadd.f32 0.0, %v543
    %545 = vmatprep.mubr.f32.mxu0 0.0
    %546 = vmatmul.mubr.f32.gmra.mxu0 %v333
    %v547 = vpop.f32.mrf.mxu0
    %v548 = vadd.f32 0.0, %v547
    %v549 = vpop.f32.mrf.mxu0
    %v550 = vadd.f32 0.0, %v549
    %551 = vmatprep.mubr.f32.mxu0 0.0
    %552 = vmatmul.mubr.f32.gmra.mxu0 %v336
    %v553 = vpop.f32.mrf.mxu0
    %v554 = vadd.f32 0.0, %v553
    %v555 = vpop.f32.mrf.mxu0
    %v556 = vadd.f32 0.0, %v555
    %557 = vmatprep.mubr.f32.mxu0 0.0
    %558 = vmatmul.mubr.f32.gmra.mxu0 %v339
    %v559 = vpop.f32.mrf.mxu0
    %v560 = vadd.f32 0.0, %v559
    %v561 = vpop.f32.mrf.mxu0
    %v562 = vadd.f32 0.0, %v561
    %563 = vmatprep.mubr.f32.mxu0 0.0
    %564 = vmatmul.mubr.f32.gmra.mxu0 %v342
    %v565 = vpop.f32.mrf.mxu0
    %v566 = vadd.f32 0.0, %v565
    %v567 = vpop.f32.mrf.mxu0
    %v568 = vadd.f32 0.0, %v567
    %569 = vdwg.mxu0
    %570 = vmatprep.subr.mxu0 0.0
    %571 = vmatpush1.msra.mxu0 0.0
    %572 = vmatprep.subr.mxu0 0.0
    %573 = vmatpush1.msra.mxu0 0.0
    %574 = vmatprep.subr.mxu0 0.0
    %575 = vmatpush1.msra.mxu0 0.0
    %576 = vmatprep.subr.mxu0 0.0
    %577 = vmatpush1.msra.mxu0 0.0
    %578 = vmatprep.subr.mxu0 0.0
    %579 = vmatpush1.msra.mxu0 0.0
    %580 = vmatprep.subr.mxu0 0.0
    %581 = vmatpush1.msra.mxu0 0.0
    %582 = vmatprep.subr.mxu0 0.0
    %583 = vmatpush1.msra.mxu0 0.0
    %584 = vmatprep.subr.mxu0 0.0
    %585 = vmatpush1.msra.mxu0 0.0
    %586 = vmatprep.subr.mxu0 0.0
    %587 = vmatpush1.msra.mxu0 0.0
    %588 = vmatprep.subr.mxu0 0.0
    %589 = vmatpush1.msra.mxu0 0.0
    %590 = vmatprep.subr.mxu0 0.0
    %591 = vmatpush1.msra.mxu0 0.0
    %592 = vmatprep.subr.mxu0 0.0
    %593 = vmatpush1.msra.mxu0 0.0
    %594 = vmatprep.subr.mxu0 0.0
    %595 = vmatpush1.msra.mxu0 %v64
    %596 = vmatprep.subr.mxu0 0.0
    %597 = vmatpush1.msra.mxu0 %v59
    %598 = vmatprep.subr.mxu0 0.0
    %599 = vmatpush1.msra.mxu0 %v54
    %600 = vmatprep.subr.mxu0 0.0
    %601 = vmatpush1.msra.mxu0 %v49
    %602 = vmatprep.subr.mxu0 0.0
    %603 = vmatpush2.msra.mxu0 0.0
    %604 = vmatprep.subr.mxu0 0.0
    %605 = vmatpush2.msra.mxu0 0.0
    %606 = vmatprep.subr.mxu0 0.0
    %607 = vmatpush2.msra.mxu0 0.0
    %608 = vmatprep.subr.mxu0 0.0
    %609 = vmatpush2.msra.mxu0 0.0
    %610 = vmatprep.subr.mxu0 0.0
    %611 = vmatpush2.msra.mxu0 0.0
    %612 = vmatprep.subr.mxu0 0.0
    %613 = vmatpush2.msra.mxu0 0.0
    %614 = vmatprep.subr.mxu0 0.0
    %615 = vmatpush2.msra.mxu0 0.0
    %616 = vmatprep.subr.mxu0 0.0
    %617 = vmatpush2.msra.mxu0 0.0
    %618 = vmatprep.subr.mxu0 0.0
    %619 = vmatpush2.msra.mxu0 0.0
    %620 = vmatprep.subr.mxu0 0.0
    %621 = vmatpush2.msra.mxu0 0.0
    %622 = vmatprep.subr.mxu0 0.0
    %623 = vmatpush2.msra.mxu0 0.0
    %624 = vmatprep.subr.mxu0 0.0
    %625 = vmatpush2.msra.mxu0 0.0
    %626 = vmatprep.subr.mxu0 0.0
    %627 = vmatpush2.msra.mxu0 0.0
    %628 = vmatprep.subr.mxu0 0.0
    %629 = vmatpush2.msra.mxu0 0.0
    %630 = vmatprep.subr.mxu0 0.0
    %631 = vmatpush2.msra.mxu0 0.0
    %632 = vmatprep.subr.mxu0 0.0
    %633 = vmatpush2.msra.mxu0 0.0
    %634 = vmatprep.mubr.f32.mxu0 0.0
    %635 = vmatmul.mubr.f32.gmra.mxu0 %v321
    %v636 = vpop.f32.mrf.mxu0
    %v637 = vadd.f32 0.0, %v636
    %v638 = vpop.f32.mrf.mxu0
    %639 = vmatprep.mubr.f32.mxu0 0.0
    %640 = vmatmul.mubr.f32.gmra.mxu0 %v324
    %v641 = vpop.f32.mrf.mxu0
    %v642 = vadd.f32 0.0, %v641
    %v643 = vpop.f32.mrf.mxu0
    %644 = vmatprep.mubr.f32.mxu0 0.0
    %645 = vmatmul.mubr.f32.gmra.mxu0 %v327
    %v646 = vpop.f32.mrf.mxu0
    %v647 = vadd.f32 0.0, %v646
    %v648 = vpop.f32.mrf.mxu0
    %649 = vmatprep.mubr.f32.mxu0 0.0
    %650 = vmatmul.mubr.f32.gmra.mxu0 %v330
    %v651 = vpop.f32.mrf.mxu0
    %v652 = vadd.f32 0.0, %v651
    %v653 = vpop.f32.mrf.mxu0
    %654 = vmatprep.mubr.f32.mxu0 0.0
    %655 = vmatmul.mubr.f32.gmra.mxu0 %v333
    %v656 = vpop.f32.mrf.mxu0
    %v657 = vadd.f32 0.0, %v656
    %v658 = vpop.f32.mrf.mxu0
    %659 = vmatprep.mubr.f32.mxu0 0.0
    %660 = vmatmul.mubr.f32.gmra.mxu0 %v336
    %v661 = vpop.f32.mrf.mxu0
    %v662 = vadd.f32 0.0, %v661
    %v663 = vpop.f32.mrf.mxu0
    %664 = vmatprep.mubr.f32.mxu0 0.0
    %665 = vmatmul.mubr.f32.gmra.mxu0 %v339
    %v666 = vpop.f32.mrf.mxu0
    %v667 = vadd.f32 0.0, %v666
    %v668 = vpop.f32.mrf.mxu0
    %669 = vmatprep.mubr.f32.mxu0 0.0
    %670 = vmatmul.mubr.f32.gmra.mxu0 %v342
    %v671 = vpop.f32.mrf.mxu0
    %v672 = vadd.f32 0.0, %v671
    %v673 = vpop.f32.mrf.mxu0
    %674 = vdwg.mxu0
    %vm675 = vcmask 523264
    %v677 = vsel %vm675, %v27, 0
    %v680 = vsel %vm675, %v28, 0
    %v683 = vsel %vm675, %v29, 0
    %v686 = vsel %vm675, %v30, 0
    %v689 = vsel %vm675, %v31, 0
    %v692 = vsel %vm675, %v32, 0
    %v695 = vsel %vm675, %v33, 0
    %v698 = vsel %vm675, %v34, 0
    %v701 = vsel %vm675, %v35, 0
    %v704 = vsel %vm675, %v36, 0
    %v707 = vsel %vm675, %v37, 0
    %v710 = vsel %vm675, %v38, 0
    %v713 = vsel %vm675, %v39, 0
    %v716 = vsel %vm675, %v40, 0
    %718 = vmatprep.subr.mxu0 0.0
    %719 = vmatpush1.msra.mxu0 0.0
    %720 = vmatprep.subr.mxu0 0.0
    %721 = vmatpush1.msra.mxu0 0.0
    %722 = vmatprep.subr.mxu0 0.0
    %723 = vmatpush1.msra.mxu0 0.0
    %724 = vmatprep.subr.mxu0 0.0
    %725 = vmatpush1.msra.mxu0 0.0
    %726 = vmatprep.subr.mxu0 0.0
    %727 = vmatpush1.msra.mxu0 0.0
    %728 = vmatprep.subr.mxu0 0.0
    %729 = vmatpush1.msra.mxu0 0.0
    %730 = vmatprep.subr.mxu0 0.0
    %731 = vmatpush1.msra.mxu0 0.0
    %732 = vmatprep.subr.mxu0 0.0
    %733 = vmatpush1.msra.mxu0 0.0
    %734 = vmatprep.subr.mxu0 %v455
    %735 = vmatpush1.msra.mxu0 %v453
    %736 = vmatprep.subr.mxu0 %v449
    %737 = vmatpush1.msra.mxu0 %v447
    %738 = vmatprep.subr.mxu0 %v443
    %739 = vmatpush1.msra.mxu0 %v441
    %740 = vmatprep.subr.mxu0 %v437
    %741 = vmatpush1.msra.mxu0 %v435
    %742 = vmatprep.subr.mxu0 %v431
    %743 = vmatpush1.msra.mxu0 %v429
    %744 = vmatprep.subr.mxu0 %v425
    %745 = vmatpush1.msra.mxu0 %v423
    %746 = vmatprep.subr.mxu0 %v419
    %747 = vmatpush1.msra.mxu0 %v417
    %748 = vmatprep.subr.mxu0 %v413
    %749 = vmatpush1.msra.mxu0 %v411
    %750 = vmatprep.subr.mxu0 0.0
    %751 = vmatpush2.msra.mxu0 0.0
    %752 = vmatprep.subr.mxu0 0.0
    %753 = vmatpush2.msra.mxu0 0.0
    %754 = vmatprep.subr.mxu0 0.0
    %755 = vmatpush2.msra.mxu0 0.0
    %756 = vmatprep.subr.mxu0 0.0
    %757 = vmatpush2.msra.mxu0 0.0
    %758 = vmatprep.subr.mxu0 0.0
    %759 = vmatpush2.msra.mxu0 0.0
    %760 = vmatprep.subr.mxu0 0.0
    %761 = vmatpush2.msra.mxu0 0.0
    %762 = vmatprep.subr.mxu0 0.0
    %763 = vmatpush2.msra.mxu0 0.0
    %764 = vmatprep.subr.mxu0 0.0
    %765 = vmatpush2.msra.mxu0 0.0
    %766 = vmatprep.subr.mxu0 0.0
    %767 = vmatpush2.msra.mxu0 0.0
    %768 = vmatprep.subr.mxu0 0.0
    %769 = vmatpush2.msra.mxu0 0.0
    %770 = vmatprep.subr.mxu0 0.0
    %771 = vmatpush2.msra.mxu0 0.0
    %772 = vmatprep.subr.mxu0 0.0
    %773 = vmatpush2.msra.mxu0 0.0
    %774 = vmatprep.subr.mxu0 0.0
    %775 = vmatpush2.msra.mxu0 0.0
    %776 = vmatprep.subr.mxu0 0.0
    %777 = vmatpush2.msra.mxu0 0.0
    %778 = vmatprep.subr.mxu0 0.0
    %779 = vmatpush2.msra.mxu0 0.0
    %780 = vmatprep.subr.mxu0 0.0
    %781 = vmatpush2.msra.mxu0 0.0
    %782 = vmatprep.mubr.f32.mxu0 0.0
    %783 = vmatmul.mubr.f32.gmra.mxu0 %v677
    %v784 = vpop.f32.mrf.mxu0
    %v785 = vadd.f32 0.0, %v784
    %v786 = vpop.f32.mrf.mxu0
    %v787 = vadd.f32 0.0, %v786
    %788 = vmatprep.mubr.f32.mxu0 0.0
    %789 = vmatmul.mubr.f32.gmra.mxu0 %v680
    %v790 = vpop.f32.mrf.mxu0
    %v791 = vadd.f32 0.0, %v790
    %v792 = vpop.f32.mrf.mxu0
    %v793 = vadd.f32 0.0, %v792
    %794 = vmatprep.mubr.f32.mxu0 0.0
    %795 = vmatmul.mubr.f32.gmra.mxu0 %v683
    %v796 = vpop.f32.mrf.mxu0
    %v797 = vadd.f32 0.0, %v796
    %v798 = vpop.f32.mrf.mxu0
    %v799 = vadd.f32 0.0, %v798
    %800 = vmatprep.mubr.f32.mxu0 0.0
    %801 = vmatmul.mubr.f32.gmra.mxu0 %v686
    %v802 = vpop.f32.mrf.mxu0
    %v803 = vadd.f32 0.0, %v802
    %v804 = vpop.f32.mrf.mxu0
    %v805 = vadd.f32 0.0, %v804
    %806 = vmatprep.mubr.f32.mxu0 0.0
    %807 = vmatmul.mubr.f32.gmra.mxu0 %v689
    %v808 = vpop.f32.mrf.mxu0
    %v809 = vadd.f32 0.0, %v808
    %v810 = vpop.f32.mrf.mxu0
    %v811 = vadd.f32 0.0, %v810
    %812 = vmatprep.mubr.f32.mxu0 0.0
    %813 = vmatmul.mubr.f32.gmra.mxu0 %v692
    %v814 = vpop.f32.mrf.mxu0
    %v815 = vadd.f32 0.0, %v814
    %v816 = vpop.f32.mrf.mxu0
    %v817 = vadd.f32 0.0, %v816
    %818 = vmatprep.mubr.f32.mxu0 0.0
    %819 = vmatmul.mubr.f32.gmra.mxu0 %v695
    %v820 = vpop.f32.mrf.mxu0
    %v821 = vadd.f32 0.0, %v820
    %v822 = vpop.f32.mrf.mxu0
    %v823 = vadd.f32 0.0, %v822
    %824 = vmatprep.mubr.f32.mxu0 0.0
    %825 = vmatmul.mubr.f32.gmra.mxu0 %v698
    %v826 = vpop.f32.mrf.mxu0
    %v827 = vadd.f32 0.0, %v826
    %v828 = vpop.f32.mrf.mxu0
    %v829 = vadd.f32 0.0, %v828
    %830 = vmatprep.mubr.f32.mxu0 0.0
    %831 = vmatmul.mubr.f32.gmra.mxu0 %v701
    %v832 = vpop.f32.mrf.mxu0
    %v833 = vadd.f32 0.0, %v832
    %v834 = vpop.f32.mrf.mxu0
    %v835 = vadd.f32 0.0, %v834
    %836 = vmatprep.mubr.f32.mxu0 0.0
    %837 = vmatmul.mubr.f32.gmra.mxu0 %v704
    %v838 = vpop.f32.mrf.mxu0
    %v839 = vadd.f32 0.0, %v838
    %v840 = vpop.f32.mrf.mxu0
    %v841 = vadd.f32 0.0, %v840
    %842 = vmatprep.mubr.f32.mxu0 0.0
    %843 = vmatmul.mubr.f32.gmra.mxu0 %v707
    %v844 = vpop.f32.mrf.mxu0
    %v845 = vadd.f32 0.0, %v844
    %v846 = vpop.f32.mrf.mxu0
    %v847 = vadd.f32 0.0, %v846
    %848 = vmatprep.mubr.f32.mxu0 0.0
    %849 = vmatmul.mubr.f32.gmra.mxu0 %v710
    %v850 = vpop.f32.mrf.mxu0
    %v851 = vadd.f32 0.0, %v850
    %v852 = vpop.f32.mrf.mxu0
    %v853 = vadd.f32 0.0, %v852
    %854 = vmatprep.mubr.f32.mxu0 0.0
    %855 = vmatmul.mubr.f32.gmra.mxu0 %v713
    %v856 = vpop.f32.mrf.mxu0
    %v857 = vadd.f32 0.0, %v856
    %v858 = vpop.f32.mrf.mxu0
    %v859 = vadd.f32 0.0, %v858
    %860 = vmatprep.mubr.f32.mxu0 0.0
    %861 = vmatmul.mubr.f32.gmra.mxu0 %v716
    %v862 = vpop.f32.mrf.mxu0
    %v863 = vadd.f32 0.0, %v862
    %v864 = vpop.f32.mrf.mxu0
    %v865 = vadd.f32 0.0, %v864
    %866 = vdwg.mxu0
    %867 = vmatprep.subr.mxu0 0.0
    %868 = vmatpush1.msra.mxu0 0.0
    %869 = vmatprep.subr.mxu0 0.0
    %870 = vmatpush1.msra.mxu0 0.0
    %871 = vmatprep.subr.mxu0 0.0
    %872 = vmatpush1.msra.mxu0 0.0
    %873 = vmatprep.subr.mxu0 0.0
    %874 = vmatpush1.msra.mxu0 0.0
    %875 = vmatprep.subr.mxu0 0.0
    %876 = vmatpush1.msra.mxu0 0.0
    %877 = vmatprep.subr.mxu0 0.0
    %878 = vmatpush1.msra.mxu0 0.0
    %879 = vmatprep.subr.mxu0 0.0
    %880 = vmatpush1.msra.mxu0 0.0
    %881 = vmatprep.subr.mxu0 0.0
    %882 = vmatpush1.msra.mxu0 0.0
    %883 = vmatprep.subr.mxu0 %v568
    %884 = vmatpush1.msra.mxu0 %v566
    %885 = vmatprep.subr.mxu0 %v562
    %886 = vmatpush1.msra.mxu0 %v560
    %887 = vmatprep.subr.mxu0 %v556
    %888 = vmatpush1.msra.mxu0 %v554
    %889 = vmatprep.subr.mxu0 %v550
    %890 = vmatpush1.msra.mxu0 %v548
    %891 = vmatprep.subr.mxu0 %v544
    %892 = vmatpush1.msra.mxu0 %v542
    %893 = vmatprep.subr.mxu0 %v538
    %894 = vmatpush1.msra.mxu0 %v536
    %895 = vmatprep.subr.mxu0 %v532
    %896 = vmatpush1.msra.mxu0 %v530
    %897 = vmatprep.subr.mxu0 %v526
    %898 = vmatpush1.msra.mxu0 %v524
    %899 = vmatprep.subr.mxu0 0.0
    %900 = vmatpush2.msra.mxu0 0.0
    %901 = vmatprep.subr.mxu0 0.0
    %902 = vmatpush2.msra.mxu0 0.0
    %903 = vmatprep.subr.mxu0 0.0
    %904 = vmatpush2.msra.mxu0 0.0
    %905 = vmatprep.subr.mxu0 0.0
    %906 = vmatpush2.msra.mxu0 0.0
    %907 = vmatprep.subr.mxu0 0.0
    %908 = vmatpush2.msra.mxu0 0.0
    %909 = vmatprep.subr.mxu0 0.0
    %910 = vmatpush2.msra.mxu0 0.0
    %911 = vmatprep.subr.mxu0 0.0
    %912 = vmatpush2.msra.mxu0 0.0
    %913 = vmatprep.subr.mxu0 0.0
    %914 = vmatpush2.msra.mxu0 0.0
    %915 = vmatprep.subr.mxu0 0.0
    %916 = vmatpush2.msra.mxu0 0.0
    %917 = vmatprep.subr.mxu0 0.0
    %918 = vmatpush2.msra.mxu0 0.0
    %919 = vmatprep.subr.mxu0 0.0
    %920 = vmatpush2.msra.mxu0 0.0
    %921 = vmatprep.subr.mxu0 0.0
    %922 = vmatpush2.msra.mxu0 0.0
    %923 = vmatprep.subr.mxu0 0.0
    %924 = vmatpush2.msra.mxu0 0.0
    %925 = vmatprep.subr.mxu0 0.0
    %926 = vmatpush2.msra.mxu0 0.0
    %927 = vmatprep.subr.mxu0 0.0
    %928 = vmatpush2.msra.mxu0 0.0
    %929 = vmatprep.subr.mxu0 0.0
    %930 = vmatpush2.msra.mxu0 0.0
    %931 = vmatprep.mubr.f32.mxu0 0.0
    %932 = vmatmul.mubr.f32.gmra.mxu0 %v677
    %v933 = vpop.f32.mrf.mxu0
    %v934 = vadd.f32 0.0, %v933
    %v935 = vpop.f32.mrf.mxu0
    %v936 = vadd.f32 0.0, %v935
    %937 = vmatprep.mubr.f32.mxu0 0.0
    %938 = vmatmul.mubr.f32.gmra.mxu0 %v680
    %v939 = vpop.f32.mrf.mxu0
    %v940 = vadd.f32 0.0, %v939
    %v941 = vpop.f32.mrf.mxu0
    %v942 = vadd.f32 0.0, %v941
    %943 = vmatprep.mubr.f32.mxu0 0.0
    %944 = vmatmul.mubr.f32.gmra.mxu0 %v683
    %v945 = vpop.f32.mrf.mxu0
    %v946 = vadd.f32 0.0, %v945
    %v947 = vpop.f32.mrf.mxu0
    %v948 = vadd.f32 0.0, %v947
    %949 = vmatprep.mubr.f32.mxu0 0.0
    %950 = vmatmul.mubr.f32.gmra.mxu0 %v686
    %v951 = vpop.f32.mrf.mxu0
    %v952 = vadd.f32 0.0, %v951
    %v953 = vpop.f32.mrf.mxu0
    %v954 = vadd.f32 0.0, %v953
    %955 = vmatprep.mubr.f32.mxu0 0.0
    %956 = vmatmul.mubr.f32.gmra.mxu0 %v689
    %v957 = vpop.f32.mrf.mxu0
    %v958 = vadd.f32 0.0, %v957
    %v959 = vpop.f32.mrf.mxu0
    %v960 = vadd.f32 0.0, %v959
    %961 = vmatprep.mubr.f32.mxu0 0.0
    %962 = vmatmul.mubr.f32.gmra.mxu0 %v692
    %v963 = vpop.f32.mrf.mxu0
    %v964 = vadd.f32 0.0, %v963
    %v965 = vpop.f32.mrf.mxu0
    %v966 = vadd.f32 0.0, %v965
    %967 = vmatprep.mubr.f32.mxu0 0.0
    %968 = vmatmul.mubr.f32.gmra.mxu0 %v695
    %v969 = vpop.f32.mrf.mxu0
    %v970 = vadd.f32 0.0, %v969
    %v971 = vpop.f32.mrf.mxu0
    %v972 = vadd.f32 0.0, %v971
    %973 = vmatprep.mubr.f32.mxu0 0.0
    %974 = vmatmul.mubr.f32.gmra.mxu0 %v698
    %v975 = vpop.f32.mrf.mxu0
    %v976 = vadd.f32 0.0, %v975
    %v977 = vpop.f32.mrf.mxu0
    %v978 = vadd.f32 0.0, %v977
    %979 = vmatprep.mubr.f32.mxu0 0.0
    %980 = vmatmul.mubr.f32.gmra.mxu0 %v701
    %v981 = vpop.f32.mrf.mxu0
    %v982 = vadd.f32 0.0, %v981
    %v983 = vpop.f32.mrf.mxu0
    %v984 = vadd.f32 0.0, %v983
    %985 = vmatprep.mubr.f32.mxu0 0.0
    %986 = vmatmul.mubr.f32.gmra.mxu0 %v704
    %v987 = vpop.f32.mrf.mxu0
    %v988 = vadd.f32 0.0, %v987
    %v989 = vpop.f32.mrf.mxu0
    %v990 = vadd.f32 0.0, %v989
    %991 = vmatprep.mubr.f32.mxu0 0.0
    %992 = vmatmul.mubr.f32.gmra.mxu0 %v707
    %v993 = vpop.f32.mrf.mxu0
    %v994 = vadd.f32 0.0, %v993
    %v995 = vpop.f32.mrf.mxu0
    %v996 = vadd.f32 0.0, %v995
    %997 = vmatprep.mubr.f32.mxu0 0.0
    %998 = vmatmul.mubr.f32.gmra.mxu0 %v710
    %v999 = vpop.f32.mrf.mxu0
    %v1000 = vadd.f32 0.0, %v999
    %v1001 = vpop.f32.mrf.mxu0
    %v1002 = vadd.f32 0.0, %v1001
    %1003 = vmatprep.mubr.f32.mxu0 0.0
    %1004 = vmatmul.mubr.f32.gmra.mxu0 %v713
    %v1005 = vpop.f32.mrf.mxu0
    %v1006 = vadd.f32 0.0, %v1005
    %v1007 = vpop.f32.mrf.mxu0
    %v1008 = vadd.f32 0.0, %v1007
    %1009 = vmatprep.mubr.f32.mxu0 0.0
    %1010 = vmatmul.mubr.f32.gmra.mxu0 %v716
    %v1011 = vpop.f32.mrf.mxu0
    %v1012 = vadd.f32 0.0, %v1011
    %v1013 = vpop.f32.mrf.mxu0
    %v1014 = vadd.f32 0.0, %v1013
    %1015 = vdwg.mxu0
    %1016 = vmatprep.subr.mxu0 0.0
    %1017 = vmatpush1.msra.mxu0 0.0
    %1018 = vmatprep.subr.mxu0 0.0
    %1019 = vmatpush1.msra.mxu0 0.0
    %1020 = vmatprep.subr.mxu0 0.0
    %1021 = vmatpush1.msra.mxu0 0.0
    %1022 = vmatprep.subr.mxu0 0.0
    %1023 = vmatpush1.msra.mxu0 0.0
    %1024 = vmatprep.subr.mxu0 0.0
    %1025 = vmatpush1.msra.mxu0 0.0
    %1026 = vmatprep.subr.mxu0 0.0
    %1027 = vmatpush1.msra.mxu0 0.0
    %1028 = vmatprep.subr.mxu0 0.0
    %1029 = vmatpush1.msra.mxu0 0.0
    %1030 = vmatprep.subr.mxu0 0.0
    %1031 = vmatpush1.msra.mxu0 0.0
    %1032 = vmatprep.subr.mxu0 0.0
    %1033 = vmatpush1.msra.mxu0 %v672
    %1034 = vmatprep.subr.mxu0 0.0
    %1035 = vmatpush1.msra.mxu0 %v667
    %1036 = vmatprep.subr.mxu0 0.0
    %1037 = vmatpush1.msra.mxu0 %v662
    %1038 = vmatprep.subr.mxu0 0.0
    %1039 = vmatpush1.msra.mxu0 %v657
    %1040 = vmatprep.subr.mxu0 0.0
    %1041 = vmatpush1.msra.mxu0 %v652
    %1042 = vmatprep.subr.mxu0 0.0
    %1043 = vmatpush1.msra.mxu0 %v647
    %1044 = vmatprep.subr.mxu0 0.0
    %1045 = vmatpush1.msra.mxu0 %v642
    %1046 = vmatprep.subr.mxu0 0.0
    %1047 = vmatpush1.msra.mxu0 %v637
    %1048 = vmatprep.subr.mxu0 0.0
    %1049 = vmatpush2.msra.mxu0 0.0
    %1050 = vmatprep.subr.mxu0 0.0
    %1051 = vmatpush2.msra.mxu0 0.0
    %1052 = vmatprep.subr.mxu0 0.0
    %1053 = vmatpush2.msra.mxu0 0.0
    %1054 = vmatprep.subr.mxu0 0.0
    %1055 = vmatpush2.msra.mxu0 0.0
    %1056 = vmatprep.subr.mxu0 0.0
    %1057 = vmatpush2.msra.mxu0 0.0
    %1058 = vmatprep.subr.mxu0 0.0
    %1059 = vmatpush2.msra.mxu0 0.0
    %1060 = vmatprep.subr.mxu0 0.0
    %1061 = vmatpush2.msra.mxu0 0.0
    %1062 = vmatprep.subr.mxu0 0.0
    %1063 = vmatpush2.msra.mxu0 0.0
    %1064 = vmatprep.subr.mxu0 0.0
    %1065 = vmatpush2.msra.mxu0 0.0
    %1066 = vmatprep.subr.mxu0 0.0
    %1067 = vmatpush2.msra.mxu0 0.0
    %1068 = vmatprep.subr.mxu0 0.0
    %1069 = vmatpush2.msra.mxu0 0.0
    %1070 = vmatprep.subr.mxu0 0.0
    %1071 = vmatpush2.msra.mxu0 0.0
    %1072 = vmatprep.subr.mxu0 0.0
    %1073 = vmatpush2.msra.mxu0 0.0
    %1074 = vmatprep.subr.mxu0 0.0
    %1075 = vmatpush2.msra.mxu0 0.0
    %1076 = vmatprep.subr.mxu0 0.0
    %1077 = vmatpush2.msra.mxu0 0.0
    %1078 = vmatprep.subr.mxu0 0.0
    %1079 = vmatpush2.msra.mxu0 0.0
    %1080 = vmatprep.mubr.f32.mxu0 0.0
    %1081 = vmatmul.mubr.f32.gmra.mxu0 %v677
    %v1082 = vpop.f32.mrf.mxu0
    %v1083 = vadd.f32 0.0, %v1082
    %v1084 = vpop.f32.mrf.mxu0
    %1085 = vmatprep.mubr.f32.mxu0 0.0
    %1086 = vmatmul.mubr.f32.gmra.mxu0 %v680
    %v1087 = vpop.f32.mrf.mxu0
    %v1088 = vadd.f32 0.0, %v1087
    %v1089 = vpop.f32.mrf.mxu0
    %1090 = vmatprep.mubr.f32.mxu0 0.0
    %1091 = vmatmul.mubr.f32.gmra.mxu0 %v683
    %v1092 = vpop.f32.mrf.mxu0
    %v1093 = vadd.f32 0.0, %v1092
    %v1094 = vpop.f32.mrf.mxu0
    %1095 = vmatprep.mubr.f32.mxu0 0.0
    %1096 = vmatmul.mubr.f32.gmra.mxu0 %v686
    %v1097 = vpop.f32.mrf.mxu0
    %v1098 = vadd.f32 0.0, %v1097
    %v1099 = vpop.f32.mrf.mxu0
    %1100 = vmatprep.mubr.f32.mxu0 0.0
    %1101 = vmatmul.mubr.f32.gmra.mxu0 %v689
    %v1102 = vpop.f32.mrf.mxu0
    %v1103 = vadd.f32 0.0, %v1102
    %v1104 = vpop.f32.mrf.mxu0
    %1105 = vmatprep.mubr.f32.mxu0 0.0
    %1106 = vmatmul.mubr.f32.gmra.mxu0 %v692
    %v1107 = vpop.f32.mrf.mxu0
    %v1108 = vadd.f32 0.0, %v1107
    %v1109 = vpop.f32.mrf.mxu0
    %1110 = vmatprep.mubr.f32.mxu0 0.0
    %1111 = vmatmul.mubr.f32.gmra.mxu0 %v695
    %v1112 = vpop.f32.mrf.mxu0
    %v1113 = vadd.f32 0.0, %v1112
    %v1114 = vpop.f32.mrf.mxu0
    %1115 = vmatprep.mubr.f32.mxu0 0.0
    %1116 = vmatmul.mubr.f32.gmra.mxu0 %v698
    %v1117 = vpop.f32.mrf.mxu0
    %v1118 = vadd.f32 0.0, %v1117
    %v1119 = vpop.f32.mrf.mxu0
    %1120 = vmatprep.mubr.f32.mxu0 0.0
    %1121 = vmatmul.mubr.f32.gmra.mxu0 %v701
    %v1122 = vpop.f32.mrf.mxu0
    %v1123 = vadd.f32 0.0, %v1122
    %v1124 = vpop.f32.mrf.mxu0
    %1125 = vmatprep.mubr.f32.mxu0 0.0
    %1126 = vmatmul.mubr.f32.gmra.mxu0 %v704
    %v1127 = vpop.f32.mrf.mxu0
    %v1128 = vadd.f32 0.0, %v1127
    %v1129 = vpop.f32.mrf.mxu0
    %1130 = vmatprep.mubr.f32.mxu0 0.0
    %1131 = vmatmul.mubr.f32.gmra.mxu0 %v707
    %v1132 = vpop.f32.mrf.mxu0
    %v1133 = vadd.f32 0.0, %v1132
    %v1134 = vpop.f32.mrf.mxu0
    %1135 = vmatprep.mubr.f32.mxu0 0.0
    %1136 = vmatmul.mubr.f32.gmra.mxu0 %v710
    %v1137 = vpop.f32.mrf.mxu0
    %v1138 = vadd.f32 0.0, %v1137
    %v1139 = vpop.f32.mrf.mxu0
    %1140 = vmatprep.mubr.f32.mxu0 0.0
    %1141 = vmatmul.mubr.f32.gmra.mxu0 %v713
    %v1142 = vpop.f32.mrf.mxu0
    %v1143 = vadd.f32 0.0, %v1142
    %v1144 = vpop.f32.mrf.mxu0
    %1145 = vmatprep.mubr.f32.mxu0 0.0
    %1146 = vmatmul.mubr.f32.gmra.mxu0 %v716
    %v1147 = vpop.f32.mrf.mxu0
    %v1148 = vadd.f32 0.0, %v1147
    %v1149 = vpop.f32.mrf.mxu0
    %1150 = vdwg.mxu0
    %v1151 = vlaneseq
    %v1152 = vshrl.u32 %v1151, 7
    %v1153 = vsub.s32 0, %v1152
    %v1154 = vrot.slane %v65, %v1153
    %v1155 = vlaneseq
    %v1156 = vshrl.u32 %v1155, 7
    %v1157 = vsub.s32 0, %v1156
    %v1158 = vrot.slane %v66, %v1157
    %v1159 = vlaneseq
    %v1160 = vshrl.u32 %v1159, 7
    %v1161 = vsub.s32 0, %v1160
    %v1162 = vrot.slane %v67, %v1161
    %v1163 = vlaneseq
    %v1164 = vshrl.u32 %v1163, 7
    %v1165 = vsub.s32 0, %v1164
    %v1166 = vrot.slane %v68, %v1165
    %v1167 = vlaneseq
    %v1168 = vshrl.u32 %v1167, 7
    %v1169 = vsub.s32 0, %v1168
    %v1170 = vrot.slane %v69, %v1169
    %v1171 = vmul.f32 %v785, %v1154
    %v1172 = vmul.f32 %v787, %v1158
    %v1173 = vmul.f32 %v934, %v1162
    %v1174 = vmul.f32 %v936, %v1166
    %v1175 = vmul.f32 %v1083, %v1170
    %v1176 = vmul.f32 %v791, %v1154
    %v1177 = vmul.f32 %v793, %v1158
    %v1178 = vmul.f32 %v940, %v1162
    %v1179 = vmul.f32 %v942, %v1166
    %v1180 = vmul.f32 %v1088, %v1170
    %v1182 = vlaneseq
    %v1183 = vshrl.u32 %v1182, 7
    %v1184 = vsub.s32 0, %v1183
    %v1185 = vrot.slane %v78, %v1184
    %v1186 = vlaneseq
    %v1187 = vshrl.u32 %v1186, 7
    %v1188 = vsub.s32 1, %v1187
    %v1189 = vrot.slane %v78, %v1188
    %v1190 = vlaneseq
    %v1191 = vshrl.u32 %v1190, 7
    %v1192 = vsub.s32 2, %v1191
    %v1193 = vrot.slane %v78, %v1192
    %v1194 = vlaneseq
    %v1195 = vshrl.u32 %v1194, 7
    %v1196 = vsub.s32 3, %v1195
    %v1197 = vrot.slane %v78, %v1196
    %v1198 = vlaneseq
    %v1199 = vshrl.u32 %v1198, 7
    %v1200 = vsub.s32 4, %v1199
    %v1201 = vrot.slane %v78, %v1200
    %v1207 = vadd.f32 %v1171, %v1185
    %v1208 = vadd.f32 %v1172, %v1189
    %v1209 = vadd.f32 %v1173, %v1193
    %v1210 = vadd.f32 %v1174, %v1197
    %v1211 = vadd.f32 %v1175, %v1201
    %v1212 = vadd.f32 %v1176, %v1185
    %v1213 = vadd.f32 %v1177, %v1189
    %v1214 = vadd.f32 %v1178, %v1193
    %v1215 = vadd.f32 %v1179, %v1197
    %v1216 = vadd.f32 %v1180, %v1201
    %v1217 = vlaneseq
    %v1218 = vshrl.u32 %v1217, 7
    %v1219 = vsub.s32 1, %v1218
    %v1220 = vrot.slane %v65, %v1219
    %v1221 = vlaneseq
    %v1222 = vshrl.u32 %v1221, 7
    %v1223 = vsub.s32 1, %v1222
    %v1224 = vrot.slane %v66, %v1223
    %v1225 = vlaneseq
    %v1226 = vshrl.u32 %v1225, 7
    %v1227 = vsub.s32 1, %v1226
    %v1228 = vrot.slane %v67, %v1227
    %v1229 = vlaneseq
    %v1230 = vshrl.u32 %v1229, 7
    %v1231 = vsub.s32 1, %v1230
    %v1232 = vrot.slane %v68, %v1231
    %v1233 = vlaneseq
    %v1234 = vshrl.u32 %v1233, 7
    %v1235 = vsub.s32 1, %v1234
    %v1236 = vrot.slane %v69, %v1235
    %v1237 = vmul.f32 %v791, %v1220
    %v1238 = vmul.f32 %v793, %v1224
    %v1239 = vmul.f32 %v940, %v1228
    %v1240 = vmul.f32 %v942, %v1232
    %v1241 = vmul.f32 %v1088, %v1236
    %v1242 = vmul.f32 %v797, %v1220
    %v1243 = vmul.f32 %v799, %v1224
    %v1244 = vmul.f32 %v946, %v1228
    %v1245 = vmul.f32 %v948, %v1232
    %v1246 = vmul.f32 %v1093, %v1236
    %vm1257 = vcmask 1043456
    %v1258 = vrot.slane %v1237, 4
    %v1259 = vrot.slane %v1242, 4
    %v1260 = vsel %vm1257, %v1258, %v1259
    %v1261 = vrot.slane %v1238, 4
    %v1262 = vrot.slane %v1243, 4
    %v1263 = vsel %vm1257, %v1261, %v1262
    %v1264 = vrot.slane %v1239, 4
    %v1265 = vrot.slane %v1244, 4
    %v1266 = vsel %vm1257, %v1264, %v1265
    %v1267 = vrot.slane %v1240, 4
    %v1268 = vrot.slane %v1245, 4
    %v1269 = vsel %vm1257, %v1267, %v1268
    %v1270 = vrot.slane %v1241, 4
    %v1271 = vrot.slane %v1246, 4
    %v1272 = vsel %vm1257, %v1270, %v1271
    %v1283 = vadd.f32 %v1207, %v1260
    %v1284 = vadd.f32 %v1208, %v1263
    %v1285 = vadd.f32 %v1209, %v1266
    %v1286 = vadd.f32 %v1210, %v1269
    %v1287 = vadd.f32 %v1211, %v1272
    %v1288 = vadd.f32 %v1212, %v1259
    %v1289 = vadd.f32 %v1213, %v1262
    %v1290 = vadd.f32 %v1214, %v1265
    %v1291 = vadd.f32 %v1215, %v1268
    %v1292 = vadd.f32 %v1216, %v1271
    %v1293 = vlaneseq
    %v1294 = vshrl.u32 %v1293, 7
    %v1295 = vsub.s32 2, %v1294
    %v1296 = vrot.slane %v65, %v1295
    %v1297 = vlaneseq
    %v1298 = vshrl.u32 %v1297, 7
    %v1299 = vsub.s32 2, %v1298
    %v1300 = vrot.slane %v66, %v1299
    %v1301 = vlaneseq
    %v1302 = vshrl.u32 %v1301, 7
    %v1303 = vsub.s32 2, %v1302
    %v1304 = vrot.slane %v67, %v1303
    %v1305 = vlaneseq
    %v1306 = vshrl.u32 %v1305, 7
    %v1307 = vsub.s32 2, %v1306
    %v1308 = vrot.slane %v68, %v1307
    %v1309 = vlaneseq
    %v1310 = vshrl.u32 %v1309, 7
    %v1311 = vsub.s32 2, %v1310
    %v1312 = vrot.slane %v69, %v1311
    %v1313 = vmul.f32 %v803, %v1296
    %v1314 = vmul.f32 %v805, %v1300
    %v1315 = vmul.f32 %v952, %v1304
    %v1316 = vmul.f32 %v954, %v1308
    %v1317 = vmul.f32 %v1098, %v1312
    %v1318 = vmul.f32 %v809, %v1296
    %v1319 = vmul.f32 %v811, %v1300
    %v1320 = vmul.f32 %v958, %v1304
    %v1321 = vmul.f32 %v960, %v1308
    %v1322 = vmul.f32 %v1103, %v1312
    %v1323 = vadd.f32 %v1283, %v1313
    %v1324 = vadd.f32 %v1284, %v1314
    %v1325 = vadd.f32 %v1285, %v1315
    %v1326 = vadd.f32 %v1286, %v1316
    %v1327 = vadd.f32 %v1287, %v1317
    %v1328 = vadd.f32 %v1288, %v1318
    %v1329 = vadd.f32 %v1289, %v1319
    %v1330 = vadd.f32 %v1290, %v1320
    %v1331 = vadd.f32 %v1291, %v1321
    %v1332 = vadd.f32 %v1292, %v1322
    %v1333 = vlaneseq
    %v1334 = vshrl.u32 %v1333, 7
    %v1335 = vsub.s32 3, %v1334
    %v1336 = vrot.slane %v65, %v1335
    %v1337 = vlaneseq
    %v1338 = vshrl.u32 %v1337, 7
    %v1339 = vsub.s32 3, %v1338
    %v1340 = vrot.slane %v66, %v1339
    %v1341 = vlaneseq
    %v1342 = vshrl.u32 %v1341, 7
    %v1343 = vsub.s32 3, %v1342
    %v1344 = vrot.slane %v67, %v1343
    %v1345 = vlaneseq
    %v1346 = vshrl.u32 %v1345, 7
    %v1347 = vsub.s32 3, %v1346
    %v1348 = vrot.slane %v68, %v1347
    %v1349 = vlaneseq
    %v1350 = vshrl.u32 %v1349, 7
    %v1351 = vsub.s32 3, %v1350
    %v1352 = vrot.slane %v69, %v1351
    %v1353 = vmul.f32 %v809, %v1336
    %v1354 = vmul.f32 %v811, %v1340
    %v1355 = vmul.f32 %v958, %v1344
    %v1356 = vmul.f32 %v960, %v1348
    %v1357 = vmul.f32 %v1103, %v1352
    %v1358 = vmul.f32 %v815, %v1336
    %v1359 = vmul.f32 %v817, %v1340
    %v1360 = vmul.f32 %v964, %v1344
    %v1361 = vmul.f32 %v966, %v1348
    %v1362 = vmul.f32 %v1108, %v1352
    %v1373 = vrot.slane %v1353, 4
    %v1374 = vrot.slane %v1358, 4
    %v1375 = vsel %vm1257, %v1373, %v1374
    %v1376 = vrot.slane %v1354, 4
    %v1377 = vrot.slane %v1359, 4
    %v1378 = vsel %vm1257, %v1376, %v1377
    %v1379 = vrot.slane %v1355, 4
    %v1380 = vrot.slane %v1360, 4
    %v1381 = vsel %vm1257, %v1379, %v1380
    %v1382 = vrot.slane %v1356, 4
    %v1383 = vrot.slane %v1361, 4
    %v1384 = vsel %vm1257, %v1382, %v1383
    %v1385 = vrot.slane %v1357, 4
    %v1386 = vrot.slane %v1362, 4
    %v1387 = vsel %vm1257, %v1385, %v1386
    %v1398 = vadd.f32 %v1323, %v1375
    %v1399 = vadd.f32 %v1324, %v1378
    %v1400 = vadd.f32 %v1325, %v1381
    %v1401 = vadd.f32 %v1326, %v1384
    %v1402 = vadd.f32 %v1327, %v1387
    %v1403 = vadd.f32 %v1328, %v1374
    %v1404 = vadd.f32 %v1329, %v1377
    %v1405 = vadd.f32 %v1330, %v1380
    %v1406 = vadd.f32 %v1331, %v1383
    %v1407 = vadd.f32 %v1332, %v1386
    %v1408 = vlaneseq
    %v1409 = vshrl.u32 %v1408, 7
    %v1410 = vsub.s32 4, %v1409
    %v1411 = vrot.slane %v65, %v1410
    %v1412 = vlaneseq
    %v1413 = vshrl.u32 %v1412, 7
    %v1414 = vsub.s32 4, %v1413
    %v1415 = vrot.slane %v66, %v1414
    %v1416 = vlaneseq
    %v1417 = vshrl.u32 %v1416, 7
    %v1418 = vsub.s32 4, %v1417
    %v1419 = vrot.slane %v67, %v1418
    %v1420 = vlaneseq
    %v1421 = vshrl.u32 %v1420, 7
    %v1422 = vsub.s32 4, %v1421
    %v1423 = vrot.slane %v68, %v1422
    %v1424 = vlaneseq
    %v1425 = vshrl.u32 %v1424, 7
    %v1426 = vsub.s32 4, %v1425
    %v1427 = vrot.slane %v69, %v1426
    %v1428 = vmul.f32 %v821, %v1411
    %v1429 = vmul.f32 %v823, %v1415
    %v1430 = vmul.f32 %v970, %v1419
    %v1431 = vmul.f32 %v972, %v1423
    %v1432 = vmul.f32 %v1113, %v1427
    %v1433 = vmul.f32 %v827, %v1411
    %v1434 = vmul.f32 %v829, %v1415
    %v1435 = vmul.f32 %v976, %v1419
    %v1436 = vmul.f32 %v978, %v1423
    %v1437 = vmul.f32 %v1118, %v1427
    %v1438 = vadd.f32 %v1398, %v1428
    %v1439 = vadd.f32 %v1399, %v1429
    %v1440 = vadd.f32 %v1400, %v1430
    %v1441 = vadd.f32 %v1401, %v1431
    %v1442 = vadd.f32 %v1402, %v1432
    %v1443 = vadd.f32 %v1403, %v1433
    %v1444 = vadd.f32 %v1404, %v1434
    %v1445 = vadd.f32 %v1405, %v1435
    %v1446 = vadd.f32 %v1406, %v1436
    %v1447 = vadd.f32 %v1407, %v1437
    %v1448 = vlaneseq
    %v1449 = vshrl.u32 %v1448, 7
    %v1450 = vsub.s32 5, %v1449
    %v1451 = vrot.slane %v65, %v1450
    %v1452 = vlaneseq
    %v1453 = vshrl.u32 %v1452, 7
    %v1454 = vsub.s32 5, %v1453
    %v1455 = vrot.slane %v66, %v1454
    %v1456 = vlaneseq
    %v1457 = vshrl.u32 %v1456, 7
    %v1458 = vsub.s32 5, %v1457
    %v1459 = vrot.slane %v67, %v1458
    %v1460 = vlaneseq
    %v1461 = vshrl.u32 %v1460, 7
    %v1462 = vsub.s32 5, %v1461
    %v1463 = vrot.slane %v68, %v1462
    %v1464 = vlaneseq
    %v1465 = vshrl.u32 %v1464, 7
    %v1466 = vsub.s32 5, %v1465
    %v1467 = vrot.slane %v69, %v1466
    %v1468 = vmul.f32 %v827, %v1451
    %v1469 = vmul.f32 %v829, %v1455
    %v1470 = vmul.f32 %v976, %v1459
    %v1471 = vmul.f32 %v978, %v1463
    %v1472 = vmul.f32 %v1118, %v1467
    %v1473 = vmul.f32 %v833, %v1451
    %v1474 = vmul.f32 %v835, %v1455
    %v1475 = vmul.f32 %v982, %v1459
    %v1476 = vmul.f32 %v984, %v1463
    %v1477 = vmul.f32 %v1123, %v1467
    %v1488 = vrot.slane %v1468, 4
    %v1489 = vrot.slane %v1473, 4
    %v1490 = vsel %vm1257, %v1488, %v1489
    %v1491 = vrot.slane %v1469, 4
    %v1492 = vrot.slane %v1474, 4
    %v1493 = vsel %vm1257, %v1491, %v1492
    %v1494 = vrot.slane %v1470, 4
    %v1495 = vrot.slane %v1475, 4
    %v1496 = vsel %vm1257, %v1494, %v1495
    %v1497 = vrot.slane %v1471, 4
    %v1498 = vrot.slane %v1476, 4
    %v1499 = vsel %vm1257, %v1497, %v1498
    %v1500 = vrot.slane %v1472, 4
    %v1501 = vrot.slane %v1477, 4
    %v1502 = vsel %vm1257, %v1500, %v1501
    %v1513 = vadd.f32 %v1438, %v1490
    %v1514 = vadd.f32 %v1439, %v1493
    %v1515 = vadd.f32 %v1440, %v1496
    %v1516 = vadd.f32 %v1441, %v1499
    %v1517 = vadd.f32 %v1442, %v1502
    %v1518 = vadd.f32 %v1443, %v1489
    %v1519 = vadd.f32 %v1444, %v1492
    %v1520 = vadd.f32 %v1445, %v1495
    %v1521 = vadd.f32 %v1446, %v1498
    %v1522 = vadd.f32 %v1447, %v1501
    %v1523 = vlaneseq
    %v1524 = vshrl.u32 %v1523, 7
    %v1525 = vsub.s32 6, %v1524
    %v1526 = vrot.slane %v65, %v1525
    %v1527 = vlaneseq
    %v1528 = vshrl.u32 %v1527, 7
    %v1529 = vsub.s32 6, %v1528
    %v1530 = vrot.slane %v66, %v1529
    %v1531 = vlaneseq
    %v1532 = vshrl.u32 %v1531, 7
    %v1533 = vsub.s32 6, %v1532
    %v1534 = vrot.slane %v67, %v1533
    %v1535 = vlaneseq
    %v1536 = vshrl.u32 %v1535, 7
    %v1537 = vsub.s32 6, %v1536
    %v1538 = vrot.slane %v68, %v1537
    %v1539 = vlaneseq
    %v1540 = vshrl.u32 %v1539, 7
    %v1541 = vsub.s32 6, %v1540
    %v1542 = vrot.slane %v69, %v1541
    %v1543 = vmul.f32 %v839, %v1526
    %v1544 = vmul.f32 %v841, %v1530
    %v1545 = vmul.f32 %v988, %v1534
    %v1546 = vmul.f32 %v990, %v1538
    %v1547 = vmul.f32 %v1128, %v1542
    %v1548 = vmul.f32 %v845, %v1526
    %v1549 = vmul.f32 %v847, %v1530
    %v1550 = vmul.f32 %v994, %v1534
    %v1551 = vmul.f32 %v996, %v1538
    %v1552 = vmul.f32 %v1133, %v1542
    %v1553 = vadd.f32 %v1513, %v1543
    %v1554 = vadd.f32 %v1514, %v1544
    %v1555 = vadd.f32 %v1515, %v1545
    %v1556 = vadd.f32 %v1516, %v1546
    %v1557 = vadd.f32 %v1517, %v1547
    %v1558 = vadd.f32 %v1518, %v1548
    %v1559 = vadd.f32 %v1519, %v1549
    %v1560 = vadd.f32 %v1520, %v1550
    %v1561 = vadd.f32 %v1521, %v1551
    %v1562 = vadd.f32 %v1522, %v1552
    %v1563 = vlaneseq
    %v1564 = vshrl.u32 %v1563, 7
    %v1565 = vsub.s32 7, %v1564
    %v1566 = vrot.slane %v65, %v1565
    %v1567 = vlaneseq
    %v1568 = vshrl.u32 %v1567, 7
    %v1569 = vsub.s32 7, %v1568
    %v1570 = vrot.slane %v66, %v1569
    %v1571 = vlaneseq
    %v1572 = vshrl.u32 %v1571, 7
    %v1573 = vsub.s32 7, %v1572
    %v1574 = vrot.slane %v67, %v1573
    %v1575 = vlaneseq
    %v1576 = vshrl.u32 %v1575, 7
    %v1577 = vsub.s32 7, %v1576
    %v1578 = vrot.slane %v68, %v1577
    %v1579 = vlaneseq
    %v1580 = vshrl.u32 %v1579, 7
    %v1581 = vsub.s32 7, %v1580
    %v1582 = vrot.slane %v69, %v1581
    %v1583 = vmul.f32 %v845, %v1566
    %v1584 = vmul.f32 %v847, %v1570
    %v1585 = vmul.f32 %v994, %v1574
    %v1586 = vmul.f32 %v996, %v1578
    %v1587 = vmul.f32 %v1133, %v1582
    %v1588 = vmul.f32 %v851, %v1566
    %v1589 = vmul.f32 %v853, %v1570
    %v1590 = vmul.f32 %v1000, %v1574
    %v1591 = vmul.f32 %v1002, %v1578
    %v1592 = vmul.f32 %v1138, %v1582
    %v1603 = vrot.slane %v1583, 4
    %v1604 = vrot.slane %v1588, 4
    %v1605 = vsel %vm1257, %v1603, %v1604
    %v1606 = vrot.slane %v1584, 4
    %v1607 = vrot.slane %v1589, 4
    %v1608 = vsel %vm1257, %v1606, %v1607
    %v1609 = vrot.slane %v1585, 4
    %v1610 = vrot.slane %v1590, 4
    %v1611 = vsel %vm1257, %v1609, %v1610
    %v1612 = vrot.slane %v1586, 4
    %v1613 = vrot.slane %v1591, 4
    %v1614 = vsel %vm1257, %v1612, %v1613
    %v1615 = vrot.slane %v1587, 4
    %v1616 = vrot.slane %v1592, 4
    %v1617 = vsel %vm1257, %v1615, %v1616
    %v1628 = vadd.f32 %v1553, %v1605
    %v1629 = vadd.f32 %v1554, %v1608
    %v1630 = vadd.f32 %v1555, %v1611
    %v1631 = vadd.f32 %v1556, %v1614
    %v1632 = vadd.f32 %v1557, %v1617
    %v1633 = vadd.f32 %v1558, %v1604
    %v1634 = vadd.f32 %v1559, %v1607
    %v1635 = vadd.f32 %v1560, %v1610
    %v1636 = vadd.f32 %v1561, %v1613
    %v1637 = vadd.f32 %v1562, %v1616
    %v1638 = vlaneseq
    %v1639 = vshrl.u32 %v1638, 7
    %v1640 = vsub.s32 0, %v1639
    %v1641 = vrot.slane %v70, %v1640
    %v1642 = vlaneseq
    %v1643 = vshrl.u32 %v1642, 7
    %v1644 = vsub.s32 0, %v1643
    %v1645 = vrot.slane %v71, %v1644
    %v1646 = vlaneseq
    %v1647 = vshrl.u32 %v1646, 7
    %v1648 = vsub.s32 0, %v1647
    %v1649 = vrot.slane %v72, %v1648
    %v1650 = vlaneseq
    %v1651 = vshrl.u32 %v1650, 7
    %v1652 = vsub.s32 0, %v1651
    %v1653 = vrot.slane %v73, %v1652
    %v1654 = vlaneseq
    %v1655 = vshrl.u32 %v1654, 7
    %v1656 = vsub.s32 0, %v1655
    %v1657 = vrot.slane %v74, %v1656
    %v1658 = vmul.f32 %v857, %v1641
    %v1659 = vmul.f32 %v859, %v1645
    %v1660 = vmul.f32 %v1006, %v1649
    %v1661 = vmul.f32 %v1008, %v1653
    %v1662 = vmul.f32 %v1143, %v1657
    %v1663 = vmul.f32 %v863, %v1641
    %v1664 = vmul.f32 %v865, %v1645
    %v1665 = vmul.f32 %v1012, %v1649
    %v1666 = vmul.f32 %v1014, %v1653
    %v1667 = vmul.f32 %v1148, %v1657
    %v1668 = vadd.f32 %v1628, %v1658
    %v1669 = vadd.f32 %v1629, %v1659
    %v1670 = vadd.f32 %v1630, %v1660
    %v1671 = vadd.f32 %v1631, %v1661
    %v1672 = vadd.f32 %v1632, %v1662
    %v1673 = vadd.f32 %v1633, %v1663
    %v1674 = vadd.f32 %v1634, %v1664
    %v1675 = vadd.f32 %v1635, %v1665
    %v1676 = vadd.f32 %v1636, %v1666
    %v1677 = vadd.f32 %v1637, %v1667
    %v1678 = vmul.f32 %v1668, 0.5
    %v1679 = vmul.f32 %v1669, 0.5
    %v1680 = vmul.f32 %v1670, 0.5
    %v1681 = vmul.f32 %v1671, 0.5
    %v1682 = vmul.f32 %v1672, 0.5
    %v1683 = vmul.f32 %v1673, 0.5
    %v1684 = vmul.f32 %v1674, 0.5
    %v1685 = vmul.f32 %v1675, 0.5
    %v1686 = vmul.f32 %v1676, 0.5
    %v1687 = vmul.f32 %v1677, 0.5
    %v1688 = vmul.f32 %v1668, %v1668
    %v1689 = vmul.f32 %v1669, %v1669
    %v1690 = vmul.f32 %v1670, %v1670
    %v1691 = vmul.f32 %v1671, %v1671
    %v1692 = vmul.f32 %v1672, %v1672
    %v1693 = vmul.f32 %v1673, %v1673
    %v1694 = vmul.f32 %v1674, %v1674
    %v1695 = vmul.f32 %v1675, %v1675
    %v1696 = vmul.f32 %v1676, %v1676
    %v1697 = vmul.f32 %v1677, %v1677
    %v1698 = vmul.f32 %v1688, %v1668
    %v1699 = vmul.f32 %v1689, %v1669
    %v1700 = vmul.f32 %v1690, %v1670
    %v1701 = vmul.f32 %v1691, %v1671
    %v1702 = vmul.f32 %v1692, %v1672
    %v1703 = vmul.f32 %v1693, %v1673
    %v1704 = vmul.f32 %v1694, %v1674
    %v1705 = vmul.f32 %v1695, %v1675
    %v1706 = vmul.f32 %v1696, %v1676
    %v1707 = vmul.f32 %v1697, %v1677
    %v1708 = vmul.f32 %v1698, 0.044715
    %v1709 = vmul.f32 %v1699, 0.044715
    %v1710 = vmul.f32 %v1700, 0.044715
    %v1711 = vmul.f32 %v1701, 0.044715
    %v1712 = vmul.f32 %v1702, 0.044715
    %v1713 = vmul.f32 %v1703, 0.044715
    %v1714 = vmul.f32 %v1704, 0.044715
    %v1715 = vmul.f32 %v1705, 0.044715
    %v1716 = vmul.f32 %v1706, 0.044715
    %v1717 = vmul.f32 %v1707, 0.044715
    %v1718 = vadd.f32 %v1668, %v1708
    %v1719 = vadd.f32 %v1669, %v1709
    %v1720 = vadd.f32 %v1670, %v1710
    %v1721 = vadd.f32 %v1671, %v1711
    %v1722 = vadd.f32 %v1672, %v1712
    %v1723 = vadd.f32 %v1673, %v1713
    %v1724 = vadd.f32 %v1674, %v1714
    %v1725 = vadd.f32 %v1675, %v1715
    %v1726 = vadd.f32 %v1676, %v1716
    %v1727 = vadd.f32 %v1677, %v1717
    %v1728 = vmul.f32 %v1718, 0.7978846
    %v1729 = vmul.f32 %v1719, 0.7978846
    %v1730 = vmul.f32 %v1720, 0.7978846
    %v1731 = vmul.f32 %v1721, 0.7978846
    %v1732 = vmul.f32 %v1722, 0.7978846
    %v1733 = vmul.f32 %v1723, 0.7978846
    %v1734 = vmul.f32 %v1724, 0.7978846
    %v1735 = vmul.f32 %v1725, 0.7978846
    %v1736 = vmul.f32 %v1726, 0.7978846
    %v1737 = vmul.f32 %v1727, 0.7978846
    %v1738 = vtanh.pop %v1728
    %v1739 = vtanh.pop %v1729
    %v1740 = vtanh.pop %v1730
    %v1741 = vtanh.pop %v1731
    %v1742 = vtanh.pop %v1732
    %v1743 = vtanh.pop %v1733
    %v1744 = vtanh.pop %v1734
    %v1745 = vtanh.pop %v1735
    %v1746 = vtanh.pop %v1736
    %v1747 = vtanh.pop %v1737
    %v1748 = vadd.f32 %v1738, 1.0
    %v1749 = vadd.f32 %v1739, 1.0
    %v1750 = vadd.f32 %v1740, 1.0
    %v1751 = vadd.f32 %v1741, 1.0
    %v1752 = vadd.f32 %v1742, 1.0
    %v1753 = vadd.f32 %v1743, 1.0
    %v1754 = vadd.f32 %v1744, 1.0
    %v1755 = vadd.f32 %v1745, 1.0
    %v1756 = vadd.f32 %v1746, 1.0
    %v1757 = vadd.f32 %v1747, 1.0
    %v1758 = vmul.f32 %v1678, %v1748
    %v1759 = vmul.f32 %v1679, %v1749
    %v1760 = vmul.f32 %v1680, %v1750
    %v1761 = vmul.f32 %v1681, %v1751
    %v1762 = vmul.f32 %v1682, %v1752
    %v1763 = vmul.f32 %v1683, %v1753
    %v1764 = vmul.f32 %v1684, %v1754
    %v1765 = vmul.f32 %v1685, %v1755
    %v1766 = vmul.f32 %v1686, %v1756
    %v1767 = vmul.f32 %v1687, %v1757
    %v1768 = vpack.c.bf16 %v1763, %v1758
    %v1769 = vpack.c.bf16 %v1764, %v1759
    %v1770 = vpack.c.bf16 %v1765, %v1760
    %v1771 = vpack.c.bf16 %v1766, %v1761
    %v1772 = vpack.c.bf16 %v1767, %v1762
    %v1773 = vld [vmem:[%s3] sm:$0xff]
    %v1774 = vld [vmem:[%s3 + $0x8] sm:$0xff]
    %v1775 = vld [vmem:[%s3 + $0x10] sm:$0xff]
    %v1776 = vld [vmem:[%s3 + $0x18] sm:$0xff]
    %v1777 = vld [vmem:[%s3 + $0x20] sm:$0xff]
    %v1778 = vld [vmem:[%s3 + $0x28] sm:$0xff]
    %v1779 = vld [vmem:[%s3 + $0x30] sm:$0xff]
    %v1780 = vld [vmem:[%s3 + $0x38] sm:$0xff]
    %v1781 = vld [vmem:[%s3 + $0x40] sm:$0xff]
    %v1782 = vld [vmem:[%s3 + $0x48] sm:$0xff]
    %v1783 = vld [vmem:[%s3 + $0x50] sm:$0xff]
    %v1784 = vld [vmem:[%s3 + $0x58] sm:$0xff]
    %v1785 = vld [vmem:[%s3 + $0x60] sm:$0xff]
    %v1786 = vld [vmem:[%s3 + $0x68] sm:$0xff]
    %v1787 = vld [vmem:[%s3 + $0x70] sm:$0xff]
    %v1788 = vld [vmem:[%s3 + $0x78] sm:$0xff]
    %v1789 = vld [vmem:[%s3 + $0x80] sm:$0xff]
    %v1790 = vld [vmem:[%s3 + $0x88] sm:$0xff]
    %v1791 = vld [vmem:[%s3 + $0x90] sm:$0xff]
    %v1792 = vld [vmem:[%s3 + $0x98] sm:$0xff]
    %v1793 = vld [vmem:[%s3 + $0xa0] sm:$0xff]
    %v1794 = vld [vmem:[%s3 + $0xa8] sm:$0xff]
    %v1795 = vld [vmem:[%s3 + $0xb0] sm:$0xff]
    %v1796 = vld [vmem:[%s3 + $0xb8] sm:$0xff]
    %v1797 = vld [vmem:[%s3 + $0xc0] sm:$0xff]
    %v1798 = vld [vmem:[%s3 + $0xc8] sm:$0xff]
    %v1799 = vld [vmem:[%s3 + $0xd0] sm:$0xff]
    %v1800 = vld [vmem:[%s3 + $0xd8] sm:$0xff]
    %v1801 = vld [vmem:[%s3 + $0xe0] sm:$0xff]
    %v1802 = vld [vmem:[%s3 + $0xe8] sm:$0xff]
    %v1803 = vld [vmem:[%s3 + $0xf0] sm:$0xff]
    %v1804 = vld [vmem:[%s3 + $0xf8] sm:$0xff]
    %v1805 = vld [vmem:[%s3 + $0x100] sm:$0xff]
    %v1806 = vld [vmem:[%s3 + $0x108] sm:$0xff]
    %v1807 = vld [vmem:[%s3 + $0x110] sm:$0xff]
    %v1808 = vld [vmem:[%s3 + $0x118] sm:$0xff]
    %v1809 = vld [vmem:[%s3 + $0x120] sm:$0xff]
    %v1810 = vld [vmem:[%s3 + $0x128] sm:$0xff]
    %v1811 = vld [vmem:[%s3 + $0x130] sm:$0xff]
    %v1812 = vld [vmem:[%s3 + $0x138] sm:$0xff]
    %v1813 = vld [vmem:[%s3 + $0x140] sm:$0xff]
    %v1814 = vld [vmem:[%s3 + $0x148] sm:$0xff]
    %v1815 = vld [vmem:[%s3 + $0x150] sm:$0xff]
    %v1816 = vld [vmem:[%s3 + $0x158] sm:$0xff]
    %v1817 = vld [vmem:[%s3 + $0x160] sm:$0xff]
    %v1818 = vld [vmem:[%s3 + $0x168] sm:$0xff]
    %v1819 = vld [vmem:[%s3 + $0x170] sm:$0xff]
    %v1820 = vld [vmem:[%s3 + $0x178] sm:$0xff]
    %v1821 = vld [vmem:[%s3 + $0x180] sm:$0xff]
    %v1822 = vld [vmem:[%s3 + $0x188] sm:$0xff]
    %v1823 = vld [vmem:[%s3 + $0x190] sm:$0xff]
    %v1824 = vld [vmem:[%s3 + $0x198] sm:$0xff]
    %v1825 = vld [vmem:[%s3 + $0x1a0] sm:$0xff]
    %v1826 = vld [vmem:[%s3 + $0x1a8] sm:$0xff]
    %v1827 = vld [vmem:[%s3 + $0x1b0] sm:$0xff]
    %v1828 = vld [vmem:[%s3 + $0x1b8] sm:$0xff]
    %v1829 = vld [vmem:[%s3 + $0x1c0] sm:$0xff]
    %v1830 = vld [vmem:[%s3 + $0x1c8] sm:$0xff]
    %v1831 = vld [vmem:[%s3 + $0x1d0] sm:$0xff]
    %v1832 = vld [vmem:[%s3 + $0x1d8] sm:$0xff]
    %v1833 = vld [vmem:[%s3 + $0x1e0] sm:$0xff]
    %v1834 = vld [vmem:[%s3 + $0x1e8] sm:$0xff]
    %v1835 = vld [vmem:[%s3 + $0x1f0] sm:$0xff]
    %v1836 = vld [vmem:[%s3 + $0x1f8] sm:$0xff]
    %v1837 = vld [vmem:[%s3 + $0x200] sm:$0xff]
    %v1838 = vld [vmem:[%s3 + $0x208] sm:$0xff]
    %v1839 = vld [vmem:[%s3 + $0x210] sm:$0xff]
    %v1840 = vld [vmem:[%s3 + $0x218] sm:$0xff]
    %v1841 = vld [vmem:[%s3 + $0x220] sm:$0xff]
    %v1842 = vld [vmem:[%s3 + $0x228] sm:$0xff]
    %v1843 = vld [vmem:[%s3 + $0x230] sm:$0xff]
    %v1844 = vld [vmem:[%s3 + $0x238] sm:$0xff]
    %v1845 = vld [vmem:[%s3 + $0x240] sm:$0xff]
    %v1846 = vld [vmem:[%s3 + $0x248] sm:$0xff]
    %v1847 = vld [vmem:[%s3 + $0x250] sm:$0xff]
    %v1848 = vld [vmem:[%s3 + $0x258] sm:$0xff]
    %v1849 = vld [vmem:[%s3 + $0x260] sm:$0xff]
    %v1850 = vld [vmem:[%s3 + $0x268] sm:$0xff]
    %v1851 = vld [vmem:[%s3 + $0x270] sm:$0xff]
    %v1852 = vld [vmem:[%s3 + $0x278] sm:$0xff]
    %v1854 = vlaneseq
    %v1855 = vshrl.u32 %v1854, 7
    %v1856 = vsub.s32 0, %v1855
    %v1857 = vrot.slane %v80, %v1856
    %v1858 = vlaneseq
    %v1859 = vshrl.u32 %v1858, 7
    %v1860 = vsub.s32 1, %v1859
    %v1861 = vrot.slane %v80, %v1860
    %v1944 = vunpack.c.l.b16 %v1773
    %v1945 = vunpack.c.h.b16 %v1773
    %v1946 = vunpack.c.l.b16 %v1774
    %v1947 = vunpack.c.h.b16 %v1774
    %v1948 = vunpack.c.l.b16 %v1775
    %v1949 = vunpack.c.h.b16 %v1775
    %v1950 = vunpack.c.l.b16 %v1776
    %v1951 = vunpack.c.h.b16 %v1776
    %v1952 = vunpack.c.l.b16 %v1777
    %v1953 = vunpack.c.h.b16 %v1777
    %v1954 = vunpack.c.l.b16 %v1778
    %v1955 = vunpack.c.h.b16 %v1778
    %v1956 = vunpack.c.l.b16 %v1779
    %v1957 = vunpack.c.h.b16 %v1779
    %v1958 = vunpack.c.l.b16 %v1780
    %v1959 = vunpack.c.h.b16 %v1780
    %v1960 = vunpack.c.l.b16 %v1781
    %v1961 = vunpack.c.h.b16 %v1781
    %v1962 = vunpack.c.l.b16 %v1782
    %v1963 = vunpack.c.h.b16 %v1782
    %v1964 = vunpack.c.l.b16 %v1783
    %v1965 = vunpack.c.h.b16 %v1783
    %v1966 = vunpack.c.l.b16 %v1784
    %v1967 = vunpack.c.h.b16 %v1784
    %v1968 = vunpack.c.l.b16 %v1785
    %v1969 = vunpack.c.h.b16 %v1785
    %v1970 = vunpack.c.l.b16 %v1786
    %v1971 = vunpack.c.h.b16 %v1786
    %v1972 = vunpack.c.l.b16 %v1787
    %v1973 = vunpack.c.h.b16 %v1787
    %v1974 = vunpack.c.l.b16 %v1788
    %v1975 = vunpack.c.h.b16 %v1788
    %v1976 = vunpack.c.l.b16 %v1789
    %v1977 = vunpack.c.h.b16 %v1789
    %v1978 = vunpack.c.l.b16 %v1790
    %v1979 = vunpack.c.h.b16 %v1790
    %v1980 = vunpack.c.l.b16 %v1791
    %v1981 = vunpack.c.h.b16 %v1791
    %v1982 = vunpack.c.l.b16 %v1792
    %v1983 = vunpack.c.h.b16 %v1792
    %v1984 = vunpack.c.l.b16 %v1793
    %v1985 = vunpack.c.h.b16 %v1793
    %v1986 = vunpack.c.l.b16 %v1794
    %v1987 = vunpack.c.h.b16 %v1794
    %v1988 = vunpack.c.l.b16 %v1795
    %v1989 = vunpack.c.h.b16 %v1795
    %v1990 = vunpack.c.l.b16 %v1796
    %v1991 = vunpack.c.h.b16 %v1796
    %v1992 = vunpack.c.l.b16 %v1797
    %v1993 = vunpack.c.h.b16 %v1797
    %v1994 = vunpack.c.l.b16 %v1798
    %v1995 = vunpack.c.h.b16 %v1798
    %v1996 = vunpack.c.l.b16 %v1799
    %v1997 = vunpack.c.h.b16 %v1799
    %v1998 = vunpack.c.l.b16 %v1800
    %v1999 = vunpack.c.h.b16 %v1800
    %v2000 = vunpack.c.l.b16 %v1801
    %v2001 = vunpack.c.h.b16 %v1801
    %v2002 = vunpack.c.l.b16 %v1802
    %v2003 = vunpack.c.h.b16 %v1802
    %v2004 = vunpack.c.l.b16 %v1803
    %v2005 = vunpack.c.h.b16 %v1803
    %v2006 = vunpack.c.l.b16 %v1804
    %v2007 = vunpack.c.h.b16 %v1804
    %v2008 = vunpack.c.l.b16 %v1805
    %v2009 = vunpack.c.h.b16 %v1805
    %v2010 = vunpack.c.l.b16 %v1806
    %v2011 = vunpack.c.h.b16 %v1806
    %v2012 = vunpack.c.l.b16 %v1807
    %v2013 = vunpack.c.h.b16 %v1807
    %v2014 = vunpack.c.l.b16 %v1808
    %v2015 = vunpack.c.h.b16 %v1808
    %v2016 = vunpack.c.l.b16 %v1809
    %v2017 = vunpack.c.h.b16 %v1809
    %v2018 = vunpack.c.l.b16 %v1810
    %v2019 = vunpack.c.h.b16 %v1810
    %v2020 = vunpack.c.l.b16 %v1811
    %v2021 = vunpack.c.h.b16 %v1811
    %v2022 = vunpack.c.l.b16 %v1812
    %v2023 = vunpack.c.h.b16 %v1812
    %v2024 = vunpack.c.l.b16 %v1813
    %v2025 = vunpack.c.h.b16 %v1813
    %v2026 = vunpack.c.l.b16 %v1814
    %v2027 = vunpack.c.h.b16 %v1814
    %v2028 = vunpack.c.l.b16 %v1815
    %v2029 = vunpack.c.h.b16 %v1815
    %v2030 = vunpack.c.l.b16 %v1816
    %v2031 = vunpack.c.h.b16 %v1816
    %v2032 = vunpack.c.l.b16 %v1817
    %v2033 = vunpack.c.h.b16 %v1817
    %v2034 = vunpack.c.l.b16 %v1818
    %v2035 = vunpack.c.h.b16 %v1818
    %v2036 = vunpack.c.l.b16 %v1819
    %v2037 = vunpack.c.h.b16 %v1819
    %v2038 = vunpack.c.l.b16 %v1820
    %v2039 = vunpack.c.h.b16 %v1820
    %v2040 = vunpack.c.l.b16 %v1821
    %v2041 = vunpack.c.h.b16 %v1821
    %v2042 = vunpack.c.l.b16 %v1822
    %v2043 = vunpack.c.h.b16 %v1822
    %v2044 = vunpack.c.l.b16 %v1823
    %v2045 = vunpack.c.h.b16 %v1823
    %v2046 = vunpack.c.l.b16 %v1824
    %v2047 = vunpack.c.h.b16 %v1824
    %v2048 = vunpack.c.l.b16 %v1825
    %v2049 = vunpack.c.h.b16 %v1825
    %v2050 = vunpack.c.l.b16 %v1826
    %v2051 = vunpack.c.h.b16 %v1826
    %v2052 = vunpack.c.l.b16 %v1827
    %v2053 = vunpack.c.h.b16 %v1827
    %v2054 = vunpack.c.l.b16 %v1828
    %v2055 = vunpack.c.h.b16 %v1828
    %v2056 = vunpack.c.l.b16 %v1829
    %v2057 = vunpack.c.h.b16 %v1829
    %v2058 = vunpack.c.l.b16 %v1830
    %v2059 = vunpack.c.h.b16 %v1830
    %v2060 = vunpack.c.l.b16 %v1831
    %v2061 = vunpack.c.h.b16 %v1831
    %v2062 = vunpack.c.l.b16 %v1832
    %v2063 = vunpack.c.h.b16 %v1832
    %v2064 = vunpack.c.l.b16 %v1833
    %v2065 = vunpack.c.h.b16 %v1833
    %v2066 = vunpack.c.l.b16 %v1834
    %v2067 = vunpack.c.h.b16 %v1834
    %v2068 = vunpack.c.l.b16 %v1835
    %v2069 = vunpack.c.h.b16 %v1835
    %v2070 = vunpack.c.l.b16 %v1836
    %v2071 = vunpack.c.h.b16 %v1836
    %v2072 = vunpack.c.l.b16 %v1837
    %v2073 = vunpack.c.h.b16 %v1837
    %v2074 = vunpack.c.l.b16 %v1838
    %v2075 = vunpack.c.h.b16 %v1838
    %v2076 = vunpack.c.l.b16 %v1839
    %v2077 = vunpack.c.h.b16 %v1839
    %v2078 = vunpack.c.l.b16 %v1840
    %v2079 = vunpack.c.h.b16 %v1840
    %v2080 = vunpack.c.l.b16 %v1841
    %v2081 = vunpack.c.h.b16 %v1841
    %v2082 = vunpack.c.l.b16 %v1842
    %v2083 = vunpack.c.h.b16 %v1842
    %v2084 = vunpack.c.l.b16 %v1843
    %v2085 = vunpack.c.h.b16 %v1843
    %v2086 = vunpack.c.l.b16 %v1844
    %v2087 = vunpack.c.h.b16 %v1844
    %v2088 = vunpack.c.l.b16 %v1845
    %v2089 = vunpack.c.h.b16 %v1845
    %v2090 = vunpack.c.l.b16 %v1846
    %v2091 = vunpack.c.h.b16 %v1846
    %v2092 = vunpack.c.l.b16 %v1847
    %v2093 = vunpack.c.h.b16 %v1847
    %v2094 = vunpack.c.l.b16 %v1848
    %v2095 = vunpack.c.h.b16 %v1848
    %v2096 = vunpack.c.l.b16 %v1849
    %v2097 = vunpack.c.h.b16 %v1849
    %v2098 = vunpack.c.l.b16 %v1850
    %v2099 = vunpack.c.h.b16 %v1850
    %v2100 = vunpack.c.l.b16 %v1851
    %v2101 = vunpack.c.h.b16 %v1851
    %v2102 = vunpack.c.l.b16 %v1852
    %v2103 = vunpack.c.h.b16 %v1852
    %v2104 = vpack.c.b16 %v1946, %v1944
    %v2105 = vpack.c.b16 %v1947, %v1945
    %v2106 = vpack.c.b16 %v1950, %v1948
    %v2107 = vpack.c.b16 %v1951, %v1949
    %v2108 = vpack.c.b16 %v1954, %v1952
    %v2109 = vpack.c.b16 %v1955, %v1953
    %v2110 = vpack.c.b16 %v1958, %v1956
    %v2111 = vpack.c.b16 %v1959, %v1957
    %v2112 = vpack.c.b16 %v1962, %v1960
    %v2113 = vpack.c.b16 %v1963, %v1961
    %v2114 = vpack.c.b16 %v1966, %v1964
    %v2115 = vpack.c.b16 %v1967, %v1965
    %v2116 = vpack.c.b16 %v1970, %v1968
    %v2117 = vpack.c.b16 %v1971, %v1969
    %v2118 = vpack.c.b16 %v1974, %v1972
    %v2119 = vpack.c.b16 %v1975, %v1973
    %v2120 = vpack.c.b16 %v1978, %v1976
    %v2121 = vpack.c.b16 %v1979, %v1977
    %v2122 = vpack.c.b16 %v1982, %v1980
    %v2123 = vpack.c.b16 %v1983, %v1981
    %v2124 = vpack.c.b16 %v1986, %v1984
    %v2125 = vpack.c.b16 %v1987, %v1985
    %v2126 = vpack.c.b16 %v1990, %v1988
    %v2127 = vpack.c.b16 %v1991, %v1989
    %v2128 = vpack.c.b16 %v1994, %v1992
    %v2129 = vpack.c.b16 %v1995, %v1993
    %v2130 = vpack.c.b16 %v1998, %v1996
    %v2131 = vpack.c.b16 %v1999, %v1997
    %v2132 = vpack.c.b16 %v2002, %v2000
    %v2133 = vpack.c.b16 %v2003, %v2001
    %v2134 = vpack.c.b16 %v2006, %v2004
    %v2135 = vpack.c.b16 %v2007, %v2005
    %v2136 = vpack.c.b16 %v2010, %v2008
    %v2137 = vpack.c.b16 %v2011, %v2009
    %v2138 = vpack.c.b16 %v2014, %v2012
    %v2139 = vpack.c.b16 %v2015, %v2013
    %v2140 = vpack.c.b16 %v2018, %v2016
    %v2141 = vpack.c.b16 %v2019, %v2017
    %v2142 = vpack.c.b16 %v2022, %v2020
    %v2143 = vpack.c.b16 %v2023, %v2021
    %v2144 = vpack.c.b16 %v2026, %v2024
    %v2145 = vpack.c.b16 %v2027, %v2025
    %v2146 = vpack.c.b16 %v2030, %v2028
    %v2147 = vpack.c.b16 %v2031, %v2029
    %v2148 = vpack.c.b16 %v2034, %v2032
    %v2149 = vpack.c.b16 %v2035, %v2033
    %v2150 = vpack.c.b16 %v2038, %v2036
    %v2151 = vpack.c.b16 %v2039, %v2037
    %v2152 = vpack.c.b16 %v2042, %v2040
    %v2153 = vpack.c.b16 %v2043, %v2041
    %v2154 = vpack.c.b16 %v2046, %v2044
    %v2155 = vpack.c.b16 %v2047, %v2045
    %v2156 = vpack.c.b16 %v2050, %v2048
    %v2157 = vpack.c.b16 %v2051, %v2049
    %v2158 = vpack.c.b16 %v2054, %v2052
    %v2159 = vpack.c.b16 %v2055, %v2053
    %v2160 = vpack.c.b16 %v2058, %v2056
    %v2161 = vpack.c.b16 %v2059, %v2057
    %v2162 = vpack.c.b16 %v2062, %v2060
    %v2163 = vpack.c.b16 %v2063, %v2061
    %v2164 = vpack.c.b16 %v2066, %v2064
    %v2165 = vpack.c.b16 %v2067, %v2065
    %v2166 = vpack.c.b16 %v2070, %v2068
    %v2167 = vpack.c.b16 %v2071, %v2069
    %v2168 = vpack.c.b16 %v2074, %v2072
    %v2169 = vpack.c.b16 %v2075, %v2073
    %v2170 = vpack.c.b16 %v2078, %v2076
    %v2171 = vpack.c.b16 %v2079, %v2077
    %v2172 = vpack.c.b16 %v2082, %v2080
    %v2173 = vpack.c.b16 %v2083, %v2081
    %v2174 = vpack.c.b16 %v2086, %v2084
    %v2175 = vpack.c.b16 %v2087, %v2085
    %v2176 = vpack.c.b16 %v2090, %v2088
    %v2177 = vpack.c.b16 %v2091, %v2089
    %v2178 = vpack.c.b16 %v2094, %v2092
    %v2179 = vpack.c.b16 %v2095, %v2093
    %v2180 = vpack.c.b16 %v2098, %v2096
    %v2181 = vpack.c.b16 %v2099, %v2097
    %v2182 = vpack.c.b16 %v2102, %v2100
    %v2183 = vpack.c.b16 %v2103, %v2101
    %2264 = vmatprep.subr.bf16.mxu0 %v2119
    %2265 = vmatpush1.bf16.msra.mxu0 %v2118
    %2266 = vmatprep.subr.bf16.mxu0 %v2117
    %2267 = vmatpush1.bf16.msra.mxu0 %v2116
    %2268 = vmatprep.subr.bf16.mxu0 %v2115
    %2269 = vmatpush1.bf16.msra.mxu0 %v2114
    %2270 = vmatprep.subr.bf16.mxu0 %v2113
    %2271 = vmatpush1.bf16.msra.mxu0 %v2112
    %2272 = vmatprep.subr.bf16.mxu0 %v2111
    %2273 = vmatpush1.bf16.msra.mxu0 %v2110
    %2274 = vmatprep.subr.bf16.mxu0 %v2109
    %2275 = vmatpush1.bf16.msra.mxu0 %v2108
    %2276 = vmatprep.subr.bf16.mxu0 %v2107
    %2277 = vmatpush1.bf16.msra.mxu0 %v2106
    %2278 = vmatprep.subr.bf16.mxu0 %v2105
    %2279 = vmatpush1.bf16.msra.mxu0 %v2104
    %2280 = vmatprep.subr.bf16.mxu0 %v2135
    %2281 = vmatpush2.bf16.msra.mxu0 %v2134
    %2282 = vmatprep.subr.bf16.mxu0 %v2133
    %2283 = vmatpush2.bf16.msra.mxu0 %v2132
    %2284 = vmatprep.subr.bf16.mxu0 %v2131
    %2285 = vmatpush2.bf16.msra.mxu0 %v2130
    %2286 = vmatprep.subr.bf16.mxu0 %v2129
    %2287 = vmatpush2.bf16.msra.mxu0 %v2128
    %2288 = vmatprep.subr.bf16.mxu0 %v2127
    %2289 = vmatpush2.bf16.msra.mxu0 %v2126
    %2290 = vmatprep.subr.bf16.mxu0 %v2125
    %2291 = vmatpush2.bf16.msra.mxu0 %v2124
    %2292 = vmatprep.subr.bf16.mxu0 %v2123
    %2293 = vmatpush2.bf16.msra.mxu0 %v2122
    %2294 = vmatprep.subr.bf16.mxu0 %v2121
    %2295 = vmatpush2.bf16.msra.mxu0 %v2120
    %2296 = vmatprep.mubr.bf16.mxu0 %v1769
    %2297 = vmatmul.mubr.bf16.gmra.mxu0 %v1768
    %v2298 = vpop.f32.mrf.mxu0
    %v2299 = vadd.f32 %v1857, %v2298
    %v2300 = vpop.f32.mrf.mxu0
    %v2301 = vadd.f32 %v1861, %v2300
    %v2302 = vpop.f32.mrf.mxu0
    %v2303 = vadd.f32 %v1857, %v2302
    %v2304 = vpop.f32.mrf.mxu0
    %v2305 = vadd.f32 %v1861, %v2304
    %2306 = vdwg.mxu0
    %2307 = vmatprep.subr.bf16.mxu0 %v2151
    %2308 = vmatpush1.bf16.msra.mxu0 %v2150
    %2309 = vmatprep.subr.bf16.mxu0 %v2149
    %2310 = vmatpush1.bf16.msra.mxu0 %v2148
    %2311 = vmatprep.subr.bf16.mxu0 %v2147
    %2312 = vmatpush1.bf16.msra.mxu0 %v2146
    %2313 = vmatprep.subr.bf16.mxu0 %v2145
    %2314 = vmatpush1.bf16.msra.mxu0 %v2144
    %2315 = vmatprep.subr.bf16.mxu0 %v2143
    %2316 = vmatpush1.bf16.msra.mxu0 %v2142
    %2317 = vmatprep.subr.bf16.mxu0 %v2141
    %2318 = vmatpush1.bf16.msra.mxu0 %v2140
    %2319 = vmatprep.subr.bf16.mxu0 %v2139
    %2320 = vmatpush1.bf16.msra.mxu0 %v2138
    %2321 = vmatprep.subr.bf16.mxu0 %v2137
    %2322 = vmatpush1.bf16.msra.mxu0 %v2136
    %2323 = vmatprep.subr.bf16.mxu0 %v2167
    %2324 = vmatpush2.bf16.msra.mxu0 %v2166
    %2325 = vmatprep.subr.bf16.mxu0 %v2165
    %2326 = vmatpush2.bf16.msra.mxu0 %v2164
    %2327 = vmatprep.subr.bf16.mxu0 %v2163
    %2328 = vmatpush2.bf16.msra.mxu0 %v2162
    %2329 = vmatprep.subr.bf16.mxu0 %v2161
    %2330 = vmatpush2.bf16.msra.mxu0 %v2160
    %2331 = vmatprep.subr.bf16.mxu0 %v2159
    %2332 = vmatpush2.bf16.msra.mxu0 %v2158
    %2333 = vmatprep.subr.bf16.mxu0 %v2157
    %2334 = vmatpush2.bf16.msra.mxu0 %v2156
    %2335 = vmatprep.subr.bf16.mxu0 %v2155
    %2336 = vmatpush2.bf16.msra.mxu0 %v2154
    %2337 = vmatprep.subr.bf16.mxu0 %v2153
    %2338 = vmatpush2.bf16.msra.mxu0 %v2152
    %2339 = vmatprep.mubr.bf16.mxu0 %v1771
    %2340 = vmatmul.mubr.bf16.gmra.mxu0 %v1770
    %v2341 = vpop.f32.mrf.mxu0
    %v2342 = vadd.f32 %v2299, %v2341
    %v2343 = vpop.f32.mrf.mxu0
    %v2344 = vadd.f32 %v2301, %v2343
    %v2345 = vpop.f32.mrf.mxu0
    %v2346 = vadd.f32 %v2303, %v2345
    %v2347 = vpop.f32.mrf.mxu0
    %v2348 = vadd.f32 %v2305, %v2347
    %2349 = vdwg.mxu0
    %2350 = vmatprep.subr.bf16.mxu0 %v2183
    %2351 = vmatpush1.bf16.msra.mxu0 %v2182
    %2352 = vmatprep.subr.bf16.mxu0 %v2181
    %2353 = vmatpush1.bf16.msra.mxu0 %v2180
    %2354 = vmatprep.subr.bf16.mxu0 %v2179
    %2355 = vmatpush1.bf16.msra.mxu0 %v2178
    %2356 = vmatprep.subr.bf16.mxu0 %v2177
    %2357 = vmatpush1.bf16.msra.mxu0 %v2176
    %2358 = vmatprep.subr.bf16.mxu0 %v2175
    %2359 = vmatpush1.bf16.msra.mxu0 %v2174
    %2360 = vmatprep.subr.bf16.mxu0 %v2173
    %2361 = vmatpush1.bf16.msra.mxu0 %v2172
    %2362 = vmatprep.subr.bf16.mxu0 %v2171
    %2363 = vmatpush1.bf16.msra.mxu0 %v2170
    %2364 = vmatprep.subr.bf16.mxu0 %v2169
    %2365 = vmatpush1.bf16.msra.mxu0 %v2168
    %2366 = vmatprep.subr.bf16.mxu0 0
    %2367 = vmatpush2.bf16.msra.mxu0 0
    %2368 = vmatprep.subr.bf16.mxu0 0
    %2369 = vmatpush2.bf16.msra.mxu0 0
    %2370 = vmatprep.subr.bf16.mxu0 0
    %2371 = vmatpush2.bf16.msra.mxu0 0
    %2372 = vmatprep.subr.bf16.mxu0 0
    %2373 = vmatpush2.bf16.msra.mxu0 0
    %2374 = vmatprep.subr.bf16.mxu0 0
    %2375 = vmatpush2.bf16.msra.mxu0 0
    %2376 = vmatprep.subr.bf16.mxu0 0
    %2377 = vmatpush2.bf16.msra.mxu0 0
    %2378 = vmatprep.subr.bf16.mxu0 0
    %2379 = vmatpush2.bf16.msra.mxu0 0
    %2380 = vmatprep.subr.bf16.mxu0 0
    %2381 = vmatpush2.bf16.msra.mxu0 0
    %2382 = vmatprep.mubr.bf16.mxu0 0
    %2383 = vmatmul.mubr.bf16.gmra.mxu0 %v1772
    %v2384 = vpop.f32.mrf.mxu0
    %v2385 = vadd.f32 %v2342, %v2384
    %v2386 = vpop.f32.mrf.mxu0
    %v2387 = vadd.f32 %v2344, %v2386
    %v2388 = vpop.f32.mrf.mxu0
    %v2389 = vadd.f32 %v2346, %v2388
    %v2390 = vpop.f32.mrf.mxu0
    %v2391 = vadd.f32 %v2348, %v2390
    %2392 = vdwg.mxu0
    %v2393 = vld [vmem:[%s3 + $0x280] sm:$0xff]
    %v2394 = vld [vmem:[%s3 + $0x288] sm:$0xff]
    %v2395 = vld [vmem:[%s3 + $0x290] sm:$0xff]
    %v2396 = vld [vmem:[%s3 + $0x298] sm:$0xff]
    %v2397 = vld [vmem:[%s3 + $0x2a0] sm:$0xff]
    %v2398 = vld [vmem:[%s3 + $0x2a8] sm:$0xff]
    %v2399 = vld [vmem:[%s3 + $0x2b0] sm:$0xff]
    %v2400 = vld [vmem:[%s3 + $0x2b8] sm:$0xff]
    %v2401 = vld [vmem:[%s3 + $0x2c0] sm:$0xff]
    %v2402 = vld [vmem:[%s3 + $0x2c8] sm:$0xff]
    %v2403 = vld [vmem:[%s3 + $0x2d0] sm:$0xff]
    %v2404 = vld [vmem:[%s3 + $0x2d8] sm:$0xff]
    %v2405 = vld [vmem:[%s3 + $0x2e0] sm:$0xff]
    %v2406 = vld [vmem:[%s3 + $0x2e8] sm:$0xff]
    %v2407 = vld [vmem:[%s3 + $0x2f0] sm:$0xff]
    %v2408 = vld [vmem:[%s3 + $0x2f8] sm:$0xff]
    %v2409 = vld [vmem:[%s3 + $0x300] sm:$0xff]
    %v2410 = vld [vmem:[%s3 + $0x308] sm:$0xff]
    %v2411 = vld [vmem:[%s3 + $0x310] sm:$0xff]
    %v2412 = vld [vmem:[%s3 + $0x318] sm:$0xff]
    %v2413 = vld [vmem:[%s3 + $0x320] sm:$0xff]
    %v2414 = vld [vmem:[%s3 + $0x328] sm:$0xff]
    %v2415 = vld [vmem:[%s3 + $0x330] sm:$0xff]
    %v2416 = vld [vmem:[%s3 + $0x338] sm:$0xff]
    %v2417 = vld [vmem:[%s3 + $0x340] sm:$0xff]
    %v2418 = vld [vmem:[%s3 + $0x348] sm:$0xff]
    %v2419 = vld [vmem:[%s3 + $0x350] sm:$0xff]
    %v2420 = vld [vmem:[%s3 + $0x358] sm:$0xff]
    %v2421 = vld [vmem:[%s3 + $0x360] sm:$0xff]
    %v2422 = vld [vmem:[%s3 + $0x368] sm:$0xff]
    %v2423 = vld [vmem:[%s3 + $0x370] sm:$0xff]
    %v2424 = vld [vmem:[%s3 + $0x378] sm:$0xff]
    %v2425 = vld [vmem:[%s3 + $0x380] sm:$0xff]
    %v2426 = vld [vmem:[%s3 + $0x388] sm:$0xff]
    %v2427 = vld [vmem:[%s3 + $0x390] sm:$0xff]
    %v2428 = vld [vmem:[%s3 + $0x398] sm:$0xff]
    %v2429 = vld [vmem:[%s3 + $0x3a0] sm:$0xff]
    %v2430 = vld [vmem:[%s3 + $0x3a8] sm:$0xff]
    %v2431 = vld [vmem:[%s3 + $0x3b0] sm:$0xff]
    %v2432 = vld [vmem:[%s3 + $0x3b8] sm:$0xff]
    %v2433 = vld [vmem:[%s3 + $0x3c0] sm:$0xff]
    %v2434 = vld [vmem:[%s3 + $0x3c8] sm:$0xff]
    %v2435 = vld [vmem:[%s3 + $0x3d0] sm:$0xff]
    %v2436 = vld [vmem:[%s3 + $0x3d8] sm:$0xff]
    %v2437 = vld [vmem:[%s3 + $0x3e0] sm:$0xff]
    %v2438 = vld [vmem:[%s3 + $0x3e8] sm:$0xff]
    %v2439 = vld [vmem:[%s3 + $0x3f0] sm:$0xff]
    %v2440 = vld [vmem:[%s3 + $0x3f8] sm:$0xff]
    %v2441 = vld [vmem:[%s3 + $0x400] sm:$0xff]
    %v2442 = vld [vmem:[%s3 + $0x408] sm:$0xff]
    %v2443 = vld [vmem:[%s3 + $0x410] sm:$0xff]
    %v2444 = vld [vmem:[%s3 + $0x418] sm:$0xff]
    %v2445 = vld [vmem:[%s3 + $0x420] sm:$0xff]
    %v2446 = vld [vmem:[%s3 + $0x428] sm:$0xff]
    %v2447 = vld [vmem:[%s3 + $0x430] sm:$0xff]
    %v2448 = vld [vmem:[%s3 + $0x438] sm:$0xff]
    %v2449 = vld [vmem:[%s3 + $0x440] sm:$0xff]
    %v2450 = vld [vmem:[%s3 + $0x448] sm:$0xff]
    %v2451 = vld [vmem:[%s3 + $0x450] sm:$0xff]
    %v2452 = vld [vmem:[%s3 + $0x458] sm:$0xff]
    %v2453 = vld [vmem:[%s3 + $0x460] sm:$0xff]
    %v2454 = vld [vmem:[%s3 + $0x468] sm:$0xff]
    %v2455 = vld [vmem:[%s3 + $0x470] sm:$0xff]
    %v2456 = vld [vmem:[%s3 + $0x478] sm:$0xff]
    %v2457 = vld [vmem:[%s3 + $0x480] sm:$0xff]
    %v2458 = vld [vmem:[%s3 + $0x488] sm:$0xff]
    %v2459 = vld [vmem:[%s3 + $0x490] sm:$0xff]
    %v2460 = vld [vmem:[%s3 + $0x498] sm:$0xff]
    %v2461 = vld [vmem:[%s3 + $0x4a0] sm:$0xff]
    %v2462 = vld [vmem:[%s3 + $0x4a8] sm:$0xff]
    %v2463 = vld [vmem:[%s3 + $0x4b0] sm:$0xff]
    %v2464 = vld [vmem:[%s3 + $0x4b8] sm:$0xff]
    %v2465 = vld [vmem:[%s3 + $0x4c0] sm:$0xff]
    %v2466 = vld [vmem:[%s3 + $0x4c8] sm:$0xff]
    %v2467 = vld [vmem:[%s3 + $0x4d0] sm:$0xff]
    %v2468 = vld [vmem:[%s3 + $0x4d8] sm:$0xff]
    %v2469 = vld [vmem:[%s3 + $0x4e0] sm:$0xff]
    %v2470 = vld [vmem:[%s3 + $0x4e8] sm:$0xff]
    %v2471 = vld [vmem:[%s3 + $0x4f0] sm:$0xff]
    %v2472 = vld [vmem:[%s3 + $0x4f8] sm:$0xff]
    %v2474 = vshrl.u32 %v1768, 16
    %v2476 = vshll.u32 %v1768, 16
    %v2478 = vrot.slane %v2476, 1
    %v2479 = vor.u32 %v2474, %v2478
    %v2481 = vshrl.u32 %v1769, 16
    %v2483 = vshll.u32 %v1769, 16
    %v2485 = vrot.slane %v2483, 1
    %v2486 = vor.u32 %v2481, %v2485
    %v2488 = vshrl.u32 %v1770, 16
    %v2490 = vshll.u32 %v1770, 16
    %v2492 = vrot.slane %v2490, 1
    %v2493 = vor.u32 %v2488, %v2492
    %v2495 = vshrl.u32 %v1771, 16
    %v2497 = vshll.u32 %v1771, 16
    %v2499 = vrot.slane %v2497, 1
    %v2500 = vor.u32 %v2495, %v2499
    %v2502 = vshrl.u32 %v1772, 16
    %v2504 = vshll.u32 %v1772, 16
    %v2506 = vrot.slane %v2504, 1
    %v2507 = vor.u32 %v2502, %v2506
    %v2593 = vunpack.c.l.b16 %v2393
    %v2594 = vunpack.c.h.b16 %v2393
    %v2595 = vunpack.c.l.b16 %v2394
    %v2596 = vunpack.c.h.b16 %v2394
    %v2597 = vunpack.c.l.b16 %v2395
    %v2598 = vunpack.c.h.b16 %v2395
    %v2599 = vunpack.c.l.b16 %v2396
    %v2600 = vunpack.c.h.b16 %v2396
    %v2601 = vunpack.c.l.b16 %v2397
    %v2602 = vunpack.c.h.b16 %v2397
    %v2603 = vunpack.c.l.b16 %v2398
    %v2604 = vunpack.c.h.b16 %v2398
    %v2605 = vunpack.c.l.b16 %v2399
    %v2606 = vunpack.c.h.b16 %v2399
    %v2607 = vunpack.c.l.b16 %v2400
    %v2608 = vunpack.c.h.b16 %v2400
    %v2609 = vunpack.c.l.b16 %v2401
    %v2610 = vunpack.c.h.b16 %v2401
    %v2611 = vunpack.c.l.b16 %v2402
    %v2612 = vunpack.c.h.b16 %v2402
    %v2613 = vunpack.c.l.b16 %v2403
    %v2614 = vunpack.c.h.b16 %v2403
    %v2615 = vunpack.c.l.b16 %v2404
    %v2616 = vunpack.c.h.b16 %v2404
    %v2617 = vunpack.c.l.b16 %v2405
    %v2618 = vunpack.c.h.b16 %v2405
    %v2619 = vunpack.c.l.b16 %v2406
    %v2620 = vunpack.c.h.b16 %v2406
    %v2621 = vunpack.c.l.b16 %v2407
    %v2622 = vunpack.c.h.b16 %v2407
    %v2623 = vunpack.c.l.b16 %v2408
    %v2624 = vunpack.c.h.b16 %v2408
    %v2625 = vunpack.c.l.b16 %v2409
    %v2626 = vunpack.c.h.b16 %v2409
    %v2627 = vunpack.c.l.b16 %v2410
    %v2628 = vunpack.c.h.b16 %v2410
    %v2629 = vunpack.c.l.b16 %v2411
    %v2630 = vunpack.c.h.b16 %v2411
    %v2631 = vunpack.c.l.b16 %v2412
    %v2632 = vunpack.c.h.b16 %v2412
    %v2633 = vunpack.c.l.b16 %v2413
    %v2634 = vunpack.c.h.b16 %v2413
    %v2635 = vunpack.c.l.b16 %v2414
    %v2636 = vunpack.c.h.b16 %v2414
    %v2637 = vunpack.c.l.b16 %v2415
    %v2638 = vunpack.c.h.b16 %v2415
    %v2639 = vunpack.c.l.b16 %v2416
    %v2640 = vunpack.c.h.b16 %v2416
    %v2641 = vunpack.c.l.b16 %v2417
    %v2642 = vunpack.c.h.b16 %v2417
    %v2643 = vunpack.c.l.b16 %v2418
    %v2644 = vunpack.c.h.b16 %v2418
    %v2645 = vunpack.c.l.b16 %v2419
    %v2646 = vunpack.c.h.b16 %v2419
    %v2647 = vunpack.c.l.b16 %v2420
    %v2648 = vunpack.c.h.b16 %v2420
    %v2649 = vunpack.c.l.b16 %v2421
    %v2650 = vunpack.c.h.b16 %v2421
    %v2651 = vunpack.c.l.b16 %v2422
    %v2652 = vunpack.c.h.b16 %v2422
    %v2653 = vunpack.c.l.b16 %v2423
    %v2654 = vunpack.c.h.b16 %v2423
    %v2655 = vunpack.c.l.b16 %v2424
    %v2656 = vunpack.c.h.b16 %v2424
    %v2657 = vunpack.c.l.b16 %v2425
    %v2658 = vunpack.c.h.b16 %v2425
    %v2659 = vunpack.c.l.b16 %v2426
    %v2660 = vunpack.c.h.b16 %v2426
    %v2661 = vunpack.c.l.b16 %v2427
    %v2662 = vunpack.c.h.b16 %v2427
    %v2663 = vunpack.c.l.b16 %v2428
    %v2664 = vunpack.c.h.b16 %v2428
    %v2665 = vunpack.c.l.b16 %v2429
    %v2666 = vunpack.c.h.b16 %v2429
    %v2667 = vunpack.c.l.b16 %v2430
    %v2668 = vunpack.c.h.b16 %v2430
    %v2669 = vunpack.c.l.b16 %v2431
    %v2670 = vunpack.c.h.b16 %v2431
    %v2671 = vunpack.c.l.b16 %v2432
    %v2672 = vunpack.c.h.b16 %v2432
    %v2673 = vunpack.c.l.b16 %v2433
    %v2674 = vunpack.c.h.b16 %v2433
    %v2675 = vunpack.c.l.b16 %v2434
    %v2676 = vunpack.c.h.b16 %v2434
    %v2677 = vunpack.c.l.b16 %v2435
    %v2678 = vunpack.c.h.b16 %v2435
    %v2679 = vunpack.c.l.b16 %v2436
    %v2680 = vunpack.c.h.b16 %v2436
    %v2681 = vunpack.c.l.b16 %v2437
    %v2682 = vunpack.c.h.b16 %v2437
    %v2683 = vunpack.c.l.b16 %v2438
    %v2684 = vunpack.c.h.b16 %v2438
    %v2685 = vunpack.c.l.b16 %v2439
    %v2686 = vunpack.c.h.b16 %v2439
    %v2687 = vunpack.c.l.b16 %v2440
    %v2688 = vunpack.c.h.b16 %v2440
    %v2689 = vunpack.c.l.b16 %v2441
    %v2690 = vunpack.c.h.b16 %v2441
    %v2691 = vunpack.c.l.b16 %v2442
    %v2692 = vunpack.c.h.b16 %v2442
    %v2693 = vunpack.c.l.b16 %v2443
    %v2694 = vunpack.c.h.b16 %v2443
    %v2695 = vunpack.c.l.b16 %v2444
    %v2696 = vunpack.c.h.b16 %v2444
    %v2697 = vunpack.c.l.b16 %v2445
    %v2698 = vunpack.c.h.b16 %v2445
    %v2699 = vunpack.c.l.b16 %v2446
    %v2700 = vunpack.c.h.b16 %v2446
    %v2701 = vunpack.c.l.b16 %v2447
    %v2702 = vunpack.c.h.b16 %v2447
    %v2703 = vunpack.c.l.b16 %v2448
    %v2704 = vunpack.c.h.b16 %v2448
    %v2705 = vunpack.c.l.b16 %v2449
    %v2706 = vunpack.c.h.b16 %v2449
    %v2707 = vunpack.c.l.b16 %v2450
    %v2708 = vunpack.c.h.b16 %v2450
    %v2709 = vunpack.c.l.b16 %v2451
    %v2710 = vunpack.c.h.b16 %v2451
    %v2711 = vunpack.c.l.b16 %v2452
    %v2712 = vunpack.c.h.b16 %v2452
    %v2713 = vunpack.c.l.b16 %v2453
    %v2714 = vunpack.c.h.b16 %v2453
    %v2715 = vunpack.c.l.b16 %v2454
    %v2716 = vunpack.c.h.b16 %v2454
    %v2717 = vunpack.c.l.b16 %v2455
    %v2718 = vunpack.c.h.b16 %v2455
    %v2719 = vunpack.c.l.b16 %v2456
    %v2720 = vunpack.c.h.b16 %v2456
    %v2721 = vunpack.c.l.b16 %v2457
    %v2722 = vunpack.c.h.b16 %v2457
    %v2723 = vunpack.c.l.b16 %v2458
    %v2724 = vunpack.c.h.b16 %v2458
    %v2725 = vunpack.c.l.b16 %v2459
    %v2726 = vunpack.c.h.b16 %v2459
    %v2727 = vunpack.c.l.b16 %v2460
    %v2728 = vunpack.c.h.b16 %v2460
    %v2729 = vunpack.c.l.b16 %v2461
    %v2730 = vunpack.c.h.b16 %v2461
    %v2731 = vunpack.c.l.b16 %v2462
    %v2732 = vunpack.c.h.b16 %v2462
    %v2733 = vunpack.c.l.b16 %v2463
    %v2734 = vunpack.c.h.b16 %v2463
    %v2735 = vunpack.c.l.b16 %v2464
    %v2736 = vunpack.c.h.b16 %v2464
    %v2737 = vunpack.c.l.b16 %v2465
    %v2738 = vunpack.c.h.b16 %v2465
    %v2739 = vunpack.c.l.b16 %v2466
    %v2740 = vunpack.c.h.b16 %v2466
    %v2741 = vunpack.c.l.b16 %v2467
    %v2742 = vunpack.c.h.b16 %v2467
    %v2743 = vunpack.c.l.b16 %v2468
    %v2744 = vunpack.c.h.b16 %v2468
    %v2745 = vunpack.c.l.b16 %v2469
    %v2746 = vunpack.c.h.b16 %v2469
    %v2747 = vunpack.c.l.b16 %v2470
    %v2748 = vunpack.c.h.b16 %v2470
    %v2749 = vunpack.c.l.b16 %v2471
    %v2750 = vunpack.c.h.b16 %v2471
    %v2751 = vunpack.c.l.b16 %v2472
    %v2752 = vunpack.c.h.b16 %v2472
    %v2753 = vpack.c.b16 %v2595, %v2593
    %v2754 = vpack.c.b16 %v2596, %v2594
    %v2755 = vpack.c.b16 %v2599, %v2597
    %v2756 = vpack.c.b16 %v2600, %v2598
    %v2757 = vpack.c.b16 %v2603, %v2601
    %v2758 = vpack.c.b16 %v2604, %v2602
    %v2759 = vpack.c.b16 %v2607, %v2605
    %v2760 = vpack.c.b16 %v2608, %v2606
    %v2761 = vpack.c.b16 %v2611, %v2609
    %v2762 = vpack.c.b16 %v2612, %v2610
    %v2763 = vpack.c.b16 %v2615, %v2613
    %v2764 = vpack.c.b16 %v2616, %v2614
    %v2765 = vpack.c.b16 %v2619, %v2617
    %v2766 = vpack.c.b16 %v2620, %v2618
    %v2767 = vpack.c.b16 %v2623, %v2621
    %v2768 = vpack.c.b16 %v2624, %v2622
    %v2769 = vpack.c.b16 %v2627, %v2625
    %v2770 = vpack.c.b16 %v2628, %v2626
    %v2771 = vpack.c.b16 %v2631, %v2629
    %v2772 = vpack.c.b16 %v2632, %v2630
    %v2773 = vpack.c.b16 %v2635, %v2633
    %v2774 = vpack.c.b16 %v2636, %v2634
    %v2775 = vpack.c.b16 %v2639, %v2637
    %v2776 = vpack.c.b16 %v2640, %v2638
    %v2777 = vpack.c.b16 %v2643, %v2641
    %v2778 = vpack.c.b16 %v2644, %v2642
    %v2779 = vpack.c.b16 %v2647, %v2645
    %v2780 = vpack.c.b16 %v2648, %v2646
    %v2781 = vpack.c.b16 %v2651, %v2649
    %v2782 = vpack.c.b16 %v2652, %v2650
    %v2783 = vpack.c.b16 %v2655, %v2653
    %v2784 = vpack.c.b16 %v2656, %v2654
    %v2785 = vpack.c.b16 %v2659, %v2657
    %v2786 = vpack.c.b16 %v2660, %v2658
    %v2787 = vpack.c.b16 %v2663, %v2661
    %v2788 = vpack.c.b16 %v2664, %v2662
    %v2789 = vpack.c.b16 %v2667, %v2665
    %v2790 = vpack.c.b16 %v2668, %v2666
    %v2791 = vpack.c.b16 %v2671, %v2669
    %v2792 = vpack.c.b16 %v2672, %v2670
    %v2793 = vpack.c.b16 %v2675, %v2673
    %v2794 = vpack.c.b16 %v2676, %v2674
    %v2795 = vpack.c.b16 %v2679, %v2677
    %v2796 = vpack.c.b16 %v2680, %v2678
    %v2797 = vpack.c.b16 %v2683, %v2681
    %v2798 = vpack.c.b16 %v2684, %v2682
    %v2799 = vpack.c.b16 %v2687, %v2685
    %v2800 = vpack.c.b16 %v2688, %v2686
    %v2801 = vpack.c.b16 %v2691, %v2689
    %v2802 = vpack.c.b16 %v2692, %v2690
    %v2803 = vpack.c.b16 %v2695, %v2693
    %v2804 = vpack.c.b16 %v2696, %v2694
    %v2805 = vpack.c.b16 %v2699, %v2697
    %v2806 = vpack.c.b16 %v2700, %v2698
    %v2807 = vpack.c.b16 %v2703, %v2701
    %v2808 = vpack.c.b16 %v2704, %v2702
    %v2809 = vpack.c.b16 %v2707, %v2705
    %v2810 = vpack.c.b16 %v2708, %v2706
    %v2811 = vpack.c.b16 %v2711, %v2709
    %v2812 = vpack.c.b16 %v2712, %v2710
    %v2813 = vpack.c.b16 %v2715, %v2713
    %v2814 = vpack.c.b16 %v2716, %v2714
    %v2815 = vpack.c.b16 %v2719, %v2717
    %v2816 = vpack.c.b16 %v2720, %v2718
    %v2817 = vpack.c.b16 %v2723, %v2721
    %v2818 = vpack.c.b16 %v2724, %v2722
    %v2819 = vpack.c.b16 %v2727, %v2725
    %v2820 = vpack.c.b16 %v2728, %v2726
    %v2821 = vpack.c.b16 %v2731, %v2729
    %v2822 = vpack.c.b16 %v2732, %v2730
    %v2823 = vpack.c.b16 %v2735, %v2733
    %v2824 = vpack.c.b16 %v2736, %v2734
    %v2825 = vpack.c.b16 %v2739, %v2737
    %v2826 = vpack.c.b16 %v2740, %v2738
    %v2827 = vpack.c.b16 %v2743, %v2741
    %v2828 = vpack.c.b16 %v2744, %v2742
    %v2829 = vpack.c.b16 %v2747, %v2745
    %v2830 = vpack.c.b16 %v2748, %v2746
    %v2831 = vpack.c.b16 %v2751, %v2749
    %v2832 = vpack.c.b16 %v2752, %v2750
    %2913 = vmatprep.subr.bf16.mxu0 %v2768
    %2914 = vmatpush1.bf16.msra.mxu0 %v2767
    %2915 = vmatprep.subr.bf16.mxu0 %v2766
    %2916 = vmatpush1.bf16.msra.mxu0 %v2765
    %2917 = vmatprep.subr.bf16.mxu0 %v2764
    %2918 = vmatpush1.bf16.msra.mxu0 %v2763
    %2919 = vmatprep.subr.bf16.mxu0 %v2762
    %2920 = vmatpush1.bf16.msra.mxu0 %v2761
    %2921 = vmatprep.subr.bf16.mxu0 %v2760
    %2922 = vmatpush1.bf16.msra.mxu0 %v2759
    %2923 = vmatprep.subr.bf16.mxu0 %v2758
    %2924 = vmatpush1.bf16.msra.mxu0 %v2757
    %2925 = vmatprep.subr.bf16.mxu0 %v2756
    %2926 = vmatpush1.bf16.msra.mxu0 %v2755
    %2927 = vmatprep.subr.bf16.mxu0 %v2754
    %2928 = vmatpush1.bf16.msra.mxu0 %v2753
    %2929 = vmatprep.subr.bf16.mxu0 %v2784
    %2930 = vmatpush2.bf16.msra.mxu0 %v2783
    %2931 = vmatprep.subr.bf16.mxu0 %v2782
    %2932 = vmatpush2.bf16.msra.mxu0 %v2781
    %2933 = vmatprep.subr.bf16.mxu0 %v2780
    %2934 = vmatpush2.bf16.msra.mxu0 %v2779
    %2935 = vmatprep.subr.bf16.mxu0 %v2778
    %2936 = vmatpush2.bf16.msra.mxu0 %v2777
    %2937 = vmatprep.subr.bf16.mxu0 %v2776
    %2938 = vmatpush2.bf16.msra.mxu0 %v2775
    %2939 = vmatprep.subr.bf16.mxu0 %v2774
    %2940 = vmatpush2.bf16.msra.mxu0 %v2773
    %2941 = vmatprep.subr.bf16.mxu0 %v2772
    %2942 = vmatpush2.bf16.msra.mxu0 %v2771
    %2943 = vmatprep.subr.bf16.mxu0 %v2770
    %2944 = vmatpush2.bf16.msra.mxu0 %v2769
    %2945 = vmatprep.mubr.bf16.mxu0 %v2486
    %2946 = vmatmul.mubr.bf16.gmra.mxu0 %v2479
    %v2947 = vpop.f32.mrf.mxu0
    %v2948 = vadd.f32 0.0, %v2947
    %v2949 = vpop.f32.mrf.mxu0
    %v2950 = vadd.f32 0.0, %v2949
    %v2951 = vpop.f32.mrf.mxu0
    %v2952 = vadd.f32 0.0, %v2951
    %v2953 = vpop.f32.mrf.mxu0
    %v2954 = vadd.f32 0.0, %v2953
    %2955 = vdwg.mxu0
    %2956 = vmatprep.subr.bf16.mxu0 %v2800
    %2957 = vmatpush1.bf16.msra.mxu0 %v2799
    %2958 = vmatprep.subr.bf16.mxu0 %v2798
    %2959 = vmatpush1.bf16.msra.mxu0 %v2797
    %2960 = vmatprep.subr.bf16.mxu0 %v2796
    %2961 = vmatpush1.bf16.msra.mxu0 %v2795
    %2962 = vmatprep.subr.bf16.mxu0 %v2794
    %2963 = vmatpush1.bf16.msra.mxu0 %v2793
    %2964 = vmatprep.subr.bf16.mxu0 %v2792
    %2965 = vmatpush1.bf16.msra.mxu0 %v2791
    %2966 = vmatprep.subr.bf16.mxu0 %v2790
    %2967 = vmatpush1.bf16.msra.mxu0 %v2789
    %2968 = vmatprep.subr.bf16.mxu0 %v2788
    %2969 = vmatpush1.bf16.msra.mxu0 %v2787
    %2970 = vmatprep.subr.bf16.mxu0 %v2786
    %2971 = vmatpush1.bf16.msra.mxu0 %v2785
    %2972 = vmatprep.subr.bf16.mxu0 %v2816
    %2973 = vmatpush2.bf16.msra.mxu0 %v2815
    %2974 = vmatprep.subr.bf16.mxu0 %v2814
    %2975 = vmatpush2.bf16.msra.mxu0 %v2813
    %2976 = vmatprep.subr.bf16.mxu0 %v2812
    %2977 = vmatpush2.bf16.msra.mxu0 %v2811
    %2978 = vmatprep.subr.bf16.mxu0 %v2810
    %2979 = vmatpush2.bf16.msra.mxu0 %v2809
    %2980 = vmatprep.subr.bf16.mxu0 %v2808
    %2981 = vmatpush2.bf16.msra.mxu0 %v2807
    %2982 = vmatprep.subr.bf16.mxu0 %v2806
    %2983 = vmatpush2.bf16.msra.mxu0 %v2805
    %2984 = vmatprep.subr.bf16.mxu0 %v2804
    %2985 = vmatpush2.bf16.msra.mxu0 %v2803
    %2986 = vmatprep.subr.bf16.mxu0 %v2802
    %2987 = vmatpush2.bf16.msra.mxu0 %v2801
    %2988 = vmatprep.mubr.bf16.mxu0 %v2500
    %2989 = vmatmul.mubr.bf16.gmra.mxu0 %v2493
    %v2990 = vpop.f32.mrf.mxu0
    %v2991 = vadd.f32 %v2948, %v2990
    %v2992 = vpop.f32.mrf.mxu0
    %v2993 = vadd.f32 %v2950, %v2992
    %v2994 = vpop.f32.mrf.mxu0
    %v2995 = vadd.f32 %v2952, %v2994
    %v2996 = vpop.f32.mrf.mxu0
    %v2997 = vadd.f32 %v2954, %v2996
    %2998 = vdwg.mxu0
    %2999 = vmatprep.subr.bf16.mxu0 %v2832
    %3000 = vmatpush1.bf16.msra.mxu0 %v2831
    %3001 = vmatprep.subr.bf16.mxu0 %v2830
    %3002 = vmatpush1.bf16.msra.mxu0 %v2829
    %3003 = vmatprep.subr.bf16.mxu0 %v2828
    %3004 = vmatpush1.bf16.msra.mxu0 %v2827
    %3005 = vmatprep.subr.bf16.mxu0 %v2826
    %3006 = vmatpush1.bf16.msra.mxu0 %v2825
    %3007 = vmatprep.subr.bf16.mxu0 %v2824
    %3008 = vmatpush1.bf16.msra.mxu0 %v2823
    %3009 = vmatprep.subr.bf16.mxu0 %v2822
    %3010 = vmatpush1.bf16.msra.mxu0 %v2821
    %3011 = vmatprep.subr.bf16.mxu0 %v2820
    %3012 = vmatpush1.bf16.msra.mxu0 %v2819
    %3013 = vmatprep.subr.bf16.mxu0 %v2818
    %3014 = vmatpush1.bf16.msra.mxu0 %v2817
    %3015 = vmatprep.subr.bf16.mxu0 0
    %3016 = vmatpush2.bf16.msra.mxu0 0
    %3017 = vmatprep.subr.bf16.mxu0 0
    %3018 = vmatpush2.bf16.msra.mxu0 0
    %3019 = vmatprep.subr.bf16.mxu0 0
    %3020 = vmatpush2.bf16.msra.mxu0 0
    %3021 = vmatprep.subr.bf16.mxu0 0
    %3022 = vmatpush2.bf16.msra.mxu0 0
    %3023 = vmatprep.subr.bf16.mxu0 0
    %3024 = vmatpush2.bf16.msra.mxu0 0
    %3025 = vmatprep.subr.bf16.mxu0 0
    %3026 = vmatpush2.bf16.msra.mxu0 0
    %3027 = vmatprep.subr.bf16.mxu0 0
    %3028 = vmatpush2.bf16.msra.mxu0 0
    %3029 = vmatprep.subr.bf16.mxu0 0
    %3030 = vmatpush2.bf16.msra.mxu0 0
    %3031 = vmatprep.mubr.bf16.mxu0 0
    %3032 = vmatmul.mubr.bf16.gmra.mxu0 %v2507
    %v3033 = vpop.f32.mrf.mxu0
    %v3034 = vadd.f32 %v2991, %v3033
    %v3035 = vpop.f32.mrf.mxu0
    %v3036 = vadd.f32 %v2993, %v3035
    %v3037 = vpop.f32.mrf.mxu0
    %v3038 = vadd.f32 %v2995, %v3037
    %v3039 = vpop.f32.mrf.mxu0
    %v3040 = vadd.f32 %v2997, %v3039
    %3041 = vdwg.mxu0
    %v3042 = vadd.f32 %v2385, %v3034
    %v3043 = vadd.f32 %v2387, %v3036
    %v3044 = vadd.f32 %v2389, %v3038
    %v3045 = vadd.f32 %v2391, %v3040
    %v3046 = vld [vmem:[%s3 + $0x500] sm:$0xff]
    %v3047 = vld [vmem:[%s3 + $0x508] sm:$0xff]
    %v3048 = vld [vmem:[%s3 + $0x510] sm:$0xff]
    %v3049 = vld [vmem:[%s3 + $0x518] sm:$0xff]
    %v3050 = vld [vmem:[%s3 + $0x520] sm:$0xff]
    %v3051 = vld [vmem:[%s3 + $0x528] sm:$0xff]
    %v3052 = vld [vmem:[%s3 + $0x530] sm:$0xff]
    %v3053 = vld [vmem:[%s3 + $0x538] sm:$0xff]
    %v3054 = vld [vmem:[%s3 + $0x540] sm:$0xff]
    %v3055 = vld [vmem:[%s3 + $0x548] sm:$0xff]
    %v3056 = vld [vmem:[%s3 + $0x550] sm:$0xff]
    %v3057 = vld [vmem:[%s3 + $0x558] sm:$0xff]
    %v3058 = vld [vmem:[%s3 + $0x560] sm:$0xff]
    %v3059 = vld [vmem:[%s3 + $0x568] sm:$0xff]
    %v3060 = vld [vmem:[%s3 + $0x570] sm:$0xff]
    %v3061 = vld [vmem:[%s3 + $0x578] sm:$0xff]
    %v3062 = vld [vmem:[%s3 + $0x580] sm:$0xff]
    %v3063 = vld [vmem:[%s3 + $0x588] sm:$0xff]
    %v3064 = vld [vmem:[%s3 + $0x590] sm:$0xff]
    %v3065 = vld [vmem:[%s3 + $0x598] sm:$0xff]
    %v3066 = vld [vmem:[%s3 + $0x5a0] sm:$0xff]
    %v3067 = vld [vmem:[%s3 + $0x5a8] sm:$0xff]
    %v3068 = vld [vmem:[%s3 + $0x5b0] sm:$0xff]
    %v3069 = vld [vmem:[%s3 + $0x5b8] sm:$0xff]
    %v3070 = vld [vmem:[%s3 + $0x5c0] sm:$0xff]
    %v3071 = vld [vmem:[%s3 + $0x5c8] sm:$0xff]
    %v3072 = vld [vmem:[%s3 + $0x5d0] sm:$0xff]
    %v3073 = vld [vmem:[%s3 + $0x5d8] sm:$0xff]
    %v3074 = vld [vmem:[%s3 + $0x5e0] sm:$0xff]
    %v3075 = vld [vmem:[%s3 + $0x5e8] sm:$0xff]
    %v3076 = vld [vmem:[%s3 + $0x5f0] sm:$0xff]
    %v3077 = vld [vmem:[%s3 + $0x5f8] sm:$0xff]
    %v3078 = vld [vmem:[%s3 + $0x600] sm:$0xff]
    %v3079 = vld [vmem:[%s3 + $0x608] sm:$0xff]
    %v3080 = vld [vmem:[%s3 + $0x610] sm:$0xff]
    %v3081 = vld [vmem:[%s3 + $0x618] sm:$0xff]
    %v3082 = vld [vmem:[%s3 + $0x620] sm:$0xff]
    %v3083 = vld [vmem:[%s3 + $0x628] sm:$0xff]
    %v3084 = vld [vmem:[%s3 + $0x630] sm:$0xff]
    %v3085 = vld [vmem:[%s3 + $0x638] sm:$0xff]
    %v3086 = vld [vmem:[%s3 + $0x640] sm:$0xff]
    %v3087 = vld [vmem:[%s3 + $0x648] sm:$0xff]
    %v3088 = vld [vmem:[%s3 + $0x650] sm:$0xff]
    %v3089 = vld [vmem:[%s3 + $0x658] sm:$0xff]
    %v3090 = vld [vmem:[%s3 + $0x660] sm:$0xff]
    %v3091 = vld [vmem:[%s3 + $0x668] sm:$0xff]
    %v3092 = vld [vmem:[%s3 + $0x670] sm:$0xff]
    %v3093 = vld [vmem:[%s3 + $0x678] sm:$0xff]
    %v3094 = vld [vmem:[%s3 + $0x680] sm:$0xff]
    %v3095 = vld [vmem:[%s3 + $0x688] sm:$0xff]
    %v3096 = vld [vmem:[%s3 + $0x690] sm:$0xff]
    %v3097 = vld [vmem:[%s3 + $0x698] sm:$0xff]
    %v3098 = vld [vmem:[%s3 + $0x6a0] sm:$0xff]
    %v3099 = vld [vmem:[%s3 + $0x6a8] sm:$0xff]
    %v3100 = vld [vmem:[%s3 + $0x6b0] sm:$0xff]
    %v3101 = vld [vmem:[%s3 + $0x6b8] sm:$0xff]
    %v3102 = vld [vmem:[%s3 + $0x6c0] sm:$0xff]
    %v3103 = vld [vmem:[%s3 + $0x6c8] sm:$0xff]
    %v3104 = vld [vmem:[%s3 + $0x6d0] sm:$0xff]
    %v3105 = vld [vmem:[%s3 + $0x6d8] sm:$0xff]
    %v3106 = vld [vmem:[%s3 + $0x6e0] sm:$0xff]
    %v3107 = vld [vmem:[%s3 + $0x6e8] sm:$0xff]
    %v3108 = vld [vmem:[%s3 + $0x6f0] sm:$0xff]
    %v3109 = vld [vmem:[%s3 + $0x6f8] sm:$0xff]
    %v3110 = vld [vmem:[%s3 + $0x700] sm:$0xff]
    %v3111 = vld [vmem:[%s3 + $0x708] sm:$0xff]
    %v3112 = vld [vmem:[%s3 + $0x710] sm:$0xff]
    %v3113 = vld [vmem:[%s3 + $0x718] sm:$0xff]
    %v3114 = vld [vmem:[%s3 + $0x720] sm:$0xff]
    %v3115 = vld [vmem:[%s3 + $0x728] sm:$0xff]
    %v3116 = vld [vmem:[%s3 + $0x730] sm:$0xff]
    %v3117 = vld [vmem:[%s3 + $0x738] sm:$0xff]
    %v3118 = vld [vmem:[%s3 + $0x740] sm:$0xff]
    %v3119 = vld [vmem:[%s3 + $0x748] sm:$0xff]
    %v3120 = vld [vmem:[%s3 + $0x750] sm:$0xff]
    %v3121 = vld [vmem:[%s3 + $0x758] sm:$0xff]
    %v3122 = vld [vmem:[%s3 + $0x760] sm:$0xff]
    %v3123 = vld [vmem:[%s3 + $0x768] sm:$0xff]
    %v3124 = vld [vmem:[%s3 + $0x770] sm:$0xff]
    %v3125 = vld [vmem:[%s3 + $0x778] sm:$0xff]
    %v3131 = vrot.slane %v1768, 1
    %v3132 = vrot.slane %v1769, 1
    %v3133 = vrot.slane %v1770, 1
    %v3134 = vrot.slane %v1771, 1
    %v3135 = vrot.slane %v1772, 1
    %v3221 = vunpack.c.l.b16 %v3046
    %v3222 = vunpack.c.h.b16 %v3046
    %v3223 = vunpack.c.l.b16 %v3047
    %v3224 = vunpack.c.h.b16 %v3047
    %v3225 = vunpack.c.l.b16 %v3048
    %v3226 = vunpack.c.h.b16 %v3048
    %v3227 = vunpack.c.l.b16 %v3049
    %v3228 = vunpack.c.h.b16 %v3049
    %v3229 = vunpack.c.l.b16 %v3050
    %v3230 = vunpack.c.h.b16 %v3050
    %v3231 = vunpack.c.l.b16 %v3051
    %v3232 = vunpack.c.h.b16 %v3051
    %v3233 = vunpack.c.l.b16 %v3052
    %v3234 = vunpack.c.h.b16 %v3052
    %v3235 = vunpack.c.l.b16 %v3053
    %v3236 = vunpack.c.h.b16 %v3053
    %v3237 = vunpack.c.l.b16 %v3054
    %v3238 = vunpack.c.h.b16 %v3054
    %v3239 = vunpack.c.l.b16 %v3055
    %v3240 = vunpack.c.h.b16 %v3055
    %v3241 = vunpack.c.l.b16 %v3056
    %v3242 = vunpack.c.h.b16 %v3056
    %v3243 = vunpack.c.l.b16 %v3057
    %v3244 = vunpack.c.h.b16 %v3057
    %v3245 = vunpack.c.l.b16 %v3058
    %v3246 = vunpack.c.h.b16 %v3058
    %v3247 = vunpack.c.l.b16 %v3059
    %v3248 = vunpack.c.h.b16 %v3059
    %v3249 = vunpack.c.l.b16 %v3060
    %v3250 = vunpack.c.h.b16 %v3060
    %v3251 = vunpack.c.l.b16 %v3061
    %v3252 = vunpack.c.h.b16 %v3061
    %v3253 = vunpack.c.l.b16 %v3062
    %v3254 = vunpack.c.h.b16 %v3062
    %v3255 = vunpack.c.l.b16 %v3063
    %v3256 = vunpack.c.h.b16 %v3063
    %v3257 = vunpack.c.l.b16 %v3064
    %v3258 = vunpack.c.h.b16 %v3064
    %v3259 = vunpack.c.l.b16 %v3065
    %v3260 = vunpack.c.h.b16 %v3065
    %v3261 = vunpack.c.l.b16 %v3066
    %v3262 = vunpack.c.h.b16 %v3066
    %v3263 = vunpack.c.l.b16 %v3067
    %v3264 = vunpack.c.h.b16 %v3067
    %v3265 = vunpack.c.l.b16 %v3068
    %v3266 = vunpack.c.h.b16 %v3068
    %v3267 = vunpack.c.l.b16 %v3069
    %v3268 = vunpack.c.h.b16 %v3069
    %v3269 = vunpack.c.l.b16 %v3070
    %v3270 = vunpack.c.h.b16 %v3070
    %v3271 = vunpack.c.l.b16 %v3071
    %v3272 = vunpack.c.h.b16 %v3071
    %v3273 = vunpack.c.l.b16 %v3072
    %v3274 = vunpack.c.h.b16 %v3072
    %v3275 = vunpack.c.l.b16 %v3073
    %v3276 = vunpack.c.h.b16 %v3073
    %v3277 = vunpack.c.l.b16 %v3074
    %v3278 = vunpack.c.h.b16 %v3074
    %v3279 = vunpack.c.l.b16 %v3075
    %v3280 = vunpack.c.h.b16 %v3075
    %v3281 = vunpack.c.l.b16 %v3076
    %v3282 = vunpack.c.h.b16 %v3076
    %v3283 = vunpack.c.l.b16 %v3077
    %v3284 = vunpack.c.h.b16 %v3077
    %v3285 = vunpack.c.l.b16 %v3078
    %v3286 = vunpack.c.h.b16 %v3078
    %v3287 = vunpack.c.l.b16 %v3079
    %v3288 = vunpack.c.h.b16 %v3079
    %v3289 = vunpack.c.l.b16 %v3080
    %v3290 = vunpack.c.h.b16 %v3080
    %v3291 = vunpack.c.l.b16 %v3081
    %v3292 = vunpack.c.h.b16 %v3081
    %v3293 = vunpack.c.l.b16 %v3082
    %v3294 = vunpack.c.h.b16 %v3082
    %v3295 = vunpack.c.l.b16 %v3083
    %v3296 = vunpack.c.h.b16 %v3083
    %v3297 = vunpack.c.l.b16 %v3084
    %v3298 = vunpack.c.h.b16 %v3084
    %v3299 = vunpack.c.l.b16 %v3085
    %v3300 = vunpack.c.h.b16 %v3085
    %v3301 = vunpack.c.l.b16 %v3086
    %v3302 = vunpack.c.h.b16 %v3086
    %v3303 = vunpack.c.l.b16 %v3087
    %v3304 = vunpack.c.h.b16 %v3087
    %v3305 = vunpack.c.l.b16 %v3088
    %v3306 = vunpack.c.h.b16 %v3088
    %v3307 = vunpack.c.l.b16 %v3089
    %v3308 = vunpack.c.h.b16 %v3089
    %v3309 = vunpack.c.l.b16 %v3090
    %v3310 = vunpack.c.h.b16 %v3090
    %v3311 = vunpack.c.l.b16 %v3091
    %v3312 = vunpack.c.h.b16 %v3091
    %v3313 = vunpack.c.l.b16 %v3092
    %v3314 = vunpack.c.h.b16 %v3092
    %v3315 = vunpack.c.l.b16 %v3093
    %v3316 = vunpack.c.h.b16 %v3093
    %v3317 = vunpack.c.l.b16 %v3094
    %v3318 = vunpack.c.h.b16 %v3094
    %v3319 = vunpack.c.l.b16 %v3095
    %v3320 = vunpack.c.h.b16 %v3095
    %v3321 = vunpack.c.l.b16 %v3096
    %v3322 = vunpack.c.h.b16 %v3096
    %v3323 = vunpack.c.l.b16 %v3097
    %v3324 = vunpack.c.h.b16 %v3097
    %v3325 = vunpack.c.l.b16 %v3098
    %v3326 = vunpack.c.h.b16 %v3098
    %v3327 = vunpack.c.l.b16 %v3099
    %v3328 = vunpack.c.h.b16 %v3099
    %v3329 = vunpack.c.l.b16 %v3100
    %v3330 = vunpack.c.h.b16 %v3100
    %v3331 = vunpack.c.l.b16 %v3101
    %v3332 = vunpack.c.h.b16 %v3101
    %v3333 = vunpack.c.l.b16 %v3102
    %v3334 = vunpack.c.h.b16 %v3102
    %v3335 = vunpack.c.l.b16 %v3103
    %v3336 = vunpack.c.h.b16 %v3103
    %v3337 = vunpack.c.l.b16 %v3104
    %v3338 = vunpack.c.h.b16 %v3104
    %v3339 = vunpack.c.l.b16 %v3105
    %v3340 = vunpack.c.h.b16 %v3105
    %v3341 = vunpack.c.l.b16 %v3106
    %v3342 = vunpack.c.h.b16 %v3106
    %v3343 = vunpack.c.l.b16 %v3107
    %v3344 = vunpack.c.h.b16 %v3107
    %v3345 = vunpack.c.l.b16 %v3108
    %v3346 = vunpack.c.h.b16 %v3108
    %v3347 = vunpack.c.l.b16 %v3109
    %v3348 = vunpack.c.h.b16 %v3109
    %v3349 = vunpack.c.l.b16 %v3110
    %v3350 = vunpack.c.h.b16 %v3110
    %v3351 = vunpack.c.l.b16 %v3111
    %v3352 = vunpack.c.h.b16 %v3111
    %v3353 = vunpack.c.l.b16 %v3112
    %v3354 = vunpack.c.h.b16 %v3112
    %v3355 = vunpack.c.l.b16 %v3113
    %v3356 = vunpack.c.h.b16 %v3113
    %v3357 = vunpack.c.l.b16 %v3114
    %v3358 = vunpack.c.h.b16 %v3114
    %v3359 = vunpack.c.l.b16 %v3115
    %v3360 = vunpack.c.h.b16 %v3115
    %v3361 = vunpack.c.l.b16 %v3116
    %v3362 = vunpack.c.h.b16 %v3116
    %v3363 = vunpack.c.l.b16 %v3117
    %v3364 = vunpack.c.h.b16 %v3117
    %v3365 = vunpack.c.l.b16 %v3118
    %v3366 = vunpack.c.h.b16 %v3118
    %v3367 = vunpack.c.l.b16 %v3119
    %v3368 = vunpack.c.h.b16 %v3119
    %v3369 = vunpack.c.l.b16 %v3120
    %v3370 = vunpack.c.h.b16 %v3120
    %v3371 = vunpack.c.l.b16 %v3121
    %v3372 = vunpack.c.h.b16 %v3121
    %v3373 = vunpack.c.l.b16 %v3122
    %v3374 = vunpack.c.h.b16 %v3122
    %v3375 = vunpack.c.l.b16 %v3123
    %v3376 = vunpack.c.h.b16 %v3123
    %v3377 = vunpack.c.l.b16 %v3124
    %v3378 = vunpack.c.h.b16 %v3124
    %v3379 = vunpack.c.l.b16 %v3125
    %v3380 = vunpack.c.h.b16 %v3125
    %v3381 = vpack.c.b16 %v3223, %v3221
    %v3382 = vpack.c.b16 %v3224, %v3222
    %v3383 = vpack.c.b16 %v3227, %v3225
    %v3384 = vpack.c.b16 %v3228, %v3226
    %v3385 = vpack.c.b16 %v3231, %v3229
    %v3386 = vpack.c.b16 %v3232, %v3230
    %v3387 = vpack.c.b16 %v3235, %v3233
    %v3388 = vpack.c.b16 %v3236, %v3234
    %v3389 = vpack.c.b16 %v3239, %v3237
    %v3390 = vpack.c.b16 %v3240, %v3238
    %v3391 = vpack.c.b16 %v3243, %v3241
    %v3392 = vpack.c.b16 %v3244, %v3242
    %v3393 = vpack.c.b16 %v3247, %v3245
    %v3394 = vpack.c.b16 %v3248, %v3246
    %v3395 = vpack.c.b16 %v3251, %v3249
    %v3396 = vpack.c.b16 %v3252, %v3250
    %v3397 = vpack.c.b16 %v3255, %v3253
    %v3398 = vpack.c.b16 %v3256, %v3254
    %v3399 = vpack.c.b16 %v3259, %v3257
    %v3400 = vpack.c.b16 %v3260, %v3258
    %v3401 = vpack.c.b16 %v3263, %v3261
    %v3402 = vpack.c.b16 %v3264, %v3262
    %v3403 = vpack.c.b16 %v3267, %v3265
    %v3404 = vpack.c.b16 %v3268, %v3266
    %v3405 = vpack.c.b16 %v3271, %v3269
    %v3406 = vpack.c.b16 %v3272, %v3270
    %v3407 = vpack.c.b16 %v3275, %v3273
    %v3408 = vpack.c.b16 %v3276, %v3274
    %v3409 = vpack.c.b16 %v3279, %v3277
    %v3410 = vpack.c.b16 %v3280, %v3278
    %v3411 = vpack.c.b16 %v3283, %v3281
    %v3412 = vpack.c.b16 %v3284, %v3282
    %v3413 = vpack.c.b16 %v3287, %v3285
    %v3414 = vpack.c.b16 %v3288, %v3286
    %v3415 = vpack.c.b16 %v3291, %v3289
    %v3416 = vpack.c.b16 %v3292, %v3290
    %v3417 = vpack.c.b16 %v3295, %v3293
    %v3418 = vpack.c.b16 %v3296, %v3294
    %v3419 = vpack.c.b16 %v3299, %v3297
    %v3420 = vpack.c.b16 %v3300, %v3298
    %v3421 = vpack.c.b16 %v3303, %v3301
    %v3422 = vpack.c.b16 %v3304, %v3302
    %v3423 = vpack.c.b16 %v3307, %v3305
    %v3424 = vpack.c.b16 %v3308, %v3306
    %v3425 = vpack.c.b16 %v3311, %v3309
    %v3426 = vpack.c.b16 %v3312, %v3310
    %v3427 = vpack.c.b16 %v3315, %v3313
    %v3428 = vpack.c.b16 %v3316, %v3314
    %v3429 = vpack.c.b16 %v3319, %v3317
    %v3430 = vpack.c.b16 %v3320, %v3318
    %v3431 = vpack.c.b16 %v3323, %v3321
    %v3432 = vpack.c.b16 %v3324, %v3322
    %v3433 = vpack.c.b16 %v3327, %v3325
    %v3434 = vpack.c.b16 %v3328, %v3326
    %v3435 = vpack.c.b16 %v3331, %v3329
    %v3436 = vpack.c.b16 %v3332, %v3330
    %v3437 = vpack.c.b16 %v3335, %v3333
    %v3438 = vpack.c.b16 %v3336, %v3334
    %v3439 = vpack.c.b16 %v3339, %v3337
    %v3440 = vpack.c.b16 %v3340, %v3338
    %v3441 = vpack.c.b16 %v3343, %v3341
    %v3442 = vpack.c.b16 %v3344, %v3342
    %v3443 = vpack.c.b16 %v3347, %v3345
    %v3444 = vpack.c.b16 %v3348, %v3346
    %v3445 = vpack.c.b16 %v3351, %v3349
    %v3446 = vpack.c.b16 %v3352, %v3350
    %v3447 = vpack.c.b16 %v3355, %v3353
    %v3448 = vpack.c.b16 %v3356, %v3354
    %v3449 = vpack.c.b16 %v3359, %v3357
    %v3450 = vpack.c.b16 %v3360, %v3358
    %v3451 = vpack.c.b16 %v3363, %v3361
    %v3452 = vpack.c.b16 %v3364, %v3362
    %v3453 = vpack.c.b16 %v3367, %v3365
    %v3454 = vpack.c.b16 %v3368, %v3366
    %v3455 = vpack.c.b16 %v3371, %v3369
    %v3456 = vpack.c.b16 %v3372, %v3370
    %v3457 = vpack.c.b16 %v3375, %v3373
    %v3458 = vpack.c.b16 %v3376, %v3374
    %v3459 = vpack.c.b16 %v3379, %v3377
    %v3460 = vpack.c.b16 %v3380, %v3378
    %3541 = vmatprep.subr.bf16.mxu0 %v3396
    %3542 = vmatpush1.bf16.msra.mxu0 %v3395
    %3543 = vmatprep.subr.bf16.mxu0 %v3394
    %3544 = vmatpush1.bf16.msra.mxu0 %v3393
    %3545 = vmatprep.subr.bf16.mxu0 %v3392
    %3546 = vmatpush1.bf16.msra.mxu0 %v3391
    %3547 = vmatprep.subr.bf16.mxu0 %v3390
    %3548 = vmatpush1.bf16.msra.mxu0 %v3389
    %3549 = vmatprep.subr.bf16.mxu0 %v3388
    %3550 = vmatpush1.bf16.msra.mxu0 %v3387
    %3551 = vmatprep.subr.bf16.mxu0 %v3386
    %3552 = vmatpush1.bf16.msra.mxu0 %v3385
    %3553 = vmatprep.subr.bf16.mxu0 %v3384
    %3554 = vmatpush1.bf16.msra.mxu0 %v3383
    %3555 = vmatprep.subr.bf16.mxu0 %v3382
    %3556 = vmatpush1.bf16.msra.mxu0 %v3381
    %3557 = vmatprep.subr.bf16.mxu0 %v3412
    %3558 = vmatpush2.bf16.msra.mxu0 %v3411
    %3559 = vmatprep.subr.bf16.mxu0 %v3410
    %3560 = vmatpush2.bf16.msra.mxu0 %v3409
    %3561 = vmatprep.subr.bf16.mxu0 %v3408
    %3562 = vmatpush2.bf16.msra.mxu0 %v3407
    %3563 = vmatprep.subr.bf16.mxu0 %v3406
    %3564 = vmatpush2.bf16.msra.mxu0 %v3405
    %3565 = vmatprep.subr.bf16.mxu0 %v3404
    %3566 = vmatpush2.bf16.msra.mxu0 %v3403
    %3567 = vmatprep.subr.bf16.mxu0 %v3402
    %3568 = vmatpush2.bf16.msra.mxu0 %v3401
    %3569 = vmatprep.subr.bf16.mxu0 %v3400
    %3570 = vmatpush2.bf16.msra.mxu0 %v3399
    %3571 = vmatprep.subr.bf16.mxu0 %v3398
    %3572 = vmatpush2.bf16.msra.mxu0 %v3397
    %3573 = vmatprep.mubr.bf16.mxu0 %v3132
    %3574 = vmatmul.mubr.bf16.gmra.mxu0 %v3131
    %v3575 = vpop.f32.mrf.mxu0
    %v3576 = vadd.f32 0.0, %v3575
    %v3577 = vpop.f32.mrf.mxu0
    %v3578 = vadd.f32 0.0, %v3577
    %v3579 = vpop.f32.mrf.mxu0
    %v3580 = vadd.f32 0.0, %v3579
    %v3581 = vpop.f32.mrf.mxu0
    %v3582 = vadd.f32 0.0, %v3581
    %3583 = vdwg.mxu0
    %3584 = vmatprep.subr.bf16.mxu0 %v3428
    %3585 = vmatpush1.bf16.msra.mxu0 %v3427
    %3586 = vmatprep.subr.bf16.mxu0 %v3426
    %3587 = vmatpush1.bf16.msra.mxu0 %v3425
    %3588 = vmatprep.subr.bf16.mxu0 %v3424
    %3589 = vmatpush1.bf16.msra.mxu0 %v3423
    %3590 = vmatprep.subr.bf16.mxu0 %v3422
    %3591 = vmatpush1.bf16.msra.mxu0 %v3421
    %3592 = vmatprep.subr.bf16.mxu0 %v3420
    %3593 = vmatpush1.bf16.msra.mxu0 %v3419
    %3594 = vmatprep.subr.bf16.mxu0 %v3418
    %3595 = vmatpush1.bf16.msra.mxu0 %v3417
    %3596 = vmatprep.subr.bf16.mxu0 %v3416
    %3597 = vmatpush1.bf16.msra.mxu0 %v3415
    %3598 = vmatprep.subr.bf16.mxu0 %v3414
    %3599 = vmatpush1.bf16.msra.mxu0 %v3413
    %3600 = vmatprep.subr.bf16.mxu0 %v3444
    %3601 = vmatpush2.bf16.msra.mxu0 %v3443
    %3602 = vmatprep.subr.bf16.mxu0 %v3442
    %3603 = vmatpush2.bf16.msra.mxu0 %v3441
    %3604 = vmatprep.subr.bf16.mxu0 %v3440
    %3605 = vmatpush2.bf16.msra.mxu0 %v3439
    %3606 = vmatprep.subr.bf16.mxu0 %v3438
    %3607 = vmatpush2.bf16.msra.mxu0 %v3437
    %3608 = vmatprep.subr.bf16.mxu0 %v3436
    %3609 = vmatpush2.bf16.msra.mxu0 %v3435
    %3610 = vmatprep.subr.bf16.mxu0 %v3434
    %3611 = vmatpush2.bf16.msra.mxu0 %v3433
    %3612 = vmatprep.subr.bf16.mxu0 %v3432
    %3613 = vmatpush2.bf16.msra.mxu0 %v3431
    %3614 = vmatprep.subr.bf16.mxu0 %v3430
    %3615 = vmatpush2.bf16.msra.mxu0 %v3429
    %3616 = vmatprep.mubr.bf16.mxu0 %v3134
    %3617 = vmatmul.mubr.bf16.gmra.mxu0 %v3133
    %v3618 = vpop.f32.mrf.mxu0
    %v3619 = vadd.f32 %v3576, %v3618
    %v3620 = vpop.f32.mrf.mxu0
    %v3621 = vadd.f32 %v3578, %v3620
    %v3622 = vpop.f32.mrf.mxu0
    %v3623 = vadd.f32 %v3580, %v3622
    %v3624 = vpop.f32.mrf.mxu0
    %v3625 = vadd.f32 %v3582, %v3624
    %3626 = vdwg.mxu0
    %3627 = vmatprep.subr.bf16.mxu0 %v3460
    %3628 = vmatpush1.bf16.msra.mxu0 %v3459
    %3629 = vmatprep.subr.bf16.mxu0 %v3458
    %3630 = vmatpush1.bf16.msra.mxu0 %v3457
    %3631 = vmatprep.subr.bf16.mxu0 %v3456
    %3632 = vmatpush1.bf16.msra.mxu0 %v3455
    %3633 = vmatprep.subr.bf16.mxu0 %v3454
    %3634 = vmatpush1.bf16.msra.mxu0 %v3453
    %3635 = vmatprep.subr.bf16.mxu0 %v3452
    %3636 = vmatpush1.bf16.msra.mxu0 %v3451
    %3637 = vmatprep.subr.bf16.mxu0 %v3450
    %3638 = vmatpush1.bf16.msra.mxu0 %v3449
    %3639 = vmatprep.subr.bf16.mxu0 %v3448
    %3640 = vmatpush1.bf16.msra.mxu0 %v3447
    %3641 = vmatprep.subr.bf16.mxu0 %v3446
    %3642 = vmatpush1.bf16.msra.mxu0 %v3445
    %3643 = vmatprep.subr.bf16.mxu0 0
    %3644 = vmatpush2.bf16.msra.mxu0 0
    %3645 = vmatprep.subr.bf16.mxu0 0
    %3646 = vmatpush2.bf16.msra.mxu0 0
    %3647 = vmatprep.subr.bf16.mxu0 0
    %3648 = vmatpush2.bf16.msra.mxu0 0
    %3649 = vmatprep.subr.bf16.mxu0 0
    %3650 = vmatpush2.bf16.msra.mxu0 0
    %3651 = vmatprep.subr.bf16.mxu0 0
    %3652 = vmatpush2.bf16.msra.mxu0 0
    %3653 = vmatprep.subr.bf16.mxu0 0
    %3654 = vmatpush2.bf16.msra.mxu0 0
    %3655 = vmatprep.subr.bf16.mxu0 0
    %3656 = vmatpush2.bf16.msra.mxu0 0
    %3657 = vmatprep.subr.bf16.mxu0 0
    %3658 = vmatpush2.bf16.msra.mxu0 0
    %3659 = vmatprep.mubr.bf16.mxu0 0
    %3660 = vmatmul.mubr.bf16.gmra.mxu0 %v3135
    %v3661 = vpop.f32.mrf.mxu0
    %v3662 = vadd.f32 %v3619, %v3661
    %v3663 = vpop.f32.mrf.mxu0
    %v3664 = vadd.f32 %v3621, %v3663
    %v3665 = vpop.f32.mrf.mxu0
    %v3666 = vadd.f32 %v3623, %v3665
    %v3667 = vpop.f32.mrf.mxu0
    %v3668 = vadd.f32 %v3625, %v3667
    %3669 = vdwg.mxu0
    %v3670 = vadd.f32 %v3042, %v3662
    %v3671 = vadd.f32 %v3043, %v3664
    %v3672 = vadd.f32 %v3044, %v3666
    %v3673 = vadd.f32 %v3045, %v3668
    %v3674 = vmul.f32 %v3670, 0.5
    %v3675 = vmul.f32 %v3671, 0.5
    %v3676 = vmul.f32 %v3672, 0.5
    %v3677 = vmul.f32 %v3673, 0.5
    %v3678 = vmul.f32 %v3670, %v3670
    %v3679 = vmul.f32 %v3671, %v3671
    %v3680 = vmul.f32 %v3672, %v3672
    %v3681 = vmul.f32 %v3673, %v3673
    %v3682 = vmul.f32 %v3678, %v3670
    %v3683 = vmul.f32 %v3679, %v3671
    %v3684 = vmul.f32 %v3680, %v3672
    %v3685 = vmul.f32 %v3681, %v3673
    %v3686 = vmul.f32 %v3682, 0.044715
    %v3687 = vmul.f32 %v3683, 0.044715
    %v3688 = vmul.f32 %v3684, 0.044715
    %v3689 = vmul.f32 %v3685, 0.044715
    %v3690 = vadd.f32 %v3670, %v3686
    %v3691 = vadd.f32 %v3671, %v3687
    %v3692 = vadd.f32 %v3672, %v3688
    %v3693 = vadd.f32 %v3673, %v3689
    %v3694 = vmul.f32 %v3690, 0.7978846
    %v3695 = vmul.f32 %v3691, 0.7978846
    %v3696 = vmul.f32 %v3692, 0.7978846
    %v3697 = vmul.f32 %v3693, 0.7978846
    %v3698 = vtanh.pop %v3694
    %v3699 = vtanh.pop %v3695
    %v3700 = vtanh.pop %v3696
    %v3701 = vtanh.pop %v3697
    %v3702 = vadd.f32 %v3698, 1.0
    %v3703 = vadd.f32 %v3699, 1.0
    %v3704 = vadd.f32 %v3700, 1.0
    %v3705 = vadd.f32 %v3701, 1.0
    %v3706 = vmul.f32 %v3674, %v3702
    %v3707 = vmul.f32 %v3675, %v3703
    %v3708 = vmul.f32 %v3676, %v3704
    %v3709 = vmul.f32 %v3677, %v3705
    %v3710 = vpack.c.bf16 %v3708, %v3706
    %v3711 = vpack.c.bf16 %v3709, %v3707
    %v3712 = vld [vmem:[%s3 + $0x780] sm:$0xff]
    %v3713 = vld [vmem:[%s3 + $0x788] sm:$0xff]
    %v3714 = vld [vmem:[%s3 + $0x790] sm:$0xff]
    %v3715 = vld [vmem:[%s3 + $0x798] sm:$0xff]
    %v3716 = vld [vmem:[%s3 + $0x7a0] sm:$0xff]
    %v3717 = vld [vmem:[%s3 + $0x7a8] sm:$0xff]
    %v3718 = vld [vmem:[%s3 + $0x7b0] sm:$0xff]
    %v3719 = vld [vmem:[%s3 + $0x7b8] sm:$0xff]
    %v3720 = vld [vmem:[%s3 + $0x7c0] sm:$0xff]
    %v3721 = vld [vmem:[%s3 + $0x7c8] sm:$0xff]
    %v3722 = vld [vmem:[%s3 + $0x7d0] sm:$0xff]
    %v3723 = vld [vmem:[%s3 + $0x7d8] sm:$0xff]
    %v3724 = vld [vmem:[%s3 + $0x7e0] sm:$0xff]
    %v3725 = vld [vmem:[%s3 + $0x7e8] sm:$0xff]
    %v3726 = vld [vmem:[%s3 + $0x7f0] sm:$0xff]
    %v3727 = vld [vmem:[%s3 + $0x7f8] sm:$0xff]
    %v3728 = vld [vmem:[%s3 + $0x800] sm:$0xff]
    %v3729 = vld [vmem:[%s3 + $0x808] sm:$0xff]
    %v3730 = vld [vmem:[%s3 + $0x810] sm:$0xff]
    %v3731 = vld [vmem:[%s3 + $0x818] sm:$0xff]
    %v3733 = vlaneseq
    %v3734 = vshrl.u32 %v3733, 7
    %v3735 = vsub.s32 0, %v3734
    %v3736 = vrot.slane %v82, %v3735
    %v3737 = vlaneseq
    %v3738 = vshrl.u32 %v3737, 7
    %v3739 = vsub.s32 1, %v3738
    %v3740 = vrot.slane %v82, %v3739
    %v3763 = vunpack.c.l.b16 %v3712
    %v3764 = vunpack.c.h.b16 %v3712
    %v3765 = vunpack.c.l.b16 %v3713
    %v3766 = vunpack.c.h.b16 %v3713
    %v3767 = vunpack.c.l.b16 %v3714
    %v3768 = vunpack.c.h.b16 %v3714
    %v3769 = vunpack.c.l.b16 %v3715
    %v3770 = vunpack.c.h.b16 %v3715
    %v3771 = vunpack.c.l.b16 %v3716
    %v3772 = vunpack.c.h.b16 %v3716
    %v3773 = vunpack.c.l.b16 %v3717
    %v3774 = vunpack.c.h.b16 %v3717
    %v3775 = vunpack.c.l.b16 %v3718
    %v3776 = vunpack.c.h.b16 %v3718
    %v3777 = vunpack.c.l.b16 %v3719
    %v3778 = vunpack.c.h.b16 %v3719
    %v3779 = vunpack.c.l.b16 %v3720
    %v3780 = vunpack.c.h.b16 %v3720
    %v3781 = vunpack.c.l.b16 %v3721
    %v3782 = vunpack.c.h.b16 %v3721
    %v3783 = vunpack.c.l.b16 %v3722
    %v3784 = vunpack.c.h.b16 %v3722
    %v3785 = vunpack.c.l.b16 %v3723
    %v3786 = vunpack.c.h.b16 %v3723
    %v3787 = vunpack.c.l.b16 %v3724
    %v3788 = vunpack.c.h.b16 %v3724
    %v3789 = vunpack.c.l.b16 %v3725
    %v3790 = vunpack.c.h.b16 %v3725
    %v3791 = vunpack.c.l.b16 %v3726
    %v3792 = vunpack.c.h.b16 %v3726
    %v3793 = vunpack.c.l.b16 %v3727
    %v3794 = vunpack.c.h.b16 %v3727
    %v3795 = vunpack.c.l.b16 %v3728
    %v3796 = vunpack.c.h.b16 %v3728
    %v3797 = vunpack.c.l.b16 %v3729
    %v3798 = vunpack.c.h.b16 %v3729
    %v3799 = vunpack.c.l.b16 %v3730
    %v3800 = vunpack.c.h.b16 %v3730
    %v3801 = vunpack.c.l.b16 %v3731
    %v3802 = vunpack.c.h.b16 %v3731
    %v3803 = vpack.c.b16 %v3765, %v3763
    %v3804 = vpack.c.b16 %v3766, %v3764
    %v3805 = vpack.c.b16 %v3769, %v3767
    %v3806 = vpack.c.b16 %v3770, %v3768
    %v3807 = vpack.c.b16 %v3773, %v3771
    %v3808 = vpack.c.b16 %v3774, %v3772
    %v3809 = vpack.c.b16 %v3777, %v3775
    %v3810 = vpack.c.b16 %v3778, %v3776
    %v3811 = vpack.c.b16 %v3781, %v3779
    %v3812 = vpack.c.b16 %v3782, %v3780
    %v3813 = vpack.c.b16 %v3785, %v3783
    %v3814 = vpack.c.b16 %v3786, %v3784
    %v3815 = vpack.c.b16 %v3789, %v3787
    %v3816 = vpack.c.b16 %v3790, %v3788
    %v3817 = vpack.c.b16 %v3793, %v3791
    %v3818 = vpack.c.b16 %v3794, %v3792
    %v3819 = vpack.c.b16 %v3797, %v3795
    %v3820 = vpack.c.b16 %v3798, %v3796
    %v3821 = vpack.c.b16 %v3801, %v3799
    %v3822 = vpack.c.b16 %v3802, %v3800
    %v3844 = vsel %vm88, %v3711, 0
    %3846 = vmatprep.subr.bf16.mxu0 %v3818
    %3847 = vmatpush1.bf16.msra.mxu0 %v3817
    %3848 = vmatprep.subr.bf16.mxu0 %v3816
    %3849 = vmatpush1.bf16.msra.mxu0 %v3815
    %3850 = vmatprep.subr.bf16.mxu0 %v3814
    %3851 = vmatpush1.bf16.msra.mxu0 %v3813
    %3852 = vmatprep.subr.bf16.mxu0 %v3812
    %3853 = vmatpush1.bf16.msra.mxu0 %v3811
    %3854 = vmatprep.subr.bf16.mxu0 %v3810
    %3855 = vmatpush1.bf16.msra.mxu0 %v3809
    %3856 = vmatprep.subr.bf16.mxu0 %v3808
    %3857 = vmatpush1.bf16.msra.mxu0 %v3807
    %3858 = vmatprep.subr.bf16.mxu0 %v3806
    %3859 = vmatpush1.bf16.msra.mxu0 %v3805
    %3860 = vmatprep.subr.bf16.mxu0 %v3804
    %3861 = vmatpush1.bf16.msra.mxu0 %v3803
    %3862 = vmatprep.subr.bf16.mxu0 0
    %3863 = vmatpush2.bf16.msra.mxu0 0
    %3864 = vmatprep.subr.bf16.mxu0 0
    %3865 = vmatpush2.bf16.msra.mxu0 0
    %3866 = vmatprep.subr.bf16.mxu0 0
    %3867 = vmatpush2.bf16.msra.mxu0 0
    %3868 = vmatprep.subr.bf16.mxu0 0
    %3869 = vmatpush2.bf16.msra.mxu0 0
    %3870 = vmatprep.subr.bf16.mxu0 0
    %3871 = vmatpush2.bf16.msra.mxu0 0
    %3872 = vmatprep.subr.bf16.mxu0 0
    %3873 = vmatpush2.bf16.msra.mxu0 0
    %3874 = vmatprep.subr.bf16.mxu0 %v3822
    %3875 = vmatpush2.bf16.msra.mxu0 %v3821
    %3876 = vmatprep.subr.bf16.mxu0 %v3820
    %3877 = vmatpush2.bf16.msra.mxu0 %v3819
    %3878 = vmatprep.mubr.bf16.mxu0 %v3844
    %3879 = vmatmul.mubr.bf16.gmra.mxu0 %v3710
    %v3880 = vpop.f32.mrf.mxu0
    %v3881 = vadd.f32 %v3736, %v3880
    %v3882 = vpop.f32.mrf.mxu0
    %v3883 = vadd.f32 %v3740, %v3882
    %v3884 = vpop.f32.mrf.mxu0
    %v3885 = vpop.f32.mrf.mxu0
    %3886 = vdwg.mxu0
    %v3887 = vld [vmem:[%s3 + $0x820] sm:$0xff]
    %v3888 = vld [vmem:[%s3 + $0x828] sm:$0xff]
    %v3889 = vld [vmem:[%s3 + $0x830] sm:$0xff]
    %v3890 = vld [vmem:[%s3 + $0x838] sm:$0xff]
    %v3891 = vld [vmem:[%s3 + $0x840] sm:$0xff]
    %v3892 = vld [vmem:[%s3 + $0x848] sm:$0xff]
    %v3893 = vld [vmem:[%s3 + $0x850] sm:$0xff]
    %v3894 = vld [vmem:[%s3 + $0x858] sm:$0xff]
    %v3895 = vld [vmem:[%s3 + $0x860] sm:$0xff]
    %v3896 = vld [vmem:[%s3 + $0x868] sm:$0xff]
    %v3897 = vld [vmem:[%s3 + $0x870] sm:$0xff]
    %v3898 = vld [vmem:[%s3 + $0x878] sm:$0xff]
    %v3899 = vld [vmem:[%s3 + $0x880] sm:$0xff]
    %v3900 = vld [vmem:[%s3 + $0x888] sm:$0xff]
    %v3901 = vld [vmem:[%s3 + $0x890] sm:$0xff]
    %v3902 = vld [vmem:[%s3 + $0x898] sm:$0xff]
    %v3903 = vld [vmem:[%s3 + $0x8a0] sm:$0xff]
    %v3904 = vld [vmem:[%s3 + $0x8a8] sm:$0xff]
    %v3905 = vld [vmem:[%s3 + $0x8b0] sm:$0xff]
    %v3906 = vld [vmem:[%s3 + $0x8b8] sm:$0xff]
    %v3908 = vshrl.u32 %v3710, 16
    %v3910 = vshll.u32 %v3710, 16
    %v3912 = vrot.slane %v3910, 1
    %v3913 = vor.u32 %v3908, %v3912
    %v3914 = vshrl.u32 %v3711, 16
    %v3916 = vshll.u32 %v3711, 16
    %v3918 = vrot.slane %v3916, 1
    %v3919 = vor.u32 %v3914, %v3918
    %v3941 = vunpack.c.l.b16 %v3887
    %v3942 = vunpack.c.h.b16 %v3887
    %v3943 = vunpack.c.l.b16 %v3888
    %v3944 = vunpack.c.h.b16 %v3888
    %v3945 = vunpack.c.l.b16 %v3889
    %v3946 = vunpack.c.h.b16 %v3889
    %v3947 = vunpack.c.l.b16 %v3890
    %v3948 = vunpack.c.h.b16 %v3890
    %v3949 = vunpack.c.l.b16 %v3891
    %v3950 = vunpack.c.h.b16 %v3891
    %v3951 = vunpack.c.l.b16 %v3892
    %v3952 = vunpack.c.h.b16 %v3892
    %v3953 = vunpack.c.l.b16 %v3893
    %v3954 = vunpack.c.h.b16 %v3893
    %v3955 = vunpack.c.l.b16 %v3894
    %v3956 = vunpack.c.h.b16 %v3894
    %v3957 = vunpack.c.l.b16 %v3895
    %v3958 = vunpack.c.h.b16 %v3895
    %v3959 = vunpack.c.l.b16 %v3896
    %v3960 = vunpack.c.h.b16 %v3896
    %v3961 = vunpack.c.l.b16 %v3897
    %v3962 = vunpack.c.h.b16 %v3897
    %v3963 = vunpack.c.l.b16 %v3898
    %v3964 = vunpack.c.h.b16 %v3898
    %v3965 = vunpack.c.l.b16 %v3899
    %v3966 = vunpack.c.h.b16 %v3899
    %v3967 = vunpack.c.l.b16 %v3900
    %v3968 = vunpack.c.h.b16 %v3900
    %v3969 = vunpack.c.l.b16 %v3901
    %v3970 = vunpack.c.h.b16 %v3901
    %v3971 = vunpack.c.l.b16 %v3902
    %v3972 = vunpack.c.h.b16 %v3902
    %v3973 = vunpack.c.l.b16 %v3903
    %v3974 = vunpack.c.h.b16 %v3903
    %v3975 = vunpack.c.l.b16 %v3904
    %v3976 = vunpack.c.h.b16 %v3904
    %v3977 = vunpack.c.l.b16 %v3905
    %v3978 = vunpack.c.h.b16 %v3905
    %v3979 = vunpack.c.l.b16 %v3906
    %v3980 = vunpack.c.h.b16 %v3906
    %v3981 = vpack.c.b16 %v3943, %v3941
    %v3982 = vpack.c.b16 %v3944, %v3942
    %v3983 = vpack.c.b16 %v3947, %v3945
    %v3984 = vpack.c.b16 %v3948, %v3946
    %v3985 = vpack.c.b16 %v3951, %v3949
    %v3986 = vpack.c.b16 %v3952, %v3950
    %v3987 = vpack.c.b16 %v3955, %v3953
    %v3988 = vpack.c.b16 %v3956, %v3954
    %v3989 = vpack.c.b16 %v3959, %v3957
    %v3990 = vpack.c.b16 %v3960, %v3958
    %v3991 = vpack.c.b16 %v3963, %v3961
    %v3992 = vpack.c.b16 %v3964, %v3962
    %v3993 = vpack.c.b16 %v3967, %v3965
    %v3994 = vpack.c.b16 %v3968, %v3966
    %v3995 = vpack.c.b16 %v3971, %v3969
    %v3996 = vpack.c.b16 %v3972, %v3970
    %v3997 = vpack.c.b16 %v3975, %v3973
    %v3998 = vpack.c.b16 %v3976, %v3974
    %v3999 = vpack.c.b16 %v3979, %v3977
    %v4000 = vpack.c.b16 %v3980, %v3978
    %v4022 = vsel %vm88, %v3919, 0
    %4024 = vmatprep.subr.bf16.mxu0 %v3996
    %4025 = vmatpush1.bf16.msra.mxu0 %v3995
    %4026 = vmatprep.subr.bf16.mxu0 %v3994
    %4027 = vmatpush1.bf16.msra.mxu0 %v3993
    %4028 = vmatprep.subr.bf16.mxu0 %v3992
    %4029 = vmatpush1.bf16.msra.mxu0 %v3991
    %4030 = vmatprep.subr.bf16.mxu0 %v3990
    %4031 = vmatpush1.bf16.msra.mxu0 %v3989
    %4032 = vmatprep.subr.bf16.mxu0 %v3988
    %4033 = vmatpush1.bf16.msra.mxu0 %v3987
    %4034 = vmatprep.subr.bf16.mxu0 %v3986
    %4035 = vmatpush1.bf16.msra.mxu0 %v3985
    %4036 = vmatprep.subr.bf16.mxu0 %v3984
    %4037 = vmatpush1.bf16.msra.mxu0 %v3983
    %4038 = vmatprep.subr.bf16.mxu0 %v3982
    %4039 = vmatpush1.bf16.msra.mxu0 %v3981
    %4040 = vmatprep.subr.bf16.mxu0 0
    %4041 = vmatpush2.bf16.msra.mxu0 0
    %4042 = vmatprep.subr.bf16.mxu0 0
    %4043 = vmatpush2.bf16.msra.mxu0 0
    %4044 = vmatprep.subr.bf16.mxu0 0
    %4045 = vmatpush2.bf16.msra.mxu0 0
    %4046 = vmatprep.subr.bf16.mxu0 0
    %4047 = vmatpush2.bf16.msra.mxu0 0
    %4048 = vmatprep.subr.bf16.mxu0 0
    %4049 = vmatpush2.bf16.msra.mxu0 0
    %4050 = vmatprep.subr.bf16.mxu0 0
    %4051 = vmatpush2.bf16.msra.mxu0 0
    %4052 = vmatprep.subr.bf16.mxu0 %v4000
    %4053 = vmatpush2.bf16.msra.mxu0 %v3999
    %4054 = vmatprep.subr.bf16.mxu0 %v3998
    %4055 = vmatpush2.bf16.msra.mxu0 %v3997
    %4056 = vmatprep.mubr.bf16.mxu0 %v4022
    %4057 = vmatmul.mubr.bf16.gmra.mxu0 %v3913
    %v4058 = vpop.f32.mrf.mxu0
    %v4059 = vadd.f32 0.0, %v4058
    %v4060 = vpop.f32.mrf.mxu0
    %v4061 = vadd.f32 0.0, %v4060
    %v4062 = vpop.f32.mrf.mxu0
    %v4063 = vpop.f32.mrf.mxu0
    %4064 = vdwg.mxu0
    %v4065 = vadd.f32 %v3881, %v4059
    %v4066 = vadd.f32 %v3883, %v4061
    %v4067 = vld [vmem:[%s3 + $0x8c0] sm:$0xff]
    %v4068 = vld [vmem:[%s3 + $0x8c8] sm:$0xff]
    %v4069 = vld [vmem:[%s3 + $0x8d0] sm:$0xff]
    %v4070 = vld [vmem:[%s3 + $0x8d8] sm:$0xff]
    %v4071 = vld [vmem:[%s3 + $0x8e0] sm:$0xff]
    %v4072 = vld [vmem:[%s3 + $0x8e8] sm:$0xff]
    %v4073 = vld [vmem:[%s3 + $0x8f0] sm:$0xff]
    %v4074 = vld [vmem:[%s3 + $0x8f8] sm:$0xff]
    %v4075 = vld [vmem:[%s3 + $0x900] sm:$0xff]
    %v4076 = vld [vmem:[%s3 + $0x908] sm:$0xff]
    %v4077 = vld [vmem:[%s3 + $0x910] sm:$0xff]
    %v4078 = vld [vmem:[%s3 + $0x918] sm:$0xff]
    %v4079 = vld [vmem:[%s3 + $0x920] sm:$0xff]
    %v4080 = vld [vmem:[%s3 + $0x928] sm:$0xff]
    %v4081 = vld [vmem:[%s3 + $0x930] sm:$0xff]
    %v4082 = vld [vmem:[%s3 + $0x938] sm:$0xff]
    %v4083 = vld [vmem:[%s3 + $0x940] sm:$0xff]
    %v4084 = vld [vmem:[%s3 + $0x948] sm:$0xff]
    %v4085 = vld [vmem:[%s3 + $0x950] sm:$0xff]
    %v4086 = vld [vmem:[%s3 + $0x958] sm:$0xff]
    %v4089 = vrot.slane %v3710, 1
    %v4090 = vrot.slane %v3711, 1
    %v4112 = vunpack.c.l.b16 %v4067
    %v4113 = vunpack.c.h.b16 %v4067
    %v4114 = vunpack.c.l.b16 %v4068
    %v4115 = vunpack.c.h.b16 %v4068
    %v4116 = vunpack.c.l.b16 %v4069
    %v4117 = vunpack.c.h.b16 %v4069
    %v4118 = vunpack.c.l.b16 %v4070
    %v4119 = vunpack.c.h.b16 %v4070
    %v4120 = vunpack.c.l.b16 %v4071
    %v4121 = vunpack.c.h.b16 %v4071
    %v4122 = vunpack.c.l.b16 %v4072
    %v4123 = vunpack.c.h.b16 %v4072
    %v4124 = vunpack.c.l.b16 %v4073
    %v4125 = vunpack.c.h.b16 %v4073
    %v4126 = vunpack.c.l.b16 %v4074
    %v4127 = vunpack.c.h.b16 %v4074
    %v4128 = vunpack.c.l.b16 %v4075
    %v4129 = vunpack.c.h.b16 %v4075
    %v4130 = vunpack.c.l.b16 %v4076
    %v4131 = vunpack.c.h.b16 %v4076
    %v4132 = vunpack.c.l.b16 %v4077
    %v4133 = vunpack.c.h.b16 %v4077
    %v4134 = vunpack.c.l.b16 %v4078
    %v4135 = vunpack.c.h.b16 %v4078
    %v4136 = vunpack.c.l.b16 %v4079
    %v4137 = vunpack.c.h.b16 %v4079
    %v4138 = vunpack.c.l.b16 %v4080
    %v4139 = vunpack.c.h.b16 %v4080
    %v4140 = vunpack.c.l.b16 %v4081
    %v4141 = vunpack.c.h.b16 %v4081
    %v4142 = vunpack.c.l.b16 %v4082
    %v4143 = vunpack.c.h.b16 %v4082
    %v4144 = vunpack.c.l.b16 %v4083
    %v4145 = vunpack.c.h.b16 %v4083
    %v4146 = vunpack.c.l.b16 %v4084
    %v4147 = vunpack.c.h.b16 %v4084
    %v4148 = vunpack.c.l.b16 %v4085
    %v4149 = vunpack.c.h.b16 %v4085
    %v4150 = vunpack.c.l.b16 %v4086
    %v4151 = vunpack.c.h.b16 %v4086
    %v4152 = vpack.c.b16 %v4114, %v4112
    %v4153 = vpack.c.b16 %v4115, %v4113
    %v4154 = vpack.c.b16 %v4118, %v4116
    %v4155 = vpack.c.b16 %v4119, %v4117
    %v4156 = vpack.c.b16 %v4122, %v4120
    %v4157 = vpack.c.b16 %v4123, %v4121
    %v4158 = vpack.c.b16 %v4126, %v4124
    %v4159 = vpack.c.b16 %v4127, %v4125
    %v4160 = vpack.c.b16 %v4130, %v4128
    %v4161 = vpack.c.b16 %v4131, %v4129
    %v4162 = vpack.c.b16 %v4134, %v4132
    %v4163 = vpack.c.b16 %v4135, %v4133
    %v4164 = vpack.c.b16 %v4138, %v4136
    %v4165 = vpack.c.b16 %v4139, %v4137
    %v4166 = vpack.c.b16 %v4142, %v4140
    %v4167 = vpack.c.b16 %v4143, %v4141
    %v4168 = vpack.c.b16 %v4146, %v4144
    %v4169 = vpack.c.b16 %v4147, %v4145
    %v4170 = vpack.c.b16 %v4150, %v4148
    %v4171 = vpack.c.b16 %v4151, %v4149
    %v4193 = vsel %vm88, %v4090, 0
    %4195 = vmatprep.subr.bf16.mxu0 %v4167
    %4196 = vmatpush1.bf16.msra.mxu0 %v4166
    %4197 = vmatprep.subr.bf16.mxu0 %v4165
    %4198 = vmatpush1.bf16.msra.mxu0 %v4164
    %4199 = vmatprep.subr.bf16.mxu0 %v4163
    %4200 = vmatpush1.bf16.msra.mxu0 %v4162
    %4201 = vmatprep.subr.bf16.mxu0 %v4161
    %4202 = vmatpush1.bf16.msra.mxu0 %v4160
    %4203 = vmatprep.subr.bf16.mxu0 %v4159
    %4204 = vmatpush1.bf16.msra.mxu0 %v4158
    %4205 = vmatprep.subr.bf16.mxu0 %v4157
    %4206 = vmatpush1.bf16.msra.mxu0 %v4156
    %4207 = vmatprep.subr.bf16.mxu0 %v4155
    %4208 = vmatpush1.bf16.msra.mxu0 %v4154
    %4209 = vmatprep.subr.bf16.mxu0 %v4153
    %4210 = vmatpush1.bf16.msra.mxu0 %v4152
    %4211 = vmatprep.subr.bf16.mxu0 0
    %4212 = vmatpush2.bf16.msra.mxu0 0
    %4213 = vmatprep.subr.bf16.mxu0 0
    %4214 = vmatpush2.bf16.msra.mxu0 0
    %4215 = vmatprep.subr.bf16.mxu0 0
    %4216 = vmatpush2.bf16.msra.mxu0 0
    %4217 = vmatprep.subr.bf16.mxu0 0
    %4218 = vmatpush2.bf16.msra.mxu0 0
    %4219 = vmatprep.subr.bf16.mxu0 0
    %4220 = vmatpush2.bf16.msra.mxu0 0
    %4221 = vmatprep.subr.bf16.mxu0 0
    %4222 = vmatpush2.bf16.msra.mxu0 0
    %4223 = vmatprep.subr.bf16.mxu0 %v4171
    %4224 = vmatpush2.bf16.msra.mxu0 %v4170
    %4225 = vmatprep.subr.bf16.mxu0 %v4169
    %4226 = vmatpush2.bf16.msra.mxu0 %v4168
    %4227 = vmatprep.mubr.bf16.mxu0 %v4193
    %4228 = vmatmul.mubr.bf16.gmra.mxu0 %v4089
    %v4229 = vpop.f32.mrf.mxu0
    %v4230 = vadd.f32 0.0, %v4229
    %v4231 = vpop.f32.mrf.mxu0
    %v4232 = vadd.f32 0.0, %v4231
    %v4233 = vpop.f32.mrf.mxu0
    %v4234 = vpop.f32.mrf.mxu0
    %4235 = vdwg.mxu0
    %v4236 = vadd.f32 %v4065, %v4230
    %v4237 = vadd.f32 %v4066, %v4232
    %v4238 = vmul.f32 %v4236, 0.5
    %v4239 = vmul.f32 %v4237, 0.5
    %v4240 = vmul.f32 %v4236, %v4236
    %v4241 = vmul.f32 %v4237, %v4237
    %v4242 = vmul.f32 %v4240, %v4236
    %v4243 = vmul.f32 %v4241, %v4237
    %v4244 = vmul.f32 %v4242, 0.044715
    %v4245 = vmul.f32 %v4243, 0.044715
    %v4246 = vadd.f32 %v4236, %v4244
    %v4247 = vadd.f32 %v4237, %v4245
    %v4248 = vmul.f32 %v4246, 0.7978846
    %v4249 = vmul.f32 %v4247, 0.7978846
    %v4250 = vtanh.pop %v4248
    %v4251 = vtanh.pop %v4249
    %v4252 = vadd.f32 %v4250, 1.0
    %v4253 = vadd.f32 %v4251, 1.0
    %v4254 = vmul.f32 %v4238, %v4252
    %v4255 = vmul.f32 %v4239, %v4253
    %vm4256 = vcmask 647168
    %4257 = vst.msk [vmem:[#allocation2] sm:$0x1] %vm4256, %v4254
    %v4260 = vcombine.low %v4254, %v4255
    %v4262 = vunpack.c.l.s4 1983009808
    %v4263 = vunpack.c.0.s8 %v4262
    %v4264 = vlaneseq
    %v4265 = vshrl.u32 %v4264, 7
    %v4266 = vsub.s32 %v4263, %v4265
    %v4267 = vrot.slane %v4260, %v4266
    %4268 = vrot.lane.b32.xlu0 %v4267, 48
    %v4269 = vpop.permute.xlu0 %4268
    %v4270 = vrot.slane %v4269, 2
    %vm4271 = vcmask 392192
    %v4272 = vsel %vm4271, %v4269, %v4270
    %4274 = vst.msk [vmem:[#allocation2 + $0x1] sm:$0x1] %vm4256, %v4272
    %v4276 = vunpack.c.l.s4 1983009808
    %v4277 = vunpack.c.0.s8 %v4276
    %v4278 = vlaneseq
    %v4279 = vshrl.u32 %v4278, 7
    %v4280 = vsub.s32 %v4277, %v4279
    %v4281 = vrot.slane %v4254, %v4280
    %v4282 = vrot.slane %v4281, 7
    %v4283 = vrot.slane %v4282, 2
    %4284 = vrot.lane.b32.xlu0 %v4283, 80
    %v4285 = vpop.permute.xlu0 %4284
    %v4286 = vrot.slane %v4285, 6
    %vm4287 = vcmask 654336
    %v4288 = vsel %vm4287, %v4286, %v4285
    %vm4290 = vcmask 1041024
    %vm4291 = vcmask 256002
    %vm4292 = vmor %vm4291, %vm4290
    %4293 = vst.msk [vmem:[#allocation2] sm:$0x5] %vm4292, %v4288
    %v4294 = vrot.slane %v4267, 7
    %v4295 = vrot.slane %v4294, 2
    %4297 = vst.msk [vmem:[#allocation2 + $0x1] sm:$0x5] %vm4292, %v4295
    %v4298 = vcombine.high %v4281, %v4281
    %4299 = vrot.lane.b32.xlu0 %v4298, 32
    %v4300 = vpop.permute.xlu0 %4299
    %vm4302 = vcmask 909568
    %4303 = vst.msk [vmem:[#allocation2 + $0x2] sm:$0x1] %vm4302, %v4300
    %v4304 = vcombine.high %v4267, %v4267
    %4305 = vrot.lane.b32.xlu0 %v4304, 80
    %v4306 = vpop.permute.xlu0 %4305
    %v4307 = vrot.slane %v4306, 2
    %v4308 = vsel %vm4287, %v4306, %v4307
    %4310 = vst.msk [vmem:[#allocation2 + $0x3] sm:$0x1] %vm4302, %v4308
    %v4311 = vrot.slane %v4298, 7
    %v4312 = vrot.slane %v4311, 2
    %4313 = vrot.lane.b32.xlu0 %v4312, 112
    %v4314 = vpop.permute.xlu0 %4313
    %v4315 = vrot.slane %v4314, 6
    %vm4316 = vcmask 916480
    %v4317 = vsel %vm4316, %v4315, %v4314
    %vm4319 = vcmask 1041280
    %vm4320 = vcmask 518146
    %vm4321 = vmor %vm4320, %vm4319
    %4322 = vst.msk [vmem:[#allocation2 + $0x2] sm:$0x5] %vm4321, %v4317
    %v4323 = vrot.slane %v4304, 7
    %v4324 = vrot.slane %v4323, 2
    %4325 = vrot.lane.b32.xlu0 %v4324, 32
    %v4326 = vpop.permute.xlu0 %4325
    %v4327 = vrot.slane %v4326, 6
    %v4328 = vsel %vm88, %v4327, %v4326
    %4330 = vst.msk [vmem:[#allocation2 + $0x3] sm:$0x5] %vm4321, %v4328
    %v4331 = vcombine.high %v4254, %v4254
    %v4333 = vunpack.c.l.s4 1983009808
    %v4334 = vunpack.c.0.s8 %v4333
    %v4335 = vlaneseq
    %v4336 = vshrl.u32 %v4335, 7
    %v4337 = vsub.s32 %v4334, %v4336
    %v4338 = vrot.slane %v4331, %v4337
    %4339 = vrot.lane.b32.xlu0 %v4338, 64
    %v4340 = vpop.permute.xlu0 %4339
    %v4341 = vrot.slane %v4340, 6
    %v4342 = vsel %vm675, %v4341, %v4340
    %vm4344 = vcmask 1040896
    %vm4345 = vcmask 124930
    %vm4346 = vmor %vm4345, %vm4344
    %4347 = vst.msk [vmem:[#allocation2 + $0x4] sm:$0x5] %vm4346, %v4342
    %v4348 = vcombine.high %v4254, %v4255
    %v4350 = vunpack.c.l.s4 1983009808
    %v4351 = vunpack.c.0.s8 %v4350
    %v4352 = vlaneseq
    %v4353 = vshrl.u32 %v4352, 7
    %v4354 = vsub.s32 %v4351, %v4353
    %v4355 = vrot.slane %v4348, %v4354
    %4356 = vrot.lane.b32.xlu0 %v4355, 112
    %v4357 = vpop.permute.xlu0 %4356
    %v4358 = vrot.slane %v4357, 2
    %v4359 = vsel %vm4316, %v4357, %v4358
    %4361 = vst.msk [vmem:[#allocation2 + $0x5] sm:$0x5] %vm4346, %v4359
    %v4362 = vrot.slane %v4338, 7
    %v4363 = vrot.slane %v4362, 2
    %4364 = vrot.lane.b32.xlu0 %v4363, 16
    %v4365 = vpop.permute.xlu0 %4364
    %vm4367 = vcmask 778368
    %4368 = vst.msk [vmem:[#allocation2 + $0x6] sm:$0x1] %vm4367, %v4365
    %v4369 = vrot.slane %v4355, 7
    %v4370 = vrot.slane %v4369, 2
    %4371 = vrot.lane.b32.xlu0 %v4370, 64
    %v4372 = vpop.permute.xlu0 %4371
    %v4373 = vrot.slane %v4372, 2
    %v4374 = vsel %vm675, %v4372, %v4373
    %4376 = vst.msk [vmem:[#allocation2 + $0x7] sm:$0x1] %vm4367, %v4374
    %v4377 = vcombine.high %v4338, %v4338
    %4378 = vrot.lane.b32.xlu0 %v4377, 96
    %v4379 = vpop.permute.xlu0 %4378
    %v4380 = vrot.slane %v4379, 6
    %vm4381 = vcmask 785408
    %v4382 = vsel %vm4381, %v4380, %v4379
    %vm4384 = vcmask 1041152
    %vm4385 = vcmask 387074
    %vm4386 = vmor %vm4385, %vm4384
    %4387 = vst.msk [vmem:[#allocation2 + $0x6] sm:$0x5] %vm4386, %v4382
    %v4388 = vcombine.high %v4355, %v4355
    %4389 = vrot.lane.b32.xlu0 %v4388, 16
    %v4390 = vpop.permute.xlu0 %4389
    %v4391 = vrot.slane %v4390, 6
    %vm4392 = vcmask 130048
    %v4393 = vsel %vm4392, %v4391, %v4390
    %4395 = vst.msk [vmem:[#allocation2 + $0x7] sm:$0x5] %vm4386, %v4393
    %v4396 = vrot.slane %v4377, 7
    %v4397 = vrot.slane %v4396, 2
    %4398 = vrot.lane.b32.xlu0 %v4397, 48
    %v4399 = vpop.permute.xlu0 %4398
    %vm4401 = vcmask 1040768
    %4402 = vst.msk [vmem:[#allocation2 + $0x8] sm:$0x1] %vm4401, %v4399
    %v4403 = vrot.slane %v4388, 7
    %v4404 = vrot.slane %v4403, 2
    %4405 = vrot.lane.b32.xlu0 %v4404, 96
    %v4406 = vpop.permute.xlu0 %4405
    %v4407 = vrot.slane %v4406, 2
    %v4408 = vsel %vm4381, %v4406, %v4407
    %4410 = vst.msk [vmem:[#allocation2 + $0x9] sm:$0x1] %vm4401, %v4408
    %v4411 = vld [vmem:[#allocation2] sm:$0xff]
    %v4412 = vld [vmem:[#allocation2 + $0x8] sm:$0x3]
    %v4415 = vcombine.high %v4411, %v4411
    %v4417 = vunpack.c.l.s4 1983009808
    %v4418 = vunpack.c.0.s8 %v4417
    %v4419 = vlaneseq
    %v4420 = vshrl.u32 %v4419, 7
    %v4421 = vsub.s32 %v4418, %v4420
    %v4422 = vrot.slane %v4411, %v4421
    %v4424 = vunpack.c.l.s4 1983009808
    %v4425 = vunpack.c.0.s8 %v4424
    %v4426 = vlaneseq
    %v4427 = vshrl.u32 %v4426, 7
    %v4428 = vsub.s32 %v4425, %v4427
    %v4429 = vrot.slane %v4415, %v4428
    %v4430 = vcombine.high %v4422, %v4422
    %v4431 = vcombine.high %v4429, %v4429
    %v4433 = vunpack.c.l.s4 1983009808
    %v4434 = vunpack.c.0.s8 %v4433
    %v4435 = vlaneseq
    %v4436 = vshrl.u32 %v4435, 7
    %v4437 = vsub.s32 %v4434, %v4436
    %v4438 = vrot.slane %v4412, %v4437
    %v4444 = vpack.c.bf16 %v4422, %v4422
    %v4445 = vpack.c.bf16 %v4430, %v4430
    %v4446 = vpack.c.bf16 %v4429, %v4429
    %v4447 = vpack.c.bf16 %v4431, %v4431
    %v4448 = vpack.c.bf16 %v4438, %v4438
    %v4449 = vld [vmem:[%s3 + $0x960] sm:$0xff]
    %v4450 = vld [vmem:[%s3 + $0x968] sm:$0xff]
    %v4451 = vld [vmem:[%s3 + $0x970] sm:$0xff]
    %v4452 = vld [vmem:[%s3 + $0x978] sm:$0xff]
    %v4453 = vld [vmem:[%s3 + $0x980] sm:$0xff]
    %v4454 = vld [vmem:[%s3 + $0x988] sm:$0xff]
    %v4455 = vld [vmem:[%s3 + $0x990] sm:$0xff]
    %v4456 = vld [vmem:[%s3 + $0x998] sm:$0xff]
    %v4457 = vld [vmem:[%s3 + $0x9a0] sm:$0xff]
    %v4458 = vld [vmem:[%s3 + $0x9a8] sm:$0xff]
    %v4459 = vld [vmem:[%s3 + $0x9b0] sm:$0xff]
    %v4460 = vld [vmem:[%s3 + $0x9b8] sm:$0xff]
    %v4461 = vld [vmem:[%s3 + $0x9c0] sm:$0xff]
    %v4462 = vld [vmem:[%s3 + $0x9c8] sm:$0xff]
    %v4463 = vld [vmem:[%s3 + $0x9d0] sm:$0xff]
    %v4464 = vld [vmem:[%s3 + $0x9d8] sm:$0xff]
    %v4465 = vld [vmem:[%s3 + $0x9e0] sm:$0xff]
    %v4466 = vld [vmem:[%s3 + $0x9e8] sm:$0xff]
    %v4467 = vld [vmem:[%s3 + $0x9f0] sm:$0xff]
    %v4468 = vld [vmem:[%s3 + $0x9f8] sm:$0xff]
    %v4469 = vld [vmem:[%s3 + $0xa00] sm:$0xff]
    %v4470 = vld [vmem:[%s3 + $0xa08] sm:$0xff]
    %v4471 = vld [vmem:[%s3 + $0xa10] sm:$0xff]
    %v4472 = vld [vmem:[%s3 + $0xa18] sm:$0xff]
    %v4473 = vld [vmem:[%s3 + $0xa20] sm:$0xff]
    %v4474 = vld [vmem:[%s3 + $0xa28] sm:$0xff]
    %v4475 = vld [vmem:[%s3 + $0xa30] sm:$0xff]
    %v4476 = vld [vmem:[%s3 + $0xa38] sm:$0xff]
    %v4477 = vld [vmem:[%s3 + $0xa40] sm:$0xff]
    %v4478 = vld [vmem:[%s3 + $0xa48] sm:$0xff]
    %v4479 = vld [vmem:[%s3 + $0xa50] sm:$0xff]
    %v4480 = vld [vmem:[%s3 + $0xa58] sm:$0xff]
    %v4481 = vld [vmem:[%s3 + $0xa60] sm:$0xff]
    %v4482 = vld [vmem:[%s3 + $0xa68] sm:$0xff]
    %v4483 = vld [vmem:[%s3 + $0xa70] sm:$0xff]
    %v4484 = vld [vmem:[%s3 + $0xa78] sm:$0xff]
    %v4485 = vld [vmem:[%s3 + $0xa80] sm:$0xff]
    %v4486 = vld [vmem:[%s3 + $0xa88] sm:$0xff]
    %v4487 = vld [vmem:[%s3 + $0xa90] sm:$0xff]
    %v4488 = vld [vmem:[%s3 + $0xa98] sm:$0xff]
    %v4489 = vld [vmem:[%s3 + $0xaa0] sm:$0xff]
    %v4490 = vld [vmem:[%s3 + $0xaa8] sm:$0xff]
    %v4491 = vld [vmem:[%s3 + $0xab0] sm:$0xff]
    %v4492 = vld [vmem:[%s3 + $0xab8] sm:$0xff]
    %v4493 = vld [vmem:[%s3 + $0xac0] sm:$0xff]
    %v4494 = vld [vmem:[%s3 + $0xac8] sm:$0xff]
    %v4495 = vld [vmem:[%s3 + $0xad0] sm:$0xff]
    %v4496 = vld [vmem:[%s3 + $0xad8] sm:$0xff]
    %v4497 = vld [vmem:[%s3 + $0xae0] sm:$0xff]
    %v4498 = vld [vmem:[%s3 + $0xae8] sm:$0xff]
    %v4499 = vld [vmem:[%s3 + $0xaf0] sm:$0xff]
    %v4500 = vld [vmem:[%s3 + $0xaf8] sm:$0xff]
    %v4501 = vld [vmem:[%s3 + $0xb00] sm:$0xff]
    %v4502 = vld [vmem:[%s3 + $0xb08] sm:$0xff]
    %v4503 = vld [vmem:[%s3 + $0xb10] sm:$0xff]
    %v4504 = vld [vmem:[%s3 + $0xb18] sm:$0xff]
    %v4505 = vld [vmem:[%s3 + $0xb20] sm:$0xff]
    %v4506 = vld [vmem:[%s3 + $0xb28] sm:$0xff]
    %v4507 = vld [vmem:[%s3 + $0xb30] sm:$0xff]
    %v4508 = vld [vmem:[%s3 + $0xb38] sm:$0xff]
    %v4509 = vld [vmem:[%s3 + $0xb40] sm:$0xff]
    %v4510 = vld [vmem:[%s3 + $0xb48] sm:$0xff]
    %v4511 = vld [vmem:[%s3 + $0xb50] sm:$0xff]
    %v4512 = vld [vmem:[%s3 + $0xb58] sm:$0xff]
    %v4513 = vld [vmem:[%s3 + $0xb60] sm:$0xff]
    %v4514 = vld [vmem:[%s3 + $0xb68] sm:$0xff]
    %v4515 = vld [vmem:[%s3 + $0xb70] sm:$0xff]
    %v4516 = vld [vmem:[%s3 + $0xb78] sm:$0xff]
    %v4517 = vld [vmem:[%s3 + $0xb80] sm:$0xff]
    %v4518 = vld [vmem:[%s3 + $0xb88] sm:$0xff]
    %v4519 = vld [vmem:[%s3 + $0xb90] sm:$0xff]
    %v4520 = vld [vmem:[%s3 + $0xb98] sm:$0xff]
    %v4521 = vld [vmem:[%s3 + $0xba0] sm:$0xff]
    %v4522 = vld [vmem:[%s3 + $0xba8] sm:$0xff]
    %v4523 = vld [vmem:[%s3 + $0xbb0] sm:$0xff]
    %v4524 = vld [vmem:[%s3 + $0xbb8] sm:$0xff]
    %v4525 = vld [vmem:[%s3 + $0xbc0] sm:$0xff]
    %v4526 = vld [vmem:[%s3 + $0xbc8] sm:$0xff]
    %v4527 = vld [vmem:[%s3 + $0xbd0] sm:$0xff]
    %v4528 = vld [vmem:[%s3 + $0xbd8] sm:$0xff]
    %v4530 = vlaneseq
    %v4531 = vshrl.u32 %v4530, 7
    %v4532 = vsub.s32 0, %v4531
    %v4533 = vrot.slane %v84, %v4532
    %v4534 = vlaneseq
    %v4535 = vshrl.u32 %v4534, 7
    %v4536 = vsub.s32 1, %v4535
    %v4537 = vrot.slane %v84, %v4536
    %v4620 = vunpack.c.l.b16 %v4449
    %v4621 = vunpack.c.h.b16 %v4449
    %v4622 = vunpack.c.l.b16 %v4450
    %v4623 = vunpack.c.h.b16 %v4450
    %v4624 = vunpack.c.l.b16 %v4451
    %v4625 = vunpack.c.h.b16 %v4451
    %v4626 = vunpack.c.l.b16 %v4452
    %v4627 = vunpack.c.h.b16 %v4452
    %v4628 = vunpack.c.l.b16 %v4453
    %v4629 = vunpack.c.h.b16 %v4453
    %v4630 = vunpack.c.l.b16 %v4454
    %v4631 = vunpack.c.h.b16 %v4454
    %v4632 = vunpack.c.l.b16 %v4455
    %v4633 = vunpack.c.h.b16 %v4455
    %v4634 = vunpack.c.l.b16 %v4456
    %v4635 = vunpack.c.h.b16 %v4456
    %v4636 = vunpack.c.l.b16 %v4457
    %v4637 = vunpack.c.h.b16 %v4457
    %v4638 = vunpack.c.l.b16 %v4458
    %v4639 = vunpack.c.h.b16 %v4458
    %v4640 = vunpack.c.l.b16 %v4459
    %v4641 = vunpack.c.h.b16 %v4459
    %v4642 = vunpack.c.l.b16 %v4460
    %v4643 = vunpack.c.h.b16 %v4460
    %v4644 = vunpack.c.l.b16 %v4461
    %v4645 = vunpack.c.h.b16 %v4461
    %v4646 = vunpack.c.l.b16 %v4462
    %v4647 = vunpack.c.h.b16 %v4462
    %v4648 = vunpack.c.l.b16 %v4463
    %v4649 = vunpack.c.h.b16 %v4463
    %v4650 = vunpack.c.l.b16 %v4464
    %v4651 = vunpack.c.h.b16 %v4464
    %v4652 = vunpack.c.l.b16 %v4465
    %v4653 = vunpack.c.h.b16 %v4465
    %v4654 = vunpack.c.l.b16 %v4466
    %v4655 = vunpack.c.h.b16 %v4466
    %v4656 = vunpack.c.l.b16 %v4467
    %v4657 = vunpack.c.h.b16 %v4467
    %v4658 = vunpack.c.l.b16 %v4468
    %v4659 = vunpack.c.h.b16 %v4468
    %v4660 = vunpack.c.l.b16 %v4469
    %v4661 = vunpack.c.h.b16 %v4469
    %v4662 = vunpack.c.l.b16 %v4470
    %v4663 = vunpack.c.h.b16 %v4470
    %v4664 = vunpack.c.l.b16 %v4471
    %v4665 = vunpack.c.h.b16 %v4471
    %v4666 = vunpack.c.l.b16 %v4472
    %v4667 = vunpack.c.h.b16 %v4472
    %v4668 = vunpack.c.l.b16 %v4473
    %v4669 = vunpack.c.h.b16 %v4473
    %v4670 = vunpack.c.l.b16 %v4474
    %v4671 = vunpack.c.h.b16 %v4474
    %v4672 = vunpack.c.l.b16 %v4475
    %v4673 = vunpack.c.h.b16 %v4475
    %v4674 = vunpack.c.l.b16 %v4476
    %v4675 = vunpack.c.h.b16 %v4476
    %v4676 = vunpack.c.l.b16 %v4477
    %v4677 = vunpack.c.h.b16 %v4477
    %v4678 = vunpack.c.l.b16 %v4478
    %v4679 = vunpack.c.h.b16 %v4478
    %v4680 = vunpack.c.l.b16 %v4479
    %v4681 = vunpack.c.h.b16 %v4479
    %v4682 = vunpack.c.l.b16 %v4480
    %v4683 = vunpack.c.h.b16 %v4480
    %v4684 = vunpack.c.l.b16 %v4481
    %v4685 = vunpack.c.h.b16 %v4481
    %v4686 = vunpack.c.l.b16 %v4482
    %v4687 = vunpack.c.h.b16 %v4482
    %v4688 = vunpack.c.l.b16 %v4483
    %v4689 = vunpack.c.h.b16 %v4483
    %v4690 = vunpack.c.l.b16 %v4484
    %v4691 = vunpack.c.h.b16 %v4484
    %v4692 = vunpack.c.l.b16 %v4485
    %v4693 = vunpack.c.h.b16 %v4485
    %v4694 = vunpack.c.l.b16 %v4486
    %v4695 = vunpack.c.h.b16 %v4486
    %v4696 = vunpack.c.l.b16 %v4487
    %v4697 = vunpack.c.h.b16 %v4487
    %v4698 = vunpack.c.l.b16 %v4488
    %v4699 = vunpack.c.h.b16 %v4488
    %v4700 = vunpack.c.l.b16 %v4489
    %v4701 = vunpack.c.h.b16 %v4489
    %v4702 = vunpack.c.l.b16 %v4490
    %v4703 = vunpack.c.h.b16 %v4490
    %v4704 = vunpack.c.l.b16 %v4491
    %v4705 = vunpack.c.h.b16 %v4491
    %v4706 = vunpack.c.l.b16 %v4492
    %v4707 = vunpack.c.h.b16 %v4492
    %v4708 = vunpack.c.l.b16 %v4493
    %v4709 = vunpack.c.h.b16 %v4493
    %v4710 = vunpack.c.l.b16 %v4494
    %v4711 = vunpack.c.h.b16 %v4494
    %v4712 = vunpack.c.l.b16 %v4495
    %v4713 = vunpack.c.h.b16 %v4495
    %v4714 = vunpack.c.l.b16 %v4496
    %v4715 = vunpack.c.h.b16 %v4496
    %v4716 = vunpack.c.l.b16 %v4497
    %v4717 = vunpack.c.h.b16 %v4497
    %v4718 = vunpack.c.l.b16 %v4498
    %v4719 = vunpack.c.h.b16 %v4498
    %v4720 = vunpack.c.l.b16 %v4499
    %v4721 = vunpack.c.h.b16 %v4499
    %v4722 = vunpack.c.l.b16 %v4500
    %v4723 = vunpack.c.h.b16 %v4500
    %v4724 = vunpack.c.l.b16 %v4501
    %v4725 = vunpack.c.h.b16 %v4501
    %v4726 = vunpack.c.l.b16 %v4502
    %v4727 = vunpack.c.h.b16 %v4502
    %v4728 = vunpack.c.l.b16 %v4503
    %v4729 = vunpack.c.h.b16 %v4503
    %v4730 = vunpack.c.l.b16 %v4504
    %v4731 = vunpack.c.h.b16 %v4504
    %v4732 = vunpack.c.l.b16 %v4505
    %v4733 = vunpack.c.h.b16 %v4505
    %v4734 = vunpack.c.l.b16 %v4506
    %v4735 = vunpack.c.h.b16 %v4506
    %v4736 = vunpack.c.l.b16 %v4507
    %v4737 = vunpack.c.h.b16 %v4507
    %v4738 = vunpack.c.l.b16 %v4508
    %v4739 = vunpack.c.h.b16 %v4508
    %v4740 = vunpack.c.l.b16 %v4509
    %v4741 = vunpack.c.h.b16 %v4509
    %v4742 = vunpack.c.l.b16 %v4510
    %v4743 = vunpack.c.h.b16 %v4510
    %v4744 = vunpack.c.l.b16 %v4511
    %v4745 = vunpack.c.h.b16 %v4511
    %v4746 = vunpack.c.l.b16 %v4512
    %v4747 = vunpack.c.h.b16 %v4512
    %v4748 = vunpack.c.l.b16 %v4513
    %v4749 = vunpack.c.h.b16 %v4513
    %v4750 = vunpack.c.l.b16 %v4514
    %v4751 = vunpack.c.h.b16 %v4514
    %v4752 = vunpack.c.l.b16 %v4515
    %v4753 = vunpack.c.h.b16 %v4515
    %v4754 = vunpack.c.l.b16 %v4516
    %v4755 = vunpack.c.h.b16 %v4516
    %v4756 = vunpack.c.l.b16 %v4517
    %v4757 = vunpack.c.h.b16 %v4517
    %v4758 = vunpack.c.l.b16 %v4518
    %v4759 = vunpack.c.h.b16 %v4518
    %v4760 = vunpack.c.l.b16 %v4519
    %v4761 = vunpack.c.h.b16 %v4519
    %v4762 = vunpack.c.l.b16 %v4520
    %v4763 = vunpack.c.h.b16 %v4520
    %v4764 = vunpack.c.l.b16 %v4521
    %v4765 = vunpack.c.h.b16 %v4521
    %v4766 = vunpack.c.l.b16 %v4522
    %v4767 = vunpack.c.h.b16 %v4522
    %v4768 = vunpack.c.l.b16 %v4523
    %v4769 = vunpack.c.h.b16 %v4523
    %v4770 = vunpack.c.l.b16 %v4524
    %v4771 = vunpack.c.h.b16 %v4524
    %v4772 = vunpack.c.l.b16 %v4525
    %v4773 = vunpack.c.h.b16 %v4525
    %v4774 = vunpack.c.l.b16 %v4526
    %v4775 = vunpack.c.h.b16 %v4526
    %v4776 = vunpack.c.l.b16 %v4527
    %v4777 = vunpack.c.h.b16 %v4527
    %v4778 = vunpack.c.l.b16 %v4528
    %v4779 = vunpack.c.h.b16 %v4528
    %v4780 = vpack.c.b16 %v4622, %v4620
    %v4781 = vpack.c.b16 %v4623, %v4621
    %v4782 = vpack.c.b16 %v4626, %v4624
    %v4783 = vpack.c.b16 %v4627, %v4625
    %v4784 = vpack.c.b16 %v4630, %v4628
    %v4785 = vpack.c.b16 %v4631, %v4629
    %v4786 = vpack.c.b16 %v4634, %v4632
    %v4787 = vpack.c.b16 %v4635, %v4633
    %v4788 = vpack.c.b16 %v4638, %v4636
    %v4789 = vpack.c.b16 %v4639, %v4637
    %v4790 = vpack.c.b16 %v4642, %v4640
    %v4791 = vpack.c.b16 %v4643, %v4641
    %v4792 = vpack.c.b16 %v4646, %v4644
    %v4793 = vpack.c.b16 %v4647, %v4645
    %v4794 = vpack.c.b16 %v4650, %v4648
    %v4795 = vpack.c.b16 %v4651, %v4649
    %v4796 = vpack.c.b16 %v4654, %v4652
    %v4797 = vpack.c.b16 %v4655, %v4653
    %v4798 = vpack.c.b16 %v4658, %v4656
    %v4799 = vpack.c.b16 %v4659, %v4657
    %v4800 = vpack.c.b16 %v4662, %v4660
    %v4801 = vpack.c.b16 %v4663, %v4661
    %v4802 = vpack.c.b16 %v4666, %v4664
    %v4803 = vpack.c.b16 %v4667, %v4665
    %v4804 = vpack.c.b16 %v4670, %v4668
    %v4805 = vpack.c.b16 %v4671, %v4669
    %v4806 = vpack.c.b16 %v4674, %v4672
    %v4807 = vpack.c.b16 %v4675, %v4673
    %v4808 = vpack.c.b16 %v4678, %v4676
    %v4809 = vpack.c.b16 %v4679, %v4677
    %v4810 = vpack.c.b16 %v4682, %v4680
    %v4811 = vpack.c.b16 %v4683, %v4681
    %v4812 = vpack.c.b16 %v4686, %v4684
    %v4813 = vpack.c.b16 %v4687, %v4685
    %v4814 = vpack.c.b16 %v4690, %v4688
    %v4815 = vpack.c.b16 %v4691, %v4689
    %v4816 = vpack.c.b16 %v4694, %v4692
    %v4817 = vpack.c.b16 %v4695, %v4693
    %v4818 = vpack.c.b16 %v4698, %v4696
    %v4819 = vpack.c.b16 %v4699, %v4697
    %v4820 = vpack.c.b16 %v4702, %v4700
    %v4821 = vpack.c.b16 %v4703, %v4701
    %v4822 = vpack.c.b16 %v4706, %v4704
    %v4823 = vpack.c.b16 %v4707, %v4705
    %v4824 = vpack.c.b16 %v4710, %v4708
    %v4825 = vpack.c.b16 %v4711, %v4709
    %v4826 = vpack.c.b16 %v4714, %v4712
    %v4827 = vpack.c.b16 %v4715, %v4713
    %v4828 = vpack.c.b16 %v4718, %v4716
    %v4829 = vpack.c.b16 %v4719, %v4717
    %v4830 = vpack.c.b16 %v4722, %v4720
    %v4831 = vpack.c.b16 %v4723, %v4721
    %v4832 = vpack.c.b16 %v4726, %v4724
    %v4833 = vpack.c.b16 %v4727, %v4725
    %v4834 = vpack.c.b16 %v4730, %v4728
    %v4835 = vpack.c.b16 %v4731, %v4729
    %v4836 = vpack.c.b16 %v4734, %v4732
    %v4837 = vpack.c.b16 %v4735, %v4733
    %v4838 = vpack.c.b16 %v4738, %v4736
    %v4839 = vpack.c.b16 %v4739, %v4737
    %v4840 = vpack.c.b16 %v4742, %v4740
    %v4841 = vpack.c.b16 %v4743, %v4741
    %v4842 = vpack.c.b16 %v4746, %v4744
    %v4843 = vpack.c.b16 %v4747, %v4745
    %v4844 = vpack.c.b16 %v4750, %v4748
    %v4845 = vpack.c.b16 %v4751, %v4749
    %v4846 = vpack.c.b16 %v4754, %v4752
    %v4847 = vpack.c.b16 %v4755, %v4753
    %v4848 = vpack.c.b16 %v4758, %v4756
    %v4849 = vpack.c.b16 %v4759, %v4757
    %v4850 = vpack.c.b16 %v4762, %v4760
    %v4851 = vpack.c.b16 %v4763, %v4761
    %v4852 = vpack.c.b16 %v4766, %v4764
    %v4853 = vpack.c.b16 %v4767, %v4765
    %v4854 = vpack.c.b16 %v4770, %v4768
    %v4855 = vpack.c.b16 %v4771, %v4769
    %v4856 = vpack.c.b16 %v4774, %v4772
    %v4857 = vpack.c.b16 %v4775, %v4773
    %v4858 = vpack.c.b16 %v4778, %v4776
    %v4859 = vpack.c.b16 %v4779, %v4777
    %4940 = vmatprep.subr.bf16.mxu0 %v4795
    %4941 = vmatpush1.bf16.msra.mxu0 %v4794
    %4942 = vmatprep.subr.bf16.mxu0 %v4793
    %4943 = vmatpush1.bf16.msra.mxu0 %v4792
    %4944 = vmatprep.subr.bf16.mxu0 %v4791
    %4945 = vmatpush1.bf16.msra.mxu0 %v4790
    %4946 = vmatprep.subr.bf16.mxu0 %v4789
    %4947 = vmatpush1.bf16.msra.mxu0 %v4788
    %4948 = vmatprep.subr.bf16.mxu0 %v4787
    %4949 = vmatpush1.bf16.msra.mxu0 %v4786
    %4950 = vmatprep.subr.bf16.mxu0 %v4785
    %4951 = vmatpush1.bf16.msra.mxu0 %v4784
    %4952 = vmatprep.subr.bf16.mxu0 %v4783
    %4953 = vmatpush1.bf16.msra.mxu0 %v4782
    %4954 = vmatprep.subr.bf16.mxu0 %v4781
    %4955 = vmatpush1.bf16.msra.mxu0 %v4780
    %4956 = vmatprep.subr.bf16.mxu0 %v4811
    %4957 = vmatpush2.bf16.msra.mxu0 %v4810
    %4958 = vmatprep.subr.bf16.mxu0 %v4809
    %4959 = vmatpush2.bf16.msra.mxu0 %v4808
    %4960 = vmatprep.subr.bf16.mxu0 %v4807
    %4961 = vmatpush2.bf16.msra.mxu0 %v4806
    %4962 = vmatprep.subr.bf16.mxu0 %v4805
    %4963 = vmatpush2.bf16.msra.mxu0 %v4804
    %4964 = vmatprep.subr.bf16.mxu0 %v4803
    %4965 = vmatpush2.bf16.msra.mxu0 %v4802
    %4966 = vmatprep.subr.bf16.mxu0 %v4801
    %4967 = vmatpush2.bf16.msra.mxu0 %v4800
    %4968 = vmatprep.subr.bf16.mxu0 %v4799
    %4969 = vmatpush2.bf16.msra.mxu0 %v4798
    %4970 = vmatprep.subr.bf16.mxu0 %v4797
    %4971 = vmatpush2.bf16.msra.mxu0 %v4796
    %4972 = vmatprep.mubr.bf16.mxu0 %v4445
    %4973 = vmatmul.mubr.bf16.gmra.mxu0 %v4444
    %v4974 = vpop.f32.mrf.mxu0
    %v4975 = vadd.f32 %v4533, %v4974
    %v4976 = vpop.f32.mrf.mxu0
    %v4977 = vadd.f32 %v4537, %v4976
    %v4978 = vpop.f32.mrf.mxu0
    %v4979 = vpop.f32.mrf.mxu0
    %4980 = vdwg.mxu0
    %4981 = vmatprep.subr.bf16.mxu0 %v4827
    %4982 = vmatpush1.bf16.msra.mxu0 %v4826
    %4983 = vmatprep.subr.bf16.mxu0 %v4825
    %4984 = vmatpush1.bf16.msra.mxu0 %v4824
    %4985 = vmatprep.subr.bf16.mxu0 %v4823
    %4986 = vmatpush1.bf16.msra.mxu0 %v4822
    %4987 = vmatprep.subr.bf16.mxu0 %v4821
    %4988 = vmatpush1.bf16.msra.mxu0 %v4820
    %4989 = vmatprep.subr.bf16.mxu0 %v4819
    %4990 = vmatpush1.bf16.msra.mxu0 %v4818
    %4991 = vmatprep.subr.bf16.mxu0 %v4817
    %4992 = vmatpush1.bf16.msra.mxu0 %v4816
    %4993 = vmatprep.subr.bf16.mxu0 %v4815
    %4994 = vmatpush1.bf16.msra.mxu0 %v4814
    %4995 = vmatprep.subr.bf16.mxu0 %v4813
    %4996 = vmatpush1.bf16.msra.mxu0 %v4812
    %4997 = vmatprep.subr.bf16.mxu0 %v4843
    %4998 = vmatpush2.bf16.msra.mxu0 %v4842
    %4999 = vmatprep.subr.bf16.mxu0 %v4841
    %5000 = vmatpush2.bf16.msra.mxu0 %v4840
    %5001 = vmatprep.subr.bf16.mxu0 %v4839
    %5002 = vmatpush2.bf16.msra.mxu0 %v4838
    %5003 = vmatprep.subr.bf16.mxu0 %v4837
    %5004 = vmatpush2.bf16.msra.mxu0 %v4836
    %5005 = vmatprep.subr.bf16.mxu0 %v4835
    %5006 = vmatpush2.bf16.msra.mxu0 %v4834
    %5007 = vmatprep.subr.bf16.mxu0 %v4833
    %5008 = vmatpush2.bf16.msra.mxu0 %v4832
    %5009 = vmatprep.subr.bf16.mxu0 %v4831
    %5010 = vmatpush2.bf16.msra.mxu0 %v4830
    %5011 = vmatprep.subr.bf16.mxu0 %v4829
    %5012 = vmatpush2.bf16.msra.mxu0 %v4828
    %5013 = vmatprep.mubr.bf16.mxu0 %v4447
    %5014 = vmatmul.mubr.bf16.gmra.mxu0 %v4446
    %v5015 = vpop.f32.mrf.mxu0
    %v5016 = vadd.f32 %v4975, %v5015
    %v5017 = vpop.f32.mrf.mxu0
    %v5018 = vadd.f32 %v4977, %v5017
    %v5019 = vpop.f32.mrf.mxu0
    %v5020 = vpop.f32.mrf.mxu0
    %5021 = vdwg.mxu0
    %5022 = vmatprep.subr.bf16.mxu0 %v4859
    %5023 = vmatpush1.bf16.msra.mxu0 %v4858
    %5024 = vmatprep.subr.bf16.mxu0 %v4857
    %5025 = vmatpush1.bf16.msra.mxu0 %v4856
    %5026 = vmatprep.subr.bf16.mxu0 %v4855
    %5027 = vmatpush1.bf16.msra.mxu0 %v4854
    %5028 = vmatprep.subr.bf16.mxu0 %v4853
    %5029 = vmatpush1.bf16.msra.mxu0 %v4852
    %5030 = vmatprep.subr.bf16.mxu0 %v4851
    %5031 = vmatpush1.bf16.msra.mxu0 %v4850
    %5032 = vmatprep.subr.bf16.mxu0 %v4849
    %5033 = vmatpush1.bf16.msra.mxu0 %v4848
    %5034 = vmatprep.subr.bf16.mxu0 %v4847
    %5035 = vmatpush1.bf16.msra.mxu0 %v4846
    %5036 = vmatprep.subr.bf16.mxu0 %v4845
    %5037 = vmatpush1.bf16.msra.mxu0 %v4844
    %5038 = vmatprep.subr.bf16.mxu0 0
    %5039 = vmatpush2.bf16.msra.mxu0 0
    %5040 = vmatprep.subr.bf16.mxu0 0
    %5041 = vmatpush2.bf16.msra.mxu0 0
    %5042 = vmatprep.subr.bf16.mxu0 0
    %5043 = vmatpush2.bf16.msra.mxu0 0
    %5044 = vmatprep.subr.bf16.mxu0 0
    %5045 = vmatpush2.bf16.msra.mxu0 0
    %5046 = vmatprep.subr.bf16.mxu0 0
    %5047 = vmatpush2.bf16.msra.mxu0 0
    %5048 = vmatprep.subr.bf16.mxu0 0
    %5049 = vmatpush2.bf16.msra.mxu0 0
    %5050 = vmatprep.subr.bf16.mxu0 0
    %5051 = vmatpush2.bf16.msra.mxu0 0
    %5052 = vmatprep.subr.bf16.mxu0 0
    %5053 = vmatpush2.bf16.msra.mxu0 0
    %5054 = vmatprep.mubr.bf16.mxu0 0
    %5055 = vmatmul.mubr.bf16.gmra.mxu0 %v4448
    %v5056 = vpop.f32.mrf.mxu0
    %v5057 = vadd.f32 %v5016, %v5056
    %v5058 = vpop.f32.mrf.mxu0
    %v5059 = vadd.f32 %v5018, %v5058
    %v5060 = vpop.f32.mrf.mxu0
    %v5061 = vpop.f32.mrf.mxu0
    %5062 = vdwg.mxu0
    %v5063 = vmul.f32 %v5057, 0.5
    %v5064 = vmul.f32 %v5059, 0.5
    %v5065 = vmul.f32 %v5057, %v5057
    %v5066 = vmul.f32 %v5059, %v5059
    %v5067 = vmul.f32 %v5065, %v5057
    %v5068 = vmul.f32 %v5066, %v5059
    %v5069 = vmul.f32 %v5067, 0.044715
    %v5070 = vmul.f32 %v5068, 0.044715
    %v5071 = vadd.f32 %v5057, %v5069
    %v5072 = vadd.f32 %v5059, %v5070
    %v5073 = vmul.f32 %v5071, 0.7978846
    %v5074 = vmul.f32 %v5072, 0.7978846
    %v5075 = vtanh.pop %v5073
    %v5076 = vtanh.pop %v5074
    %v5077 = vadd.f32 %v5075, 1.0
    %v5078 = vadd.f32 %v5076, 1.0
    %v5079 = vmul.f32 %v5063, %v5077
    %v5080 = vmul.f32 %v5064, %v5078
    %v5081 = vpack.c.bf16 %v5079, %v5079
    %v5082 = vpack.c.bf16 %v5080, %v5080
    %v5083 = vld [vmem:[%s3 + $0xbe0] sm:$0xff]
    %v5084 = vld [vmem:[%s3 + $0xbe8] sm:$0xff]
    %v5085 = vld [vmem:[%s3 + $0xbf0] sm:$0xff]
    %v5086 = vld [vmem:[%s3 + $0xbf8] sm:$0xff]
    %v5087 = vld [vmem:[%s3 + $0xc00] sm:$0xff]
    %v5088 = vld [vmem:[%s3 + $0xc08] sm:$0xff]
    %v5089 = vld [vmem:[%s3 + $0xc10] sm:$0xff]
    %v5090 = vld [vmem:[%s3 + $0xc18] sm:$0xff]
    %v5091 = vld [vmem:[%s3 + $0xc20] sm:$0xff]
    %v5092 = vld [vmem:[%s3 + $0xc28] sm:$0xff]
    %v5093 = vld [vmem:[%s3 + $0xc30] sm:$0xff]
    %v5094 = vld [vmem:[%s3 + $0xc38] sm:$0xff]
    %v5095 = vld [vmem:[%s3 + $0xc40] sm:$0xff]
    %v5096 = vld [vmem:[%s3 + $0xc48] sm:$0xff]
    %v5097 = vld [vmem:[%s3 + $0xc50] sm:$0xff]
    %v5098 = vld [vmem:[%s3 + $0xc58] sm:$0xff]
    %v5099 = vld [vmem:[%s3 + $0xc60] sm:$0xff]
    %v5100 = vld [vmem:[%s3 + $0xc68] sm:$0xff]
    %v5101 = vld [vmem:[%s3 + $0xc70] sm:$0xff]
    %v5102 = vld [vmem:[%s3 + $0xc78] sm:$0xff]
    %v5104 = vlaneseq
    %v5105 = vshrl.u32 %v5104, 7
    %v5106 = vsub.s32 0, %v5105
    %v5107 = vrot.slane %v86, %v5106
    %v5108 = vlaneseq
    %v5109 = vshrl.u32 %v5108, 7
    %v5110 = vsub.s32 1, %v5109
    %v5111 = vrot.slane %v86, %v5110
    %v5134 = vunpack.c.l.b16 %v5083
    %v5135 = vunpack.c.h.b16 %v5083
    %v5136 = vunpack.c.l.b16 %v5084
    %v5137 = vunpack.c.h.b16 %v5084
    %v5138 = vunpack.c.l.b16 %v5085
    %v5139 = vunpack.c.h.b16 %v5085
    %v5140 = vunpack.c.l.b16 %v5086
    %v5141 = vunpack.c.h.b16 %v5086
    %v5142 = vunpack.c.l.b16 %v5087
    %v5143 = vunpack.c.h.b16 %v5087
    %v5144 = vunpack.c.l.b16 %v5088
    %v5145 = vunpack.c.h.b16 %v5088
    %v5146 = vunpack.c.l.b16 %v5089
    %v5147 = vunpack.c.h.b16 %v5089
    %v5148 = vunpack.c.l.b16 %v5090
    %v5149 = vunpack.c.h.b16 %v5090
    %v5150 = vunpack.c.l.b16 %v5091
    %v5151 = vunpack.c.h.b16 %v5091
    %v5152 = vunpack.c.l.b16 %v5092
    %v5153 = vunpack.c.h.b16 %v5092
    %v5154 = vunpack.c.l.b16 %v5093
    %v5155 = vunpack.c.h.b16 %v5093
    %v5156 = vunpack.c.l.b16 %v5094
    %v5157 = vunpack.c.h.b16 %v5094
    %v5158 = vunpack.c.l.b16 %v5095
    %v5159 = vunpack.c.h.b16 %v5095
    %v5160 = vunpack.c.l.b16 %v5096
    %v5161 = vunpack.c.h.b16 %v5096
    %v5162 = vunpack.c.l.b16 %v5097
    %v5163 = vunpack.c.h.b16 %v5097
    %v5164 = vunpack.c.l.b16 %v5098
    %v5165 = vunpack.c.h.b16 %v5098
    %v5166 = vunpack.c.l.b16 %v5099
    %v5167 = vunpack.c.h.b16 %v5099
    %v5168 = vunpack.c.l.b16 %v5100
    %v5169 = vunpack.c.h.b16 %v5100
    %v5170 = vunpack.c.l.b16 %v5101
    %v5171 = vunpack.c.h.b16 %v5101
    %v5172 = vunpack.c.l.b16 %v5102
    %v5173 = vunpack.c.h.b16 %v5102
    %v5174 = vpack.c.b16 %v5136, %v5134
    %v5175 = vpack.c.b16 %v5137, %v5135
    %v5176 = vpack.c.b16 %v5140, %v5138
    %v5177 = vpack.c.b16 %v5141, %v5139
    %v5178 = vpack.c.b16 %v5144, %v5142
    %v5179 = vpack.c.b16 %v5145, %v5143
    %v5180 = vpack.c.b16 %v5148, %v5146
    %v5181 = vpack.c.b16 %v5149, %v5147
    %v5182 = vpack.c.b16 %v5152, %v5150
    %v5183 = vpack.c.b16 %v5153, %v5151
    %v5184 = vpack.c.b16 %v5156, %v5154
    %v5185 = vpack.c.b16 %v5157, %v5155
    %v5186 = vpack.c.b16 %v5160, %v5158
    %v5187 = vpack.c.b16 %v5161, %v5159
    %v5188 = vpack.c.b16 %v5164, %v5162
    %v5189 = vpack.c.b16 %v5165, %v5163
    %v5190 = vpack.c.b16 %v5168, %v5166
    %v5191 = vpack.c.b16 %v5169, %v5167
    %v5192 = vpack.c.b16 %v5172, %v5170
    %v5193 = vpack.c.b16 %v5173, %v5171
    %v5215 = vsel %vm88, %v5082, 0
    %5217 = vmatprep.subr.bf16.mxu0 %v5189
    %5218 = vmatpush1.bf16.msra.mxu0 %v5188
    %5219 = vmatprep.subr.bf16.mxu0 %v5187
    %5220 = vmatpush1.bf16.msra.mxu0 %v5186
    %5221 = vmatprep.subr.bf16.mxu0 %v5185
    %5222 = vmatpush1.bf16.msra.mxu0 %v5184
    %5223 = vmatprep.subr.bf16.mxu0 %v5183
    %5224 = vmatpush1.bf16.msra.mxu0 %v5182
    %5225 = vmatprep.subr.bf16.mxu0 %v5181
    %5226 = vmatpush1.bf16.msra.mxu0 %v5180
    %5227 = vmatprep.subr.bf16.mxu0 %v5179
    %5228 = vmatpush1.bf16.msra.mxu0 %v5178
    %5229 = vmatprep.subr.bf16.mxu0 %v5177
    %5230 = vmatpush1.bf16.msra.mxu0 %v5176
    %5231 = vmatprep.subr.bf16.mxu0 %v5175
    %5232 = vmatpush1.bf16.msra.mxu0 %v5174
    %5233 = vmatprep.subr.bf16.mxu0 0
    %5234 = vmatpush2.bf16.msra.mxu0 0
    %5235 = vmatprep.subr.bf16.mxu0 0
    %5236 = vmatpush2.bf16.msra.mxu0 0
    %5237 = vmatprep.subr.bf16.mxu0 0
    %5238 = vmatpush2.bf16.msra.mxu0 0
    %5239 = vmatprep.subr.bf16.mxu0 0
    %5240 = vmatpush2.bf16.msra.mxu0 0
    %5241 = vmatprep.subr.bf16.mxu0 0
    %5242 = vmatpush2.bf16.msra.mxu0 0
    %5243 = vmatprep.subr.bf16.mxu0 0
    %5244 = vmatpush2.bf16.msra.mxu0 0
    %5245 = vmatprep.subr.bf16.mxu0 %v5193
    %5246 = vmatpush2.bf16.msra.mxu0 %v5192
    %5247 = vmatprep.subr.bf16.mxu0 %v5191
    %5248 = vmatpush2.bf16.msra.mxu0 %v5190
    %5249 = vmatprep.mubr.bf16.mxu0 %v5215
    %5250 = vmatmul.mubr.bf16.gmra.mxu0 %v5081
    %v5251 = vpop.f32.mrf.mxu0
    %v5252 = vadd.f32 %v5107, %v5251
    %v5253 = vpop.f32.mrf.mxu0
    %v5254 = vadd.f32 %v5111, %v5253
    %v5255 = vpop.f32.mrf.mxu0
    %v5256 = vpop.f32.mrf.mxu0
    %5257 = vdwg.mxu0
    %v5258 = vmul.f32 %v5252, 0.5
    %v5259 = vmul.f32 %v5254, 0.5
    %v5260 = vmul.f32 %v5252, %v5252
    %v5261 = vmul.f32 %v5254, %v5254
    %v5262 = vmul.f32 %v5260, %v5252
    %v5263 = vmul.f32 %v5261, %v5254
    %v5264 = vmul.f32 %v5262, 0.044715
    %v5265 = vmul.f32 %v5263, 0.044715
    %v5266 = vadd.f32 %v5252, %v5264
    %v5267 = vadd.f32 %v5254, %v5265
    %v5268 = vmul.f32 %v5266, 0.7978846
    %v5269 = vmul.f32 %v5267, 0.7978846
    %v5270 = vtanh.pop %v5268
    %v5271 = vtanh.pop %v5269
    %v5272 = vadd.f32 %v5270, 1.0
    %v5273 = vadd.f32 %v5271, 1.0
    %v5274 = vmul.f32 %v5258, %v5272
    %v5275 = vmul.f32 %v5259, %v5273
    %v5276 = vpack.c.bf16 %v5274, %v5274
    %v5277 = vpack.c.bf16 %v5275, %v5275
    %v5278 = vld [vmem:[%s3 + $0xc80] sm:$0xff]
    %v5279 = vld [vmem:[%s3 + $0xc88] sm:$0xff]
    %v5280 = vld [vmem:[%s3 + $0xc90] sm:$0xff]
    %v5281 = vld [vmem:[%s3 + $0xc98] sm:$0xff]
    %v5282 = vld [vmem:[%s3 + $0xca0] sm:$0xff]
    %v5283 = vld [vmem:[%s3 + $0xca8] sm:$0xff]
    %v5284 = vld [vmem:[%s3 + $0xcb0] sm:$0xff]
    %v5285 = vld [vmem:[%s3 + $0xcb8] sm:$0xff]
    %v5286 = vld [vmem:[%s3 + $0xcc0] sm:$0xff]
    %v5287 = vld [vmem:[%s3 + $0xcc8] sm:$0xff]
    %v5288 = vld [vmem:[%s3 + $0xcd0] sm:$0xff]
    %v5289 = vld [vmem:[%s3 + $0xcd8] sm:$0xff]
    %v5290 = vld [vmem:[%s3 + $0xce0] sm:$0xff]
    %v5291 = vld [vmem:[%s3 + $0xce8] sm:$0xff]
    %v5292 = vld [vmem:[%s3 + $0xcf0] sm:$0xff]
    %v5293 = vld [vmem:[%s3 + $0xcf8] sm:$0xff]
    %v5294 = vld [vmem:[%s3 + $0xd00] sm:$0xff]
    %v5295 = vld [vmem:[%s3 + $0xd08] sm:$0xff]
    %v5296 = vld [vmem:[%s3 + $0xd10] sm:$0xff]
    %v5297 = vld [vmem:[%s3 + $0xd18] sm:$0xff]
    %v5318 = vunpack.c.l.b16 %v5278
    %v5319 = vunpack.c.h.b16 %v5278
    %v5320 = vunpack.c.l.b16 %v5279
    %v5321 = vunpack.c.h.b16 %v5279
    %v5322 = vunpack.c.l.b16 %v5280
    %v5323 = vunpack.c.h.b16 %v5280
    %v5324 = vunpack.c.l.b16 %v5281
    %v5325 = vunpack.c.h.b16 %v5281
    %v5326 = vunpack.c.l.b16 %v5282
    %v5327 = vunpack.c.h.b16 %v5282
    %v5328 = vunpack.c.l.b16 %v5283
    %v5329 = vunpack.c.h.b16 %v5283
    %v5330 = vunpack.c.l.b16 %v5284
    %v5331 = vunpack.c.h.b16 %v5284
    %v5332 = vunpack.c.l.b16 %v5285
    %v5333 = vunpack.c.h.b16 %v5285
    %v5334 = vunpack.c.l.b16 %v5286
    %v5335 = vunpack.c.h.b16 %v5286
    %v5336 = vunpack.c.l.b16 %v5287
    %v5337 = vunpack.c.h.b16 %v5287
    %v5338 = vunpack.c.l.b16 %v5288
    %v5339 = vunpack.c.h.b16 %v5288
    %v5340 = vunpack.c.l.b16 %v5289
    %v5341 = vunpack.c.h.b16 %v5289
    %v5342 = vunpack.c.l.b16 %v5290
    %v5343 = vunpack.c.h.b16 %v5290
    %v5344 = vunpack.c.l.b16 %v5291
    %v5345 = vunpack.c.h.b16 %v5291
    %v5346 = vunpack.c.l.b16 %v5292
    %v5347 = vunpack.c.h.b16 %v5292
    %v5348 = vunpack.c.l.b16 %v5293
    %v5349 = vunpack.c.h.b16 %v5293
    %v5350 = vunpack.c.l.b16 %v5294
    %v5351 = vunpack.c.h.b16 %v5294
    %v5352 = vunpack.c.l.b16 %v5295
    %v5353 = vunpack.c.h.b16 %v5295
    %v5354 = vunpack.c.l.b16 %v5296
    %v5355 = vunpack.c.h.b16 %v5296
    %v5356 = vunpack.c.l.b16 %v5297
    %v5357 = vunpack.c.h.b16 %v5297
    %v5358 = vpack.c.b16 %v5320, %v5318
    %v5359 = vpack.c.b16 %v5321, %v5319
    %v5360 = vpack.c.b16 %v5324, %v5322
    %v5361 = vpack.c.b16 %v5325, %v5323
    %v5362 = vpack.c.b16 %v5328, %v5326
    %v5363 = vpack.c.b16 %v5329, %v5327
    %v5364 = vpack.c.b16 %v5332, %v5330
    %v5365 = vpack.c.b16 %v5333, %v5331
    %v5366 = vpack.c.b16 %v5336, %v5334
    %v5367 = vpack.c.b16 %v5337, %v5335
    %v5368 = vpack.c.b16 %v5340, %v5338
    %v5369 = vpack.c.b16 %v5341, %v5339
    %v5370 = vpack.c.b16 %v5344, %v5342
    %v5371 = vpack.c.b16 %v5345, %v5343
    %v5372 = vpack.c.b16 %v5348, %v5346
    %v5373 = vpack.c.b16 %v5349, %v5347
    %v5374 = vpack.c.b16 %v5352, %v5350
    %v5375 = vpack.c.b16 %v5353, %v5351
    %v5376 = vpack.c.b16 %v5356, %v5354
    %v5377 = vpack.c.b16 %v5357, %v5355
    %v5399 = vsel %vm88, %v5277, 0
    %5401 = vmatprep.subr.bf16.mxu0 %v5373
    %5402 = vmatpush1.bf16.msra.mxu0 %v5372
    %5403 = vmatprep.subr.bf16.mxu0 %v5371
    %5404 = vmatpush1.bf16.msra.mxu0 %v5370
    %5405 = vmatprep.subr.bf16.mxu0 %v5369
    %5406 = vmatpush1.bf16.msra.mxu0 %v5368
    %5407 = vmatprep.subr.bf16.mxu0 %v5367
    %5408 = vmatpush1.bf16.msra.mxu0 %v5366
    %5409 = vmatprep.subr.bf16.mxu0 %v5365
    %5410 = vmatpush1.bf16.msra.mxu0 %v5364
    %5411 = vmatprep.subr.bf16.mxu0 %v5363
    %5412 = vmatpush1.bf16.msra.mxu0 %v5362
    %5413 = vmatprep.subr.bf16.mxu0 %v5361
    %5414 = vmatpush1.bf16.msra.mxu0 %v5360
    %5415 = vmatprep.subr.bf16.mxu0 %v5359
    %5416 = vmatpush1.bf16.msra.mxu0 %v5358
    %5417 = vmatprep.subr.bf16.mxu0 0
    %5418 = vmatpush2.bf16.msra.mxu0 0
    %5419 = vmatprep.subr.bf16.mxu0 0
    %5420 = vmatpush2.bf16.msra.mxu0 0
    %5421 = vmatprep.subr.bf16.mxu0 0
    %5422 = vmatpush2.bf16.msra.mxu0 0
    %5423 = vmatprep.subr.bf16.mxu0 0
    %5424 = vmatpush2.bf16.msra.mxu0 0
    %5425 = vmatprep.subr.bf16.mxu0 0
    %5426 = vmatpush2.bf16.msra.mxu0 0
    %5427 = vmatprep.subr.bf16.mxu0 0
    %5428 = vmatpush2.bf16.msra.mxu0 0
    %5429 = vmatprep.subr.bf16.mxu0 %v5377
    %5430 = vmatpush2.bf16.msra.mxu0 %v5376
    %5431 = vmatprep.subr.bf16.mxu0 %v5375
    %5432 = vmatpush2.bf16.msra.mxu0 %v5374
    %5433 = vmatprep.mubr.bf16.mxu0 %v5399
    %5434 = vmatmul.mubr.bf16.gmra.mxu0 %v5276
    %v5435 = vpop.f32.mrf.mxu0
    %v5436 = vadd.f32 0.0, %v5435
    %v5437 = vpop.f32.mrf.mxu0
    %v5438 = vpop.f32.mrf.mxu0
    %v5439 = vpop.f32.mrf.mxu0
    %5440 = vdwg.mxu0
    %v5441 = vadd.f32 %v5436, %v87
    %vm5442 = vcmask 33792
    %5443 = vst.msk [vmem:[#allocation3] sm:$0x3] %vm5442, %v5441
    // Predicated region
    $region18: #{raulnet_v13_forward.1} parent=1 // pred_check
      _
    $region19: #{raulnet_v13_forward.1} parent=1 // pred_check_branch
      %5445 = sbr.rel (0) target = $region21
    $region20: #{raulnet_v13_forward.1} parent=1 // pred_region
      %s5447 = ssub.s32 32, 32
      %5448 = vsyncadd [#allocation4], %s5447
      %s5450 = sshll.u32 [#allocation3], 4
      %s5451 = int_to_ptr.vmem [resolvable:$true] %s5450
      %5453 = dma.vmem_to_hbm [thread:$0]  %s5451, 32, %s4, [#allocation4]
    $region21: #{raulnet_v13_forward.1} parent=1 // pred_fallthru
      _
    // Predicated region
    $region22: #{raulnet_v13_forward.1} parent=1 // pred_check
      _
    $region23: #{raulnet_v13_forward.1} parent=1 // pred_check_branch
      %5455 = sbr.rel (0) target = $region25
    $region24: #{raulnet_v13_forward.1} parent=1 // pred_region
      %5456 = dma.done [#allocation4], 32
    $region25: #{raulnet_v13_forward.1} parent=1 // pred_fallthru
      _
    %5457 = vsyncpa [#allocation4], 1

</llo_original>
